<compile_context>
chip_gen: v6e
topology: v6e:2x2x1
jax: 0.10.0
libtpu: 0.0.40
codegen_flags: <defaults>
</compile_context>

<pallas_src>
import functools

import jax
import jax.numpy as jnp
from jax.experimental import pallas as pl
from jax.experimental.pallas import tpu as pltpu

LEAKY_SLOPE = 0.01   # torch.nn.LeakyReLU default negative_slope
BN_EPS = 1e-5        # torch.nn.BatchNorm1d default eps
K = 5                # Conv1d kernel size
STRIDE = 2
PAD = 2
C_PAD = 128          # every channel axis padded to one full lane width


def _conv_len(l):
    """Conv1d output length for k=5, stride=2, padding=2."""
    return (l + 2 * PAD - K) // STRIDE + 1


# ---------------------------------------------------------------- kernel ----
def _dnet_kernel(x_ref, w1_ref, w2_ref, w3_ref, g_ref, b_ref, fcw_ref, fcb_ref,
                 o_ref, h1_ref, h2_ref, *, batch, plane_len):
    """Fused 3x(conv + BN + LeakyReLU) + fc forward.

    x_ref : (8, batch, P+2, 128) bf16  input split by position mod 8, one zero
                                       halo row per side per plane
    h1_ref: (4, batch, P+2, 128) bf16  layer-1 output planes (positions mod 4)
    h2_ref: (2, batch, P+2, 128) bf16  layer-2 output planes (positions mod 2)
    w*_ref: (5*128, 128) bf16          tap-major conv weights
    g_ref / b_ref: (3, 128) f32        BN gamma / beta, one row per layer
    fcw_ref: (P, 128) f32, fcb_ref: (1, 1) f32
    o_ref : (batch, 1) f32
    """
    P = plane_len

    # --- zero only the halo rows of the plane scratch (body rows are always
    #     fully overwritten; padded lanes stay 0 because gamma/beta are
    #     zero-padded) -------------------------------------------------------
    zrow = jnp.zeros((1, C_PAD), jnp.bfloat16)
    for ref, n_planes in ((h1_ref, 4), (h2_ref, 2)):
        for r in range(n_planes):
            for bi in range(batch):
                ref[r, bi, 0:1, :] = zrow          # left conv zero-pad (in[-2]/in[-1])
                ref[r, bi, P + 1:P + 2, :] = zrow  # right conv zero-pad (in[L])

    def conv_bn_act(src_ref, n_in_planes, w_ref, layer):
        """Conv1d(k=5, s=2, p=2) + training-mode BN + LeakyReLU for one layer.

        Input is stored as R = n_in_planes planes; plane r holds positions
        r, r+R, r+2R, ...  Output position o = (R/2)*m + s (s < R/2) reads
        input positions 2o-2 .. 2o+2, i.e. plane ((2s-2+t) mod R) at entry
        m-1 / m / m+1 for tap t — all contiguous row slices.  All output
        planes and all batch rows are stacked into ONE MXU matmul.
        """
        S = n_in_planes // 2
        blocks = []
        for s in range(S):
            for bi in range(batch):
                taps = []
                for t in range(K):
                    j = 2 * s - 2 + t
                    if j < 0:                          # left halo  -> entry m-1
                        plane, start = j + n_in_planes, 0
                    elif j < n_in_planes:              # body       -> entry m
                        plane, start = j, 1
                    else:                              # right halo -> entry m+1
                        plane, start = 0, 2
                    taps.append(src_ref[plane, bi, start:start + P, :])
                blocks.append(jnp.concatenate(taps, axis=-1))       # (P, 5*128)
        patches = blocks[0] if len(blocks) == 1 else jnp.concatenate(blocks, 0)

        # one matmul per layer: (S*batch*P, 5*128) @ (5*128, 128), f32 acc
        y = jnp.dot(patches, w_ref[...], preferred_element_type=jnp.float32)

        # BatchNorm1d (training mode), single pass.  Conv bias omitted: the
        # batch-mean subtraction cancels it exactly.
        cnt = float(y.shape[0])                        # == batch * l_out
        mean = jnp.sum(y, axis=0, keepdims=True) / cnt
        var = jnp.sum(y * y, axis=0, keepdims=True) / cnt - mean * mean
        inv = jax.lax.rsqrt(var + BN_EPS)
        scale = g_ref[layer:layer + 1, :] * inv
        shift = b_ref[layer:layer + 1, :] - mean * scale
        z = y * scale + shift
        return jnp.where(z >= 0.0, z, LEAKY_SLOPE * z)  # (S*batch*P, 128) f32

    def store_planes(dst_ref, z, n_out_planes):
        # z rows are grouped [out-plane][batch][position]; each group is a
        # contiguous sub-block store into the next layer's plane scratch.
        z_bf = z.astype(jnp.bfloat16)
        for s in range(n_out_planes):
            for bi in range(batch):
                r0 = (s * batch + bi) * P
                dst_ref[s, bi, 1:1 + P, :] = z_bf[r0:r0 + P, :]

    z1 = conv_bn_act(x_ref, 8, w1_ref, 0)
    store_planes(h1_ref, z1, 4)
    z2 = conv_bn_act(h1_ref, 4, w2_ref, 1)
    store_planes(h2_ref, z2, 2)
    z3 = conv_bn_act(h2_ref, 2, w3_ref, 2)             # (batch*P, 128), rows [b][pos]

    # fc(out_dim -> 1): one broadcast multiply, one reduction, one store.
    prod = z3.reshape(batch, P, C_PAD) * fcw_ref[...]
    acc = jnp.sum(jnp.sum(prod, axis=1), axis=1, keepdims=True)   # (batch, 1)
    o_ref[...] = acc + fcb_ref[...]


# ------------------------------------------------------------------- glue ---
def _prep_conv_weight(w):
    """torch (C_out, C_in, K) -> tap-major (K*C_PAD, C_PAD) bf16 matmul RHS."""
    c_out, c_in, k = w.shape
    assert c_in <= C_PAD and c_out <= C_PAD
    taps = jnp.transpose(w, (2, 1, 0))                             # (K, C_in, C_out)
    taps = jnp.pad(taps, ((0, 0), (0, C_PAD - c_in), (0, C_PAD - c_out)))
    return taps.reshape(k * C_PAD, C_PAD).astype(jnp.bfloat16)


def _pack_bn(vals):
    rows = [jnp.pad(v.astype(jnp.float32), (0, C_PAD - v.shape[0])) for v in vals]
    return jnp.stack(rows, axis=0)                                 # (3, C_PAD)


def _split_input_planes(x, plane_len):
    """(N, C_in, L) f32 -> (8, N, P+2, 128) bf16: channels-last, lane-padded,
    split by position mod 8, with one zero halo row per side (conv zero pad)."""
    n, c_in, l_in = x.shape
    x_cl = jnp.transpose(x, (0, 2, 1))                             # (N, L, C_in)
    x_cl = jnp.pad(x_cl, ((0, 0), (0, 0), (0, C_PAD - c_in)))      # (N, L, 128)
    planes = x_cl.reshape(n, plane_len, 8, C_PAD)                  # [b, m, r, c]
    planes = jnp.transpose(planes, (2, 0, 1, 3))                   # (8, N, P, 128)
    planes = jnp.pad(planes, ((0, 0), (0, 0), (1, 1), (0, 0)))     # halo rows
    return planes.astype(jnp.bfloat16)


def d_net_forward(x, params):
    """x: (N, C_in, L) float32 (PyTorch NCL) -> (N, 1) float32."""
    n, c_in, l_in = x.shape
    assert l_in % 8 == 0, "kernel assumes in_resolution % 8 == 0"
    p = l_in // 8                       # plane length; equals l3 = L/8
    l3 = _conv_len(_conv_len(_conv_len(l_in)))
    assert l3 == p

    x_planes = _split_input_planes(x, p)

    conv_ws = [_prep_conv_weight(w) for (w, _b, _g, _bt) in params["conv"]]
    gamma = _pack_bn([g for (_w, _b, g, _bt) in params["conv"]])
    beta = _pack_bn([bt for (_w, _b, _g, bt) in params["conv"]])

    # Linear(out_dim, 1): torch flattens (C3, L3) channel-major; reorder the
    # weight to channels-last (L3, C3) and pad lanes to 128.
    w_fc, b_fc = params["fc"]
    c3 = params["conv"][2][0].shape[0]
    fcw = jnp.pad(w_fc.reshape(c3, l3).T.astype(jnp.float32),
                  ((0, 0), (0, C_PAD - c3)))                       # (l3, 128)
    fcb = b_fc.reshape(1, 1).astype(jnp.float32)

    kernel = functools.partial(_dnet_kernel, batch=n, plane_len=p)
    vmem = pl.BlockSpec(memory_space=pltpu.MemorySpace.VMEM)
    return pl.pallas_call(
        kernel,
        out_shape=jax.ShapeDtypeStruct((n, 1), jnp.float32),
        in_specs=[vmem] * 8,
        out_specs=vmem,
        scratch_shapes=[
            pltpu.VMEM((4, n, p + 2, C_PAD), jnp.bfloat16),  # layer-1 out planes
            pltpu.VMEM((2, n, p + 2, C_PAD), jnp.bfloat16),  # layer-2 out planes
        ],
        compiler_params=pltpu.CompilerParams(vmem_limit_bytes=64 * 1024 * 1024),
    )(x_planes, conv_ws[0], conv_ws[1], conv_ws[2], gamma, beta, fcw, fcb)


# ------------------------------------------------------------ parameters ----
def init_params(key, in_resolution, in_channels=3, n_c=16, k=5):
    def conv_layer(key, c_in, c_out):
        kw, kb = jax.random.split(key)
        bound = 1.0 / jnp.sqrt(c_in * k)
        w = jax.random.uniform(kw, (c_out, c_in, k), jnp.float32, -bound, bound)
        # bias is generated for parity with torch.nn.Conv1d but is not used by
        # the kernel: training-mode BatchNorm cancels it exactly.
        b = jax.random.uniform(kb, (c_out,), jnp.float32, -bound, bound)
        gamma = jnp.ones((c_out,), jnp.float32)      # BatchNorm1d defaults
        beta = jnp.zeros((c_out,), jnp.float32)
        return (w, b, gamma, beta)

    k1, k2, k3, k4, k5 = jax.random.split(key, 5)
    conv_params = [
        conv_layer(k1, in_channels, n_c),
        conv_layer(k2, n_c, n_c * 2),
        conv_layer(k3, n_c * 2, n_c * 4),
    ]
    l = in_resolution
    for _ in range(3):
        l = _conv_len(l)
    out_dim = n_c * 4 * l
    bound = 1.0 / jnp.sqrt(out_dim)
    w_fc = jax.random.uniform(k4, (1, out_dim), jnp.float32, -bound, bound)
    b_fc = jax.random.uniform(k5, (1,), jnp.float32, -bound, bound)
    return {"conv": conv_params, "fc": (w_fc, b_fc)}


# -------------------------------------------------------------------- main --
if __name__ == "__main__":
    key = jax.random.PRNGKey(0)
    k_param, k_x = jax.random.split(key)

    IN_RES = 32          # 32 -> 16 -> 8 -> 4
    IN_CH = 3
    N_CH = 16
    BATCH = 2

    params = init_params(k_param, IN_RES, in_channels=IN_CH, n_c=N_CH, k=K)
    x = jax.random.normal(k_x, (BATCH, IN_CH, IN_RES), dtype=jnp.float32)

    fwd = jax.jit(d_net_forward)
    out = fwd(x, params)
    jax.block_until_ready(out)
    assert out.shape == (BATCH, 1), out.shape
    print("KERNEL_OK")
</pallas_src>

<mosaic_0001>
module attributes {stable_mosaic.version = 11 : i64} {
  func.func @_dnet_kernel(%arg0: memref<8x2x6x128xbf16, #tpu.memory_space<vmem>>, %arg1: memref<640x128xbf16, #tpu.memory_space<vmem>>, %arg2: memref<640x128xbf16, #tpu.memory_space<vmem>>, %arg3: memref<640x128xbf16, #tpu.memory_space<vmem>>, %arg4: memref<3x128xf32, #tpu.memory_space<vmem>>, %arg5: memref<3x128xf32, #tpu.memory_space<vmem>>, %arg6: memref<4x128xf32, #tpu.memory_space<vmem>>, %arg7: memref<1x1xf32, #tpu.memory_space<vmem>>, %arg8: memref<2x1xf32, #tpu.memory_space<vmem>>, %arg9: memref<4x2x6x128xbf16, #tpu.memory_space<vmem>>, %arg10: memref<2x2x6x128xbf16, #tpu.memory_space<vmem>>) attributes {dimension_semantics = [], scalar_prefetch = 0 : i64, scratch_operands = 2 : i64, tpu.core_type = #tpu.core_type<tc>} {
    %cst = arith.constant 0.000000e+00 : bf16
    %0 = vector.broadcast %cst : bf16 to vector<1x128xbf16>
    %c0 = arith.constant 0 : index
    %c0_0 = arith.constant 0 : index
    %c0_1 = arith.constant 0 : index
    %c0_2 = arith.constant 0 : index
    %1 = vector.load %arg9[%c0, %c0_0, %c0_1, %c0_2] : memref<4x2x6x128xbf16, #tpu.memory_space<vmem>>, vector<1x1x1x128xbf16>
    %2 = vector.shape_cast %1 : vector<1x1x1x128xbf16> to vector<1x128xbf16>
    %3 = vector.shape_cast %0 : vector<1x128xbf16> to vector<1x1x1x128xbf16>
    tpu.vector_store %arg9[%c0, %c0_0, %c0_1, %c0_2], %3 {strides = array<i32>} : memref<4x2x6x128xbf16, #tpu.memory_space<vmem>>, vector<1x1x1x128xbf16>,
    %c0_3 = arith.constant 0 : index
    %c0_4 = arith.constant 0 : index
    %c5 = arith.constant 5 : index
    %c0_5 = arith.constant 0 : index
    %4 = vector.load %arg9[%c0_3, %c0_4, %c5, %c0_5] : memref<4x2x6x128xbf16, #tpu.memory_space<vmem>>, vector<1x1x1x128xbf16>
    %5 = vector.shape_cast %4 : vector<1x1x1x128xbf16> to vector<1x128xbf16>
    %6 = vector.shape_cast %0 : vector<1x128xbf16> to vector<1x1x1x128xbf16>
    tpu.vector_store %arg9[%c0_3, %c0_4, %c5, %c0_5], %6 {strides = array<i32>} : memref<4x2x6x128xbf16, #tpu.memory_space<vmem>>, vector<1x1x1x128xbf16>,
    %c0_6 = arith.constant 0 : index
    %c1 = arith.constant 1 : index
    %c0_7 = arith.constant 0 : index
    %c0_8 = arith.constant 0 : index
    %7 = vector.load %arg9[%c0_6, %c1, %c0_7, %c0_8] : memref<4x2x6x128xbf16, #tpu.memory_space<vmem>>, vector<1x1x1x128xbf16>
    %8 = vector.shape_cast %7 : vector<1x1x1x128xbf16> to vector<1x128xbf16>
    %9 = vector.shape_cast %0 : vector<1x128xbf16> to vector<1x1x1x128xbf16>
    tpu.vector_store %arg9[%c0_6, %c1, %c0_7, %c0_8], %9 {strides = array<i32>} : memref<4x2x6x128xbf16, #tpu.memory_space<vmem>>, vector<1x1x1x128xbf16>,
    %c0_9 = arith.constant 0 : index
    %c1_10 = arith.constant 1 : index
    %c5_11 = arith.constant 5 : index
    %c0_12 = arith.constant 0 : index
    %10 = vector.load %arg9[%c0_9, %c1_10, %c5_11, %c0_12] : memref<4x2x6x128xbf16, #tpu.memory_space<vmem>>, vector<1x1x1x128xbf16>
    %11 = vector.shape_cast %10 : vector<1x1x1x128xbf16> to vector<1x128xbf16>
    %12 = vector.shape_cast %0 : vector<1x128xbf16> to vector<1x1x1x128xbf16>
    tpu.vector_store %arg9[%c0_9, %c1_10, %c5_11, %c0_12], %12 {strides = array<i32>} : memref<4x2x6x128xbf16, #tpu.memory_space<vmem>>, vector<1x1x1x128xbf16>,
    %c1_13 = arith.constant 1 : index
    %c0_14 = arith.constant 0 : index
    %c0_15 = arith.constant 0 : index
    %c0_16 = arith.constant 0 : index
    %13 = vector.load %arg9[%c1_13, %c0_14, %c0_15, %c0_16] : memref<4x2x6x128xbf16, #tpu.memory_space<vmem>>, vector<1x1x1x128xbf16>
    %14 = vector.shape_cast %13 : vector<1x1x1x128xbf16> to vector<1x128xbf16>
    %15 = vector.shape_cast %0 : vector<1x128xbf16> to vector<1x1x1x128xbf16>
    tpu.vector_store %arg9[%c1_13, %c0_14, %c0_15, %c0_16], %15 {strides = array<i32>} : memref<4x2x6x128xbf16, #tpu.memory_space<vmem>>, vector<1x1x1x128xbf16>,
    %c1_17 = arith.constant 1 : index
    %c0_18 = arith.constant 0 : index
    %c5_19 = arith.constant 5 : index
    %c0_20 = arith.constant 0 : index
    %16 = vector.load %arg9[%c1_17, %c0_18, %c5_19, %c0_20] : memref<4x2x6x128xbf16, #tpu.memory_space<vmem>>, vector<1x1x1x128xbf16>
    %17 = vector.shape_cast %16 : vector<1x1x1x128xbf16> to vector<1x128xbf16>
    %18 = vector.shape_cast %0 : vector<1x128xbf16> to vector<1x1x1x128xbf16>
    tpu.vector_store %arg9[%c1_17, %c0_18, %c5_19, %c0_20], %18 {strides = array<i32>} : memref<4x2x6x128xbf16, #tpu.memory_space<vmem>>, vector<1x1x1x128xbf16>,
    %c1_21 = arith.constant 1 : index
    %c1_22 = arith.constant 1 : index
    %c0_23 = arith.constant 0 : index
    %c0_24 = arith.constant 0 : index
    %19 = vector.load %arg9[%c1_21, %c1_22, %c0_23, %c0_24] : memref<4x2x6x128xbf16, #tpu.memory_space<vmem>>, vector<1x1x1x128xbf16>
    %20 = vector.shape_cast %19 : vector<1x1x1x128xbf16> to vector<1x128xbf16>
    %21 = vector.shape_cast %0 : vector<1x128xbf16> to vector<1x1x1x128xbf16>
    tpu.vector_store %arg9[%c1_21, %c1_22, %c0_23, %c0_24], %21 {strides = array<i32>} : memref<4x2x6x128xbf16, #tpu.memory_space<vmem>>, vector<1x1x1x128xbf16>,
    %c1_25 = arith.constant 1 : index
    %c1_26 = arith.constant 1 : index
    %c5_27 = arith.constant 5 : index
    %c0_28 = arith.constant 0 : index
    %22 = vector.load %arg9[%c1_25, %c1_26, %c5_27, %c0_28] : memref<4x2x6x128xbf16, #tpu.memory_space<vmem>>, vector<1x1x1x128xbf16>
    %23 = vector.shape_cast %22 : vector<1x1x1x128xbf16> to vector<1x128xbf16>
    %24 = vector.shape_cast %0 : vector<1x128xbf16> to vector<1x1x1x128xbf16>
    tpu.vector_store %arg9[%c1_25, %c1_26, %c5_27, %c0_28], %24 {strides = array<i32>} : memref<4x2x6x128xbf16, #tpu.memory_space<vmem>>, vector<1x1x1x128xbf16>,
    %c2 = arith.constant 2 : index
    %c0_29 = arith.constant 0 : index
    %c0_30 = arith.constant 0 : index
    %c0_31 = arith.constant 0 : index
    %25 = vector.load %arg9[%c2, %c0_29, %c0_30, %c0_31] : memref<4x2x6x128xbf16, #tpu.memory_space<vmem>>, vector<1x1x1x128xbf16>
    %26 = vector.shape_cast %25 : vector<1x1x1x128xbf16> to vector<1x128xbf16>
    %27 = vector.shape_cast %0 : vector<1x128xbf16> to vector<1x1x1x128xbf16>
    tpu.vector_store %arg9[%c2, %c0_29, %c0_30, %c0_31], %27 {strides = array<i32>} : memref<4x2x6x128xbf16, #tpu.memory_space<vmem>>, vector<1x1x1x128xbf16>,
    %c2_32 = arith.constant 2 : index
    %c0_33 = arith.constant 0 : index
    %c5_34 = arith.constant 5 : index
    %c0_35 = arith.constant 0 : index
    %28 = vector.load %arg9[%c2_32, %c0_33, %c5_34, %c0_35] : memref<4x2x6x128xbf16, #tpu.memory_space<vmem>>, vector<1x1x1x128xbf16>
    %29 = vector.shape_cast %28 : vector<1x1x1x128xbf16> to vector<1x128xbf16>
    %30 = vector.shape_cast %0 : vector<1x128xbf16> to vector<1x1x1x128xbf16>
    tpu.vector_store %arg9[%c2_32, %c0_33, %c5_34, %c0_35], %30 {strides = array<i32>} : memref<4x2x6x128xbf16, #tpu.memory_space<vmem>>, vector<1x1x1x128xbf16>,
    %c2_36 = arith.constant 2 : index
    %c1_37 = arith.constant 1 : index
    %c0_38 = arith.constant 0 : index
    %c0_39 = arith.constant 0 : index
    %31 = vector.load %arg9[%c2_36, %c1_37, %c0_38, %c0_39] : memref<4x2x6x128xbf16, #tpu.memory_space<vmem>>, vector<1x1x1x128xbf16>
    %32 = vector.shape_cast %31 : vector<1x1x1x128xbf16> to vector<1x128xbf16>
    %33 = vector.shape_cast %0 : vector<1x128xbf16> to vector<1x1x1x128xbf16>
    tpu.vector_store %arg9[%c2_36, %c1_37, %c0_38, %c0_39], %33 {strides = array<i32>} : memref<4x2x6x128xbf16, #tpu.memory_space<vmem>>, vector<1x1x1x128xbf16>,
    %c2_40 = arith.constant 2 : index
    %c1_41 = arith.constant 1 : index
    %c5_42 = arith.constant 5 : index
    %c0_43 = arith.constant 0 : index
    %34 = vector.load %arg9[%c2_40, %c1_41, %c5_42, %c0_43] : memref<4x2x6x128xbf16, #tpu.memory_space<vmem>>, vector<1x1x1x128xbf16>
    %35 = vector.shape_cast %34 : vector<1x1x1x128xbf16> to vector<1x128xbf16>
    %36 = vector.shape_cast %0 : vector<1x128xbf16> to vector<1x1x1x128xbf16>
    tpu.vector_store %arg9[%c2_40, %c1_41, %c5_42, %c0_43], %36 {strides = array<i32>} : memref<4x2x6x128xbf16, #tpu.memory_space<vmem>>, vector<1x1x1x128xbf16>,
    %c3 = arith.constant 3 : index
    %c0_44 = arith.constant 0 : index
    %c0_45 = arith.constant 0 : index
    %c0_46 = arith.constant 0 : index
    %37 = vector.load %arg9[%c3, %c0_44, %c0_45, %c0_46] : memref<4x2x6x128xbf16, #tpu.memory_space<vmem>>, vector<1x1x1x128xbf16>
    %38 = vector.shape_cast %37 : vector<1x1x1x128xbf16> to vector<1x128xbf16>
    %39 = vector.shape_cast %0 : vector<1x128xbf16> to vector<1x1x1x128xbf16>
    tpu.vector_store %arg9[%c3, %c0_44, %c0_45, %c0_46], %39 {strides = array<i32>} : memref<4x2x6x128xbf16, #tpu.memory_space<vmem>>, vector<1x1x1x128xbf16>,
    %c3_47 = arith.constant 3 : index
    %c0_48 = arith.constant 0 : index
    %c5_49 = arith.constant 5 : index
    %c0_50 = arith.constant 0 : index
    %40 = vector.load %arg9[%c3_47, %c0_48, %c5_49, %c0_50] : memref<4x2x6x128xbf16, #tpu.memory_space<vmem>>, vector<1x1x1x128xbf16>
    %41 = vector.shape_cast %40 : vector<1x1x1x128xbf16> to vector<1x128xbf16>
    %42 = vector.shape_cast %0 : vector<1x128xbf16> to vector<1x1x1x128xbf16>
    tpu.vector_store %arg9[%c3_47, %c0_48, %c5_49, %c0_50], %42 {strides = array<i32>} : memref<4x2x6x128xbf16, #tpu.memory_space<vmem>>, vector<1x1x1x128xbf16>,
    %c3_51 = arith.constant 3 : index
    %c1_52 = arith.constant 1 : index
    %c0_53 = arith.constant 0 : index
    %c0_54 = arith.constant 0 : index
    %43 = vector.load %arg9[%c3_51, %c1_52, %c0_53, %c0_54] : memref<4x2x6x128xbf16, #tpu.memory_space<vmem>>, vector<1x1x1x128xbf16>
    %44 = vector.shape_cast %43 : vector<1x1x1x128xbf16> to vector<1x128xbf16>
    %45 = vector.shape_cast %0 : vector<1x128xbf16> to vector<1x1x1x128xbf16>
    tpu.vector_store %arg9[%c3_51, %c1_52, %c0_53, %c0_54], %45 {strides = array<i32>} : memref<4x2x6x128xbf16, #tpu.memory_space<vmem>>, vector<1x1x1x128xbf16>,
    %c3_55 = arith.constant 3 : index
    %c1_56 = arith.constant 1 : index
    %c5_57 = arith.constant 5 : index
    %c0_58 = arith.constant 0 : index
    %46 = vector.load %arg9[%c3_55, %c1_56, %c5_57, %c0_58] : memref<4x2x6x128xbf16, #tpu.memory_space<vmem>>, vector<1x1x1x128xbf16>
    %47 = vector.shape_cast %46 : vector<1x1x1x128xbf16> to vector<1x128xbf16>
    %48 = vector.shape_cast %0 : vector<1x128xbf16> to vector<1x1x1x128xbf16>
    tpu.vector_store %arg9[%c3_55, %c1_56, %c5_57, %c0_58], %48 {strides = array<i32>} : memref<4x2x6x128xbf16, #tpu.memory_space<vmem>>, vector<1x1x1x128xbf16>,
    %c0_59 = arith.constant 0 : index
    %c0_60 = arith.constant 0 : index
    %c0_61 = arith.constant 0 : index
    %c0_62 = arith.constant 0 : index
    %49 = vector.load %arg10[%c0_59, %c0_60, %c0_61, %c0_62] : memref<2x2x6x128xbf16, #tpu.memory_space<vmem>>, vector<1x1x1x128xbf16>
    %50 = vector.shape_cast %49 : vector<1x1x1x128xbf16> to vector<1x128xbf16>
    %51 = vector.shape_cast %0 : vector<1x128xbf16> to vector<1x1x1x128xbf16>
    tpu.vector_store %arg10[%c0_59, %c0_60, %c0_61, %c0_62], %51 {strides = array<i32>} : memref<2x2x6x128xbf16, #tpu.memory_space<vmem>>, vector<1x1x1x128xbf16>,
    %c0_63 = arith.constant 0 : index
    %c0_64 = arith.constant 0 : index
    %c5_65 = arith.constant 5 : index
    %c0_66 = arith.constant 0 : index
    %52 = vector.load %arg10[%c0_63, %c0_64, %c5_65, %c0_66] : memref<2x2x6x128xbf16, #tpu.memory_space<vmem>>, vector<1x1x1x128xbf16>
    %53 = vector.shape_cast %52 : vector<1x1x1x128xbf16> to vector<1x128xbf16>
    %54 = vector.shape_cast %0 : vector<1x128xbf16> to vector<1x1x1x128xbf16>
    tpu.vector_store %arg10[%c0_63, %c0_64, %c5_65, %c0_66], %54 {strides = array<i32>} : memref<2x2x6x128xbf16, #tpu.memory_space<vmem>>, vector<1x1x1x128xbf16>,
    %c0_67 = arith.constant 0 : index
    %c1_68 = arith.constant 1 : index
    %c0_69 = arith.constant 0 : index
    %c0_70 = arith.constant 0 : index
    %55 = vector.load %arg10[%c0_67, %c1_68, %c0_69, %c0_70] : memref<2x2x6x128xbf16, #tpu.memory_space<vmem>>, vector<1x1x1x128xbf16>
    %56 = vector.shape_cast %55 : vector<1x1x1x128xbf16> to vector<1x128xbf16>
    %57 = vector.shape_cast %0 : vector<1x128xbf16> to vector<1x1x1x128xbf16>
    tpu.vector_store %arg10[%c0_67, %c1_68, %c0_69, %c0_70], %57 {strides = array<i32>} : memref<2x2x6x128xbf16, #tpu.memory_space<vmem>>, vector<1x1x1x128xbf16>,
    %c0_71 = arith.constant 0 : index
    %c1_72 = arith.constant 1 : index
    %c5_73 = arith.constant 5 : index
    %c0_74 = arith.constant 0 : index
    %58 = vector.load %arg10[%c0_71, %c1_72, %c5_73, %c0_74] : memref<2x2x6x128xbf16, #tpu.memory_space<vmem>>, vector<1x1x1x128xbf16>
    %59 = vector.shape_cast %58 : vector<1x1x1x128xbf16> to vector<1x128xbf16>
    %60 = vector.shape_cast %0 : vector<1x128xbf16> to vector<1x1x1x128xbf16>
    tpu.vector_store %arg10[%c0_71, %c1_72, %c5_73, %c0_74], %60 {strides = array<i32>} : memref<2x2x6x128xbf16, #tpu.memory_space<vmem>>, vector<1x1x1x128xbf16>,
    %c1_75 = arith.constant 1 : index
    %c0_76 = arith.constant 0 : index
    %c0_77 = arith.constant 0 : index
    %c0_78 = arith.constant 0 : index
    %61 = vector.load %arg10[%c1_75, %c0_76, %c0_77, %c0_78] : memref<2x2x6x128xbf16, #tpu.memory_space<vmem>>, vector<1x1x1x128xbf16>
    %62 = vector.shape_cast %61 : vector<1x1x1x128xbf16> to vector<1x128xbf16>
    %63 = vector.shape_cast %0 : vector<1x128xbf16> to vector<1x1x1x128xbf16>
    tpu.vector_store %arg10[%c1_75, %c0_76, %c0_77, %c0_78], %63 {strides = array<i32>} : memref<2x2x6x128xbf16, #tpu.memory_space<vmem>>, vector<1x1x1x128xbf16>,
    %c1_79 = arith.constant 1 : index
    %c0_80 = arith.constant 0 : index
    %c5_81 = arith.constant 5 : index
    %c0_82 = arith.constant 0 : index
    %64 = vector.load %arg10[%c1_79, %c0_80, %c5_81, %c0_82] : memref<2x2x6x128xbf16, #tpu.memory_space<vmem>>, vector<1x1x1x128xbf16>
    %65 = vector.shape_cast %64 : vector<1x1x1x128xbf16> to vector<1x128xbf16>
    %66 = vector.shape_cast %0 : vector<1x128xbf16> to vector<1x1x1x128xbf16>
    tpu.vector_store %arg10[%c1_79, %c0_80, %c5_81, %c0_82], %66 {strides = array<i32>} : memref<2x2x6x128xbf16, #tpu.memory_space<vmem>>, vector<1x1x1x128xbf16>,
    %c1_83 = arith.constant 1 : index
    %c1_84 = arith.constant 1 : index
    %c0_85 = arith.constant 0 : index
    %c0_86 = arith.constant 0 : index
    %67 = vector.load %arg10[%c1_83, %c1_84, %c0_85, %c0_86] : memref<2x2x6x128xbf16, #tpu.memory_space<vmem>>, vector<1x1x1x128xbf16>
    %68 = vector.shape_cast %67 : vector<1x1x1x128xbf16> to vector<1x128xbf16>
    %69 = vector.shape_cast %0 : vector<1x128xbf16> to vector<1x1x1x128xbf16>
    tpu.vector_store %arg10[%c1_83, %c1_84, %c0_85, %c0_86], %69 {strides = array<i32>} : memref<2x2x6x128xbf16, #tpu.memory_space<vmem>>, vector<1x1x1x128xbf16>,
    %c1_87 = arith.constant 1 : index
    %c1_88 = arith.constant 1 : index
    %c5_89 = arith.constant 5 : index
    %c0_90 = arith.constant 0 : index
    %70 = vector.load %arg10[%c1_87, %c1_88, %c5_89, %c0_90] : memref<2x2x6x128xbf16, #tpu.memory_space<vmem>>, vector<1x1x1x128xbf16>
    %71 = vector.shape_cast %70 : vector<1x1x1x128xbf16> to vector<1x128xbf16>
    %72 = vector.shape_cast %0 : vector<1x128xbf16> to vector<1x1x1x128xbf16>
    tpu.vector_store %arg10[%c1_87, %c1_88, %c5_89, %c0_90], %72 {strides = array<i32>} : memref<2x2x6x128xbf16, #tpu.memory_space<vmem>>, vector<1x1x1x128xbf16>,
    %c6 = arith.constant 6 : index
    %c0_91 = arith.constant 0 : index
    %c0_92 = arith.constant 0 : index
    %c0_93 = arith.constant 0 : index
    %73 = vector.load %arg0[%c6, %c0_91, %c0_92, %c0_93] : memref<8x2x6x128xbf16, #tpu.memory_space<vmem>>, vector<1x1x4x128xbf16>
    %74 = vector.shape_cast %73 : vector<1x1x4x128xbf16> to vector<4x128xbf16>
    %c7 = arith.constant 7 : index
    %c0_94 = arith.constant 0 : index
    %c0_95 = arith.constant 0 : index
    %c0_96 = arith.constant 0 : index
    %75 = vector.load %arg0[%c7, %c0_94, %c0_95, %c0_96] : memref<8x2x6x128xbf16, #tpu.memory_space<vmem>>, vector<1x1x4x128xbf16>
    %76 = vector.shape_cast %75 : vector<1x1x4x128xbf16> to vector<4x128xbf16>
    %c0_97 = arith.constant 0 : index
    %c0_98 = arith.constant 0 : index
    %c1_99 = arith.constant 1 : index
    %c0_100 = arith.constant 0 : index
    %77 = vector.load %arg0[%c0_97, %c0_98, %c1_99, %c0_100] : memref<8x2x6x128xbf16, #tpu.memory_space<vmem>>, vector<1x1x4x128xbf16>
    %78 = vector.shape_cast %77 : vector<1x1x4x128xbf16> to vector<4x128xbf16>
    %c1_101 = arith.constant 1 : index
    %c0_102 = arith.constant 0 : index
    %c1_103 = arith.constant 1 : index
    %c0_104 = arith.constant 0 : index
    %79 = vector.load %arg0[%c1_101, %c0_102, %c1_103, %c0_104] : memref<8x2x6x128xbf16, #tpu.memory_space<vmem>>, vector<1x1x4x128xbf16>
    %80 = vector.shape_cast %79 : vector<1x1x4x128xbf16> to vector<4x128xbf16>
    %c2_105 = arith.constant 2 : index
    %c0_106 = arith.constant 0 : index
    %c1_107 = arith.constant 1 : index
    %c0_108 = arith.constant 0 : index
    %81 = vector.load %arg0[%c2_105, %c0_106, %c1_107, %c0_108] : memref<8x2x6x128xbf16, #tpu.memory_space<vmem>>, vector<1x1x4x128xbf16>
    %82 = vector.shape_cast %81 : vector<1x1x4x128xbf16> to vector<4x128xbf16>
    %83 = tpu.concatenate %74, %76, %78, %80, %82 in 1 : vector<4x128xbf16>, vector<4x128xbf16>, vector<4x128xbf16>, vector<4x128xbf16>, vector<4x128xbf16> -> vector<4x640xbf16>
    %c6_109 = arith.constant 6 : index
    %c1_110 = arith.constant 1 : index
    %c0_111 = arith.constant 0 : index
    %c0_112 = arith.constant 0 : index
    %84 = vector.load %arg0[%c6_109, %c1_110, %c0_111, %c0_112] : memref<8x2x6x128xbf16, #tpu.memory_space<vmem>>, vector<1x1x4x128xbf16>
    %85 = vector.shape_cast %84 : vector<1x1x4x128xbf16> to vector<4x128xbf16>
    %c7_113 = arith.constant 7 : index
    %c1_114 = arith.constant 1 : index
    %c0_115 = arith.constant 0 : index
    %c0_116 = arith.constant 0 : index
    %86 = vector.load %arg0[%c7_113, %c1_114, %c0_115, %c0_116] : memref<8x2x6x128xbf16, #tpu.memory_space<vmem>>, vector<1x1x4x128xbf16>
    %87 = vector.shape_cast %86 : vector<1x1x4x128xbf16> to vector<4x128xbf16>
    %c0_117 = arith.constant 0 : index
    %c1_118 = arith.constant 1 : index
    %c1_119 = arith.constant 1 : index
    %c0_120 = arith.constant 0 : index
    %88 = vector.load %arg0[%c0_117, %c1_118, %c1_119, %c0_120] : memref<8x2x6x128xbf16, #tpu.memory_space<vmem>>, vector<1x1x4x128xbf16>
    %89 = vector.shape_cast %88 : vector<1x1x4x128xbf16> to vector<4x128xbf16>
    %c1_121 = arith.constant 1 : index
    %c1_122 = arith.constant 1 : index
    %c1_123 = arith.constant 1 : index
    %c0_124 = arith.constant 0 : index
    %90 = vector.load %arg0[%c1_121, %c1_122, %c1_123, %c0_124] : memref<8x2x6x128xbf16, #tpu.memory_space<vmem>>, vector<1x1x4x128xbf16>
    %91 = vector.shape_cast %90 : vector<1x1x4x128xbf16> to vector<4x128xbf16>
    %c2_125 = arith.constant 2 : index
    %c1_126 = arith.constant 1 : index
    %c1_127 = arith.constant 1 : index
    %c0_128 = arith.constant 0 : index
    %92 = vector.load %arg0[%c2_125, %c1_126, %c1_127, %c0_128] : memref<8x2x6x128xbf16, #tpu.memory_space<vmem>>, vector<1x1x4x128xbf16>
    %93 = vector.shape_cast %92 : vector<1x1x4x128xbf16> to vector<4x128xbf16>
    %94 = tpu.concatenate %85, %87, %89, %91, %93 in 1 : vector<4x128xbf16>, vector<4x128xbf16>, vector<4x128xbf16>, vector<4x128xbf16>, vector<4x128xbf16> -> vector<4x640xbf16>
    %c0_129 = arith.constant 0 : index
    %c0_130 = arith.constant 0 : index
    %c1_131 = arith.constant 1 : index
    %c0_132 = arith.constant 0 : index
    %95 = vector.load %arg0[%c0_129, %c0_130, %c1_131, %c0_132] : memref<8x2x6x128xbf16, #tpu.memory_space<vmem>>, vector<1x1x4x128xbf16>
    %96 = vector.shape_cast %95 : vector<1x1x4x128xbf16> to vector<4x128xbf16>
    %c1_133 = arith.constant 1 : index
    %c0_134 = arith.constant 0 : index
    %c1_135 = arith.constant 1 : index
    %c0_136 = arith.constant 0 : index
    %97 = vector.load %arg0[%c1_133, %c0_134, %c1_135, %c0_136] : memref<8x2x6x128xbf16, #tpu.memory_space<vmem>>, vector<1x1x4x128xbf16>
    %98 = vector.shape_cast %97 : vector<1x1x4x128xbf16> to vector<4x128xbf16>
    %c2_137 = arith.constant 2 : index
    %c0_138 = arith.constant 0 : index
    %c1_139 = arith.constant 1 : index
    %c0_140 = arith.constant 0 : index
    %99 = vector.load %arg0[%c2_137, %c0_138, %c1_139, %c0_140] : memref<8x2x6x128xbf16, #tpu.memory_space<vmem>>, vector<1x1x4x128xbf16>
    %100 = vector.shape_cast %99 : vector<1x1x4x128xbf16> to vector<4x128xbf16>
    %c3_141 = arith.constant 3 : index
    %c0_142 = arith.constant 0 : index
    %c1_143 = arith.constant 1 : index
    %c0_144 = arith.constant 0 : index
    %101 = vector.load %arg0[%c3_141, %c0_142, %c1_143, %c0_144] : memref<8x2x6x128xbf16, #tpu.memory_space<vmem>>, vector<1x1x4x128xbf16>
    %102 = vector.shape_cast %101 : vector<1x1x4x128xbf16> to vector<4x128xbf16>
    %c4 = arith.constant 4 : index
    %c0_145 = arith.constant 0 : index
    %c1_146 = arith.constant 1 : index
    %c0_147 = arith.constant 0 : index
    %103 = vector.load %arg0[%c4, %c0_145, %c1_146, %c0_147] : memref<8x2x6x128xbf16, #tpu.memory_space<vmem>>, vector<1x1x4x128xbf16>
    %104 = vector.shape_cast %103 : vector<1x1x4x128xbf16> to vector<4x128xbf16>
    %105 = tpu.concatenate %96, %98, %100, %102, %104 in 1 : vector<4x128xbf16>, vector<4x128xbf16>, vector<4x128xbf16>, vector<4x128xbf16>, vector<4x128xbf16> -> vector<4x640xbf16>
    %c0_148 = arith.constant 0 : index
    %c1_149 = arith.constant 1 : index
    %c1_150 = arith.constant 1 : index
    %c0_151 = arith.constant 0 : index
    %106 = vector.load %arg0[%c0_148, %c1_149, %c1_150, %c0_151] : memref<8x2x6x128xbf16, #tpu.memory_space<vmem>>, vector<1x1x4x128xbf16>
    %107 = vector.shape_cast %106 : vector<1x1x4x128xbf16> to vector<4x128xbf16>
    %c1_152 = arith.constant 1 : index
    %c1_153 = arith.constant 1 : index
    %c1_154 = arith.constant 1 : index
    %c0_155 = arith.constant 0 : index
    %108 = vector.load %arg0[%c1_152, %c1_153, %c1_154, %c0_155] : memref<8x2x6x128xbf16, #tpu.memory_space<vmem>>, vector<1x1x4x128xbf16>
    %109 = vector.shape_cast %108 : vector<1x1x4x128xbf16> to vector<4x128xbf16>
    %c2_156 = arith.constant 2 : index
    %c1_157 = arith.constant 1 : index
    %c1_158 = arith.constant 1 : index
    %c0_159 = arith.constant 0 : index
    %110 = vector.load %arg0[%c2_156, %c1_157, %c1_158, %c0_159] : memref<8x2x6x128xbf16, #tpu.memory_space<vmem>>, vector<1x1x4x128xbf16>
    %111 = vector.shape_cast %110 : vector<1x1x4x128xbf16> to vector<4x128xbf16>
    %c3_160 = arith.constant 3 : index
    %c1_161 = arith.constant 1 : index
    %c1_162 = arith.constant 1 : index
    %c0_163 = arith.constant 0 : index
    %112 = vector.load %arg0[%c3_160, %c1_161, %c1_162, %c0_163] : memref<8x2x6x128xbf16, #tpu.memory_space<vmem>>, vector<1x1x4x128xbf16>
    %113 = vector.shape_cast %112 : vector<1x1x4x128xbf16> to vector<4x128xbf16>
    %c4_164 = arith.constant 4 : index
    %c1_165 = arith.constant 1 : index
    %c1_166 = arith.constant 1 : index
    %c0_167 = arith.constant 0 : index
    %114 = vector.load %arg0[%c4_164, %c1_165, %c1_166, %c0_167] : memref<8x2x6x128xbf16, #tpu.memory_space<vmem>>, vector<1x1x4x128xbf16>
    %115 = vector.shape_cast %114 : vector<1x1x4x128xbf16> to vector<4x128xbf16>
    %116 = tpu.concatenate %107, %109, %111, %113, %115 in 1 : vector<4x128xbf16>, vector<4x128xbf16>, vector<4x128xbf16>, vector<4x128xbf16>, vector<4x128xbf16> -> vector<4x640xbf16>
    %c2_168 = arith.constant 2 : index
    %c0_169 = arith.constant 0 : index
    %c1_170 = arith.constant 1 : index
    %c0_171 = arith.constant 0 : index
    %117 = vector.load %arg0[%c2_168, %c0_169, %c1_170, %c0_171] : memref<8x2x6x128xbf16, #tpu.memory_space<vmem>>, vector<1x1x4x128xbf16>
    %118 = vector.shape_cast %117 : vector<1x1x4x128xbf16> to vector<4x128xbf16>
    %c3_172 = arith.constant 3 : index
    %c0_173 = arith.constant 0 : index
    %c1_174 = arith.constant 1 : index
    %c0_175 = arith.constant 0 : index
    %119 = vector.load %arg0[%c3_172, %c0_173, %c1_174, %c0_175] : memref<8x2x6x128xbf16, #tpu.memory_space<vmem>>, vector<1x1x4x128xbf16>
    %120 = vector.shape_cast %119 : vector<1x1x4x128xbf16> to vector<4x128xbf16>
    %c4_176 = arith.constant 4 : index
    %c0_177 = arith.constant 0 : index
    %c1_178 = arith.constant 1 : index
    %c0_179 = arith.constant 0 : index
    %121 = vector.load %arg0[%c4_176, %c0_177, %c1_178, %c0_179] : memref<8x2x6x128xbf16, #tpu.memory_space<vmem>>, vector<1x1x4x128xbf16>
    %122 = vector.shape_cast %121 : vector<1x1x4x128xbf16> to vector<4x128xbf16>
    %c5_180 = arith.constant 5 : index
    %c0_181 = arith.constant 0 : index
    %c1_182 = arith.constant 1 : index
    %c0_183 = arith.constant 0 : index
    %123 = vector.load %arg0[%c5_180, %c0_181, %c1_182, %c0_183] : memref<8x2x6x128xbf16, #tpu.memory_space<vmem>>, vector<1x1x4x128xbf16>
    %124 = vector.shape_cast %123 : vector<1x1x4x128xbf16> to vector<4x128xbf16>
    %c6_184 = arith.constant 6 : index
    %c0_185 = arith.constant 0 : index
    %c1_186 = arith.constant 1 : index
    %c0_187 = arith.constant 0 : index
    %125 = vector.load %arg0[%c6_184, %c0_185, %c1_186, %c0_187] : memref<8x2x6x128xbf16, #tpu.memory_space<vmem>>, vector<1x1x4x128xbf16>
    %126 = vector.shape_cast %125 : vector<1x1x4x128xbf16> to vector<4x128xbf16>
    %127 = tpu.concatenate %118, %120, %122, %124, %126 in 1 : vector<4x128xbf16>, vector<4x128xbf16>, vector<4x128xbf16>, vector<4x128xbf16>, vector<4x128xbf16> -> vector<4x640xbf16>
    %c2_188 = arith.constant 2 : index
    %c1_189 = arith.constant 1 : index
    %c1_190 = arith.constant 1 : index
    %c0_191 = arith.constant 0 : index
    %128 = vector.load %arg0[%c2_188, %c1_189, %c1_190, %c0_191] : memref<8x2x6x128xbf16, #tpu.memory_space<vmem>>, vector<1x1x4x128xbf16>
    %129 = vector.shape_cast %128 : vector<1x1x4x128xbf16> to vector<4x128xbf16>
    %c3_192 = arith.constant 3 : index
    %c1_193 = arith.constant 1 : index
    %c1_194 = arith.constant 1 : index
    %c0_195 = arith.constant 0 : index
    %130 = vector.load %arg0[%c3_192, %c1_193, %c1_194, %c0_195] : memref<8x2x6x128xbf16, #tpu.memory_space<vmem>>, vector<1x1x4x128xbf16>
    %131 = vector.shape_cast %130 : vector<1x1x4x128xbf16> to vector<4x128xbf16>
    %c4_196 = arith.constant 4 : index
    %c1_197 = arith.constant 1 : index
    %c1_198 = arith.constant 1 : index
    %c0_199 = arith.constant 0 : index
    %132 = vector.load %arg0[%c4_196, %c1_197, %c1_198, %c0_199] : memref<8x2x6x128xbf16, #tpu.memory_space<vmem>>, vector<1x1x4x128xbf16>
    %133 = vector.shape_cast %132 : vector<1x1x4x128xbf16> to vector<4x128xbf16>
    %c5_200 = arith.constant 5 : index
    %c1_201 = arith.constant 1 : index
    %c1_202 = arith.constant 1 : index
    %c0_203 = arith.constant 0 : index
    %134 = vector.load %arg0[%c5_200, %c1_201, %c1_202, %c0_203] : memref<8x2x6x128xbf16, #tpu.memory_space<vmem>>, vector<1x1x4x128xbf16>
    %135 = vector.shape_cast %134 : vector<1x1x4x128xbf16> to vector<4x128xbf16>
    %c6_204 = arith.constant 6 : index
    %c1_205 = arith.constant 1 : index
    %c1_206 = arith.constant 1 : index
    %c0_207 = arith.constant 0 : index
    %136 = vector.load %arg0[%c6_204, %c1_205, %c1_206, %c0_207] : memref<8x2x6x128xbf16, #tpu.memory_space<vmem>>, vector<1x1x4x128xbf16>
    %137 = vector.shape_cast %136 : vector<1x1x4x128xbf16> to vector<4x128xbf16>
    %138 = tpu.concatenate %129, %131, %133, %135, %137 in 1 : vector<4x128xbf16>, vector<4x128xbf16>, vector<4x128xbf16>, vector<4x128xbf16>, vector<4x128xbf16> -> vector<4x640xbf16>
    %c4_208 = arith.constant 4 : index
    %c0_209 = arith.constant 0 : index
    %c1_210 = arith.constant 1 : index
    %c0_211 = arith.constant 0 : index
    %139 = vector.load %arg0[%c4_208, %c0_209, %c1_210, %c0_211] : memref<8x2x6x128xbf16, #tpu.memory_space<vmem>>, vector<1x1x4x128xbf16>
    %140 = vector.shape_cast %139 : vector<1x1x4x128xbf16> to vector<4x128xbf16>
    %c5_212 = arith.constant 5 : index
    %c0_213 = arith.constant 0 : index
    %c1_214 = arith.constant 1 : index
    %c0_215 = arith.constant 0 : index
    %141 = vector.load %arg0[%c5_212, %c0_213, %c1_214, %c0_215] : memref<8x2x6x128xbf16, #tpu.memory_space<vmem>>, vector<1x1x4x128xbf16>
    %142 = vector.shape_cast %141 : vector<1x1x4x128xbf16> to vector<4x128xbf16>
    %c6_216 = arith.constant 6 : index
    %c0_217 = arith.constant 0 : index
    %c1_218 = arith.constant 1 : index
    %c0_219 = arith.constant 0 : index
    %143 = vector.load %arg0[%c6_216, %c0_217, %c1_218, %c0_219] : memref<8x2x6x128xbf16, #tpu.memory_space<vmem>>, vector<1x1x4x128xbf16>
    %144 = vector.shape_cast %143 : vector<1x1x4x128xbf16> to vector<4x128xbf16>
    %c7_220 = arith.constant 7 : index
    %c0_221 = arith.constant 0 : index
    %c1_222 = arith.constant 1 : index
    %c0_223 = arith.constant 0 : index
    %145 = vector.load %arg0[%c7_220, %c0_221, %c1_222, %c0_223] : memref<8x2x6x128xbf16, #tpu.memory_space<vmem>>, vector<1x1x4x128xbf16>
    %146 = vector.shape_cast %145 : vector<1x1x4x128xbf16> to vector<4x128xbf16>
    %c0_224 = arith.constant 0 : index
    %c0_225 = arith.constant 0 : index
    %c2_226 = arith.constant 2 : index
    %c0_227 = arith.constant 0 : index
    %147 = vector.load %arg0[%c0_224, %c0_225, %c2_226, %c0_227] : memref<8x2x6x128xbf16, #tpu.memory_space<vmem>>, vector<1x1x4x128xbf16>
    %148 = vector.shape_cast %147 : vector<1x1x4x128xbf16> to vector<4x128xbf16>
    %149 = tpu.concatenate %140, %142, %144, %146, %148 in 1 : vector<4x128xbf16>, vector<4x128xbf16>, vector<4x128xbf16>, vector<4x128xbf16>, vector<4x128xbf16> -> vector<4x640xbf16>
    %c4_228 = arith.constant 4 : index
    %c1_229 = arith.constant 1 : index
    %c1_230 = arith.constant 1 : index
    %c0_231 = arith.constant 0 : index
    %150 = vector.load %arg0[%c4_228, %c1_229, %c1_230, %c0_231] : memref<8x2x6x128xbf16, #tpu.memory_space<vmem>>, vector<1x1x4x128xbf16>
    %151 = vector.shape_cast %150 : vector<1x1x4x128xbf16> to vector<4x128xbf16>
    %c5_232 = arith.constant 5 : index
    %c1_233 = arith.constant 1 : index
    %c1_234 = arith.constant 1 : index
    %c0_235 = arith.constant 0 : index
    %152 = vector.load %arg0[%c5_232, %c1_233, %c1_234, %c0_235] : memref<8x2x6x128xbf16, #tpu.memory_space<vmem>>, vector<1x1x4x128xbf16>
    %153 = vector.shape_cast %152 : vector<1x1x4x128xbf16> to vector<4x128xbf16>
    %c6_236 = arith.constant 6 : index
    %c1_237 = arith.constant 1 : index
    %c1_238 = arith.constant 1 : index
    %c0_239 = arith.constant 0 : index
    %154 = vector.load %arg0[%c6_236, %c1_237, %c1_238, %c0_239] : memref<8x2x6x128xbf16, #tpu.memory_space<vmem>>, vector<1x1x4x128xbf16>
    %155 = vector.shape_cast %154 : vector<1x1x4x128xbf16> to vector<4x128xbf16>
    %c7_240 = arith.constant 7 : index
    %c1_241 = arith.constant 1 : index
    %c1_242 = arith.constant 1 : index
    %c0_243 = arith.constant 0 : index
    %156 = vector.load %arg0[%c7_240, %c1_241, %c1_242, %c0_243] : memref<8x2x6x128xbf16, #tpu.memory_space<vmem>>, vector<1x1x4x128xbf16>
    %157 = vector.shape_cast %156 : vector<1x1x4x128xbf16> to vector<4x128xbf16>
    %c0_244 = arith.constant 0 : index
    %c1_245 = arith.constant 1 : index
    %c2_246 = arith.constant 2 : index
    %c0_247 = arith.constant 0 : index
    %158 = vector.load %arg0[%c0_244, %c1_245, %c2_246, %c0_247] : memref<8x2x6x128xbf16, #tpu.memory_space<vmem>>, vector<1x1x4x128xbf16>
    %159 = vector.shape_cast %158 : vector<1x1x4x128xbf16> to vector<4x128xbf16>
    %160 = tpu.concatenate %151, %153, %155, %157, %159 in 1 : vector<4x128xbf16>, vector<4x128xbf16>, vector<4x128xbf16>, vector<4x128xbf16>, vector<4x128xbf16> -> vector<4x640xbf16>
    %161 = tpu.concatenate %83, %94, %105, %116, %127, %138, %149, %160 in 0 : vector<4x640xbf16>, vector<4x640xbf16>, vector<4x640xbf16>, vector<4x640xbf16>, vector<4x640xbf16>, vector<4x640xbf16>, vector<4x640xbf16>, vector<4x640xbf16> -> vector<32x640xbf16>
    %c0_248 = arith.constant 0 : index
    %c0_249 = arith.constant 0 : index
    %162 = vector.load %arg1[%c0_248, %c0_249] : memref<640x128xbf16, #tpu.memory_space<vmem>>, vector<640x128xbf16>
    %cst_250 = arith.constant dense<0.000000e+00> : vector<32x128xf32>
    %163 = tpu.matmul %161, %162, %cst_250 {dimension_numbers = #tpu.dot_dimension_numbers<[1], [0], [0], [1], [0, 0, 1, 1], [], []>} : vector<32x640xbf16>, vector<640x128xbf16>, vector<32x128xf32> -> vector<32x128xf32>
    %cst_251 = arith.constant dense<0.000000e+00> : vector<128xf32>
    %164 = vector.multi_reduction <add>, %163, %cst_251 [0] : vector<32x128xf32> to vector<128xf32>
    %165 = vector.shape_cast %164 : vector<128xf32> to vector<1x128xf32>
    %cst_252 = arith.constant 3.200000e+01 : f32
    %166 = vector.broadcast %cst_252 : f32 to vector<1x128xf32>
    %167 = arith.divf %165, %166 : vector<1x128xf32>
    %168 = arith.mulf %163, %163 : vector<32x128xf32>
    %cst_253 = arith.constant dense<0.000000e+00> : vector<128xf32>
    %169 = vector.multi_reduction <add>, %168, %cst_253 [0] : vector<32x128xf32> to vector<128xf32>
    %170 = vector.shape_cast %169 : vector<128xf32> to vector<1x128xf32>
    %cst_254 = arith.constant 3.200000e+01 : f32
    %171 = vector.broadcast %cst_254 : f32 to vector<1x128xf32>
    %172 = arith.divf %170, %171 : vector<1x128xf32>
    %173 = arith.mulf %167, %167 : vector<1x128xf32>
    %174 = arith.subf %172, %173 : vector<1x128xf32>
    %cst_255 = arith.constant 9.99999974E-6 : f32
    %175 = vector.broadcast %cst_255 : f32 to vector<1x128xf32>
    %176 = arith.addf %174, %175 : vector<1x128xf32>
    %177 = math.rsqrt %176 : vector<1x128xf32>
    %c0_256 = arith.constant 0 : index
    %c0_257 = arith.constant 0 : index
    %178 = vector.load %arg4[%c0_256, %c0_257] : memref<3x128xf32, #tpu.memory_space<vmem>>, vector<1x128xf32>
    %179 = arith.mulf %178, %177 : vector<1x128xf32>
    %c0_258 = arith.constant 0 : index
    %c0_259 = arith.constant 0 : index
    %180 = vector.load %arg5[%c0_258, %c0_259] : memref<3x128xf32, #tpu.memory_space<vmem>>, vector<1x128xf32>
    %181 = arith.mulf %167, %179 : vector<1x128xf32>
    %182 = arith.subf %180, %181 : vector<1x128xf32>
    %183 = vector.broadcast %179 : vector<1x128xf32> to vector<32x128xf32>
    %184 = arith.mulf %163, %183 : vector<32x128xf32>
    %185 = vector.broadcast %182 : vector<1x128xf32> to vector<32x128xf32>
    %186 = arith.addf %184, %185 : vector<32x128xf32>
    %cst_260 = arith.constant 0.000000e+00 : f32
    %187 = vector.broadcast %cst_260 : f32 to vector<32x128xf32>
    %188 = arith.cmpf oge, %186, %187 : vector<32x128xf32>
    %cst_261 = arith.constant 0.00999999977 : f32
    %189 = vector.broadcast %cst_261 : f32 to vector<32x128xf32>
    %190 = arith.mulf %189, %186 : vector<32x128xf32>
    %191 = arith.select %188, %186, %190 : vector<32x128xi1>, vector<32x128xf32>
    %192 = arith.truncf %191 : vector<32x128xf32> to vector<32x128xbf16>
    %193 = vector.extract_strided_slice %192 {offsets = [0, 0], sizes = [4, 128], strides = [1, 1]} : vector<32x128xbf16> to vector<4x128xbf16>
    %c0_262 = arith.constant 0 : index
    %c0_263 = arith.constant 0 : index
    %c1_264 = arith.constant 1 : index
    %c0_265 = arith.constant 0 : index
    %194 = vector.load %arg9[%c0_262, %c0_263, %c1_264, %c0_265] : memref<4x2x6x128xbf16, #tpu.memory_space<vmem>>, vector<1x1x4x128xbf16>
    %195 = vector.shape_cast %194 : vector<1x1x4x128xbf16> to vector<4x128xbf16>
    %196 = vector.shape_cast %193 : vector<4x128xbf16> to vector<1x1x4x128xbf16>
    tpu.vector_store %arg9[%c0_262, %c0_263, %c1_264, %c0_265], %196 {strides = array<i32>} : memref<4x2x6x128xbf16, #tpu.memory_space<vmem>>, vector<1x1x4x128xbf16>,
    %197 = vector.extract_strided_slice %192 {offsets = [4, 0], sizes = [4, 128], strides = [1, 1]} : vector<32x128xbf16> to vector<4x128xbf16>
    %c0_266 = arith.constant 0 : index
    %c1_267 = arith.constant 1 : index
    %c1_268 = arith.constant 1 : index
    %c0_269 = arith.constant 0 : index
    %198 = vector.load %arg9[%c0_266, %c1_267, %c1_268, %c0_269] : memref<4x2x6x128xbf16, #tpu.memory_space<vmem>>, vector<1x1x4x128xbf16>
    %199 = vector.shape_cast %198 : vector<1x1x4x128xbf16> to vector<4x128xbf16>
    %200 = vector.shape_cast %197 : vector<4x128xbf16> to vector<1x1x4x128xbf16>
    tpu.vector_store %arg9[%c0_266, %c1_267, %c1_268, %c0_269], %200 {strides = array<i32>} : memref<4x2x6x128xbf16, #tpu.memory_space<vmem>>, vector<1x1x4x128xbf16>,
    %201 = vector.extract_strided_slice %192 {offsets = [8, 0], sizes = [4, 128], strides = [1, 1]} : vector<32x128xbf16> to vector<4x128xbf16>
    %c1_270 = arith.constant 1 : index
    %c0_271 = arith.constant 0 : index
    %c1_272 = arith.constant 1 : index
    %c0_273 = arith.constant 0 : index
    %202 = vector.load %arg9[%c1_270, %c0_271, %c1_272, %c0_273] : memref<4x2x6x128xbf16, #tpu.memory_space<vmem>>, vector<1x1x4x128xbf16>
    %203 = vector.shape_cast %202 : vector<1x1x4x128xbf16> to vector<4x128xbf16>
    %204 = vector.shape_cast %201 : vector<4x128xbf16> to vector<1x1x4x128xbf16>
    tpu.vector_store %arg9[%c1_270, %c0_271, %c1_272, %c0_273], %204 {strides = array<i32>} : memref<4x2x6x128xbf16, #tpu.memory_space<vmem>>, vector<1x1x4x128xbf16>,
    %205 = vector.extract_strided_slice %192 {offsets = [12, 0], sizes = [4, 128], strides = [1, 1]} : vector<32x128xbf16> to vector<4x128xbf16>
    %c1_274 = arith.constant 1 : index
    %c1_275 = arith.constant 1 : index
    %c1_276 = arith.constant 1 : index
    %c0_277 = arith.constant 0 : index
    %206 = vector.load %arg9[%c1_274, %c1_275, %c1_276, %c0_277] : memref<4x2x6x128xbf16, #tpu.memory_space<vmem>>, vector<1x1x4x128xbf16>
    %207 = vector.shape_cast %206 : vector<1x1x4x128xbf16> to vector<4x128xbf16>
    %208 = vector.shape_cast %205 : vector<4x128xbf16> to vector<1x1x4x128xbf16>
    tpu.vector_store %arg9[%c1_274, %c1_275, %c1_276, %c0_277], %208 {strides = array<i32>} : memref<4x2x6x128xbf16, #tpu.memory_space<vmem>>, vector<1x1x4x128xbf16>,
    %209 = vector.extract_strided_slice %192 {offsets = [16, 0], sizes = [4, 128], strides = [1, 1]} : vector<32x128xbf16> to vector<4x128xbf16>
    %c2_278 = arith.constant 2 : index
    %c0_279 = arith.constant 0 : index
    %c1_280 = arith.constant 1 : index
    %c0_281 = arith.constant 0 : index
    %210 = vector.load %arg9[%c2_278, %c0_279, %c1_280, %c0_281] : memref<4x2x6x128xbf16, #tpu.memory_space<vmem>>, vector<1x1x4x128xbf16>
    %211 = vector.shape_cast %210 : vector<1x1x4x128xbf16> to vector<4x128xbf16>
    %212 = vector.shape_cast %209 : vector<4x128xbf16> to vector<1x1x4x128xbf16>
    tpu.vector_store %arg9[%c2_278, %c0_279, %c1_280, %c0_281], %212 {strides = array<i32>} : memref<4x2x6x128xbf16, #tpu.memory_space<vmem>>, vector<1x1x4x128xbf16>,
    %213 = vector.extract_strided_slice %192 {offsets = [20, 0], sizes = [4, 128], strides = [1, 1]} : vector<32x128xbf16> to vector<4x128xbf16>
    %c2_282 = arith.constant 2 : index
    %c1_283 = arith.constant 1 : index
    %c1_284 = arith.constant 1 : index
    %c0_285 = arith.constant 0 : index
    %214 = vector.load %arg9[%c2_282, %c1_283, %c1_284, %c0_285] : memref<4x2x6x128xbf16, #tpu.memory_space<vmem>>, vector<1x1x4x128xbf16>
    %215 = vector.shape_cast %214 : vector<1x1x4x128xbf16> to vector<4x128xbf16>
    %216 = vector.shape_cast %213 : vector<4x128xbf16> to vector<1x1x4x128xbf16>
    tpu.vector_store %arg9[%c2_282, %c1_283, %c1_284, %c0_285], %216 {strides = array<i32>} : memref<4x2x6x128xbf16, #tpu.memory_space<vmem>>, vector<1x1x4x128xbf16>,
    %217 = vector.extract_strided_slice %192 {offsets = [24, 0], sizes = [4, 128], strides = [1, 1]} : vector<32x128xbf16> to vector<4x128xbf16>
    %c3_286 = arith.constant 3 : index
    %c0_287 = arith.constant 0 : index
    %c1_288 = arith.constant 1 : index
    %c0_289 = arith.constant 0 : index
    %218 = vector.load %arg9[%c3_286, %c0_287, %c1_288, %c0_289] : memref<4x2x6x128xbf16, #tpu.memory_space<vmem>>, vector<1x1x4x128xbf16>
    %219 = vector.shape_cast %218 : vector<1x1x4x128xbf16> to vector<4x128xbf16>
    %220 = vector.shape_cast %217 : vector<4x128xbf16> to vector<1x1x4x128xbf16>
    tpu.vector_store %arg9[%c3_286, %c0_287, %c1_288, %c0_289], %220 {strides = array<i32>} : memref<4x2x6x128xbf16, #tpu.memory_space<vmem>>, vector<1x1x4x128xbf16>,
    %221 = vector.extract_strided_slice %192 {offsets = [28, 0], sizes = [4, 128], strides = [1, 1]} : vector<32x128xbf16> to vector<4x128xbf16>
    %c3_290 = arith.constant 3 : index
    %c1_291 = arith.constant 1 : index
    %c1_292 = arith.constant 1 : index
    %c0_293 = arith.constant 0 : index
    %222 = vector.load %arg9[%c3_290, %c1_291, %c1_292, %c0_293] : memref<4x2x6x128xbf16, #tpu.memory_space<vmem>>, vector<1x1x4x128xbf16>
    %223 = vector.shape_cast %222 : vector<1x1x4x128xbf16> to vector<4x128xbf16>
    %224 = vector.shape_cast %221 : vector<4x128xbf16> to vector<1x1x4x128xbf16>
    tpu.vector_store %arg9[%c3_290, %c1_291, %c1_292, %c0_293], %224 {strides = array<i32>} : memref<4x2x6x128xbf16, #tpu.memory_space<vmem>>, vector<1x1x4x128xbf16>,
    %c2_294 = arith.constant 2 : index
    %c0_295 = arith.constant 0 : index
    %c0_296 = arith.constant 0 : index
    %c0_297 = arith.constant 0 : index
    %225 = vector.load %arg9[%c2_294, %c0_295, %c0_296, %c0_297] : memref<4x2x6x128xbf16, #tpu.memory_space<vmem>>, vector<1x1x4x128xbf16>
    %226 = vector.shape_cast %225 : vector<1x1x4x128xbf16> to vector<4x128xbf16>
    %c3_298 = arith.constant 3 : index
    %c0_299 = arith.constant 0 : index
    %c0_300 = arith.constant 0 : index
    %c0_301 = arith.constant 0 : index
    %227 = vector.load %arg9[%c3_298, %c0_299, %c0_300, %c0_301] : memref<4x2x6x128xbf16, #tpu.memory_space<vmem>>, vector<1x1x4x128xbf16>
    %228 = vector.shape_cast %227 : vector<1x1x4x128xbf16> to vector<4x128xbf16>
    %c0_302 = arith.constant 0 : index
    %c0_303 = arith.constant 0 : index
    %c1_304 = arith.constant 1 : index
    %c0_305 = arith.constant 0 : index
    %229 = vector.load %arg9[%c0_302, %c0_303, %c1_304, %c0_305] : memref<4x2x6x128xbf16, #tpu.memory_space<vmem>>, vector<1x1x4x128xbf16>
    %230 = vector.shape_cast %229 : vector<1x1x4x128xbf16> to vector<4x128xbf16>
    %c1_306 = arith.constant 1 : index
    %c0_307 = arith.constant 0 : index
    %c1_308 = arith.constant 1 : index
    %c0_309 = arith.constant 0 : index
    %231 = vector.load %arg9[%c1_306, %c0_307, %c1_308, %c0_309] : memref<4x2x6x128xbf16, #tpu.memory_space<vmem>>, vector<1x1x4x128xbf16>
    %232 = vector.shape_cast %231 : vector<1x1x4x128xbf16> to vector<4x128xbf16>
    %c2_310 = arith.constant 2 : index
    %c0_311 = arith.constant 0 : index
    %c1_312 = arith.constant 1 : index
    %c0_313 = arith.constant 0 : index
    %233 = vector.load %arg9[%c2_310, %c0_311, %c1_312, %c0_313] : memref<4x2x6x128xbf16, #tpu.memory_space<vmem>>, vector<1x1x4x128xbf16>
    %234 = vector.shape_cast %233 : vector<1x1x4x128xbf16> to vector<4x128xbf16>
    %235 = tpu.concatenate %226, %228, %230, %232, %234 in 1 : vector<4x128xbf16>, vector<4x128xbf16>, vector<4x128xbf16>, vector<4x128xbf16>, vector<4x128xbf16> -> vector<4x640xbf16>
    %c2_314 = arith.constant 2 : index
    %c1_315 = arith.constant 1 : index
    %c0_316 = arith.constant 0 : index
    %c0_317 = arith.constant 0 : index
    %236 = vector.load %arg9[%c2_314, %c1_315, %c0_316, %c0_317] : memref<4x2x6x128xbf16, #tpu.memory_space<vmem>>, vector<1x1x4x128xbf16>
    %237 = vector.shape_cast %236 : vector<1x1x4x128xbf16> to vector<4x128xbf16>
    %c3_318 = arith.constant 3 : index
    %c1_319 = arith.constant 1 : index
    %c0_320 = arith.constant 0 : index
    %c0_321 = arith.constant 0 : index
    %238 = vector.load %arg9[%c3_318, %c1_319, %c0_320, %c0_321] : memref<4x2x6x128xbf16, #tpu.memory_space<vmem>>, vector<1x1x4x128xbf16>
    %239 = vector.shape_cast %238 : vector<1x1x4x128xbf16> to vector<4x128xbf16>
    %c0_322 = arith.constant 0 : index
    %c1_323 = arith.constant 1 : index
    %c1_324 = arith.constant 1 : index
    %c0_325 = arith.constant 0 : index
    %240 = vector.load %arg9[%c0_322, %c1_323, %c1_324, %c0_325] : memref<4x2x6x128xbf16, #tpu.memory_space<vmem>>, vector<1x1x4x128xbf16>
    %241 = vector.shape_cast %240 : vector<1x1x4x128xbf16> to vector<4x128xbf16>
    %c1_326 = arith.constant 1 : index
    %c1_327 = arith.constant 1 : index
    %c1_328 = arith.constant 1 : index
    %c0_329 = arith.constant 0 : index
    %242 = vector.load %arg9[%c1_326, %c1_327, %c1_328, %c0_329] : memref<4x2x6x128xbf16, #tpu.memory_space<vmem>>, vector<1x1x4x128xbf16>
    %243 = vector.shape_cast %242 : vector<1x1x4x128xbf16> to vector<4x128xbf16>
    %c2_330 = arith.constant 2 : index
    %c1_331 = arith.constant 1 : index
    %c1_332 = arith.constant 1 : index
    %c0_333 = arith.constant 0 : index
    %244 = vector.load %arg9[%c2_330, %c1_331, %c1_332, %c0_333] : memref<4x2x6x128xbf16, #tpu.memory_space<vmem>>, vector<1x1x4x128xbf16>
    %245 = vector.shape_cast %244 : vector<1x1x4x128xbf16> to vector<4x128xbf16>
    %246 = tpu.concatenate %237, %239, %241, %243, %245 in 1 : vector<4x128xbf16>, vector<4x128xbf16>, vector<4x128xbf16>, vector<4x128xbf16>, vector<4x128xbf16> -> vector<4x640xbf16>
    %c0_334 = arith.constant 0 : index
    %c0_335 = arith.constant 0 : index
    %c1_336 = arith.constant 1 : index
    %c0_337 = arith.constant 0 : index
    %247 = vector.load %arg9[%c0_334, %c0_335, %c1_336, %c0_337] : memref<4x2x6x128xbf16, #tpu.memory_space<vmem>>, vector<1x1x4x128xbf16>
    %248 = vector.shape_cast %247 : vector<1x1x4x128xbf16> to vector<4x128xbf16>
    %c1_338 = arith.constant 1 : index
    %c0_339 = arith.constant 0 : index
    %c1_340 = arith.constant 1 : index
    %c0_341 = arith.constant 0 : index
    %249 = vector.load %arg9[%c1_338, %c0_339, %c1_340, %c0_341] : memref<4x2x6x128xbf16, #tpu.memory_space<vmem>>, vector<1x1x4x128xbf16>
    %250 = vector.shape_cast %249 : vector<1x1x4x128xbf16> to vector<4x128xbf16>
    %c2_342 = arith.constant 2 : index
    %c0_343 = arith.constant 0 : index
    %c1_344 = arith.constant 1 : index
    %c0_345 = arith.constant 0 : index
    %251 = vector.load %arg9[%c2_342, %c0_343, %c1_344, %c0_345] : memref<4x2x6x128xbf16, #tpu.memory_space<vmem>>, vector<1x1x4x128xbf16>
    %252 = vector.shape_cast %251 : vector<1x1x4x128xbf16> to vector<4x128xbf16>
    %c3_346 = arith.constant 3 : index
    %c0_347 = arith.constant 0 : index
    %c1_348 = arith.constant 1 : index
    %c0_349 = arith.constant 0 : index
    %253 = vector.load %arg9[%c3_346, %c0_347, %c1_348, %c0_349] : memref<4x2x6x128xbf16, #tpu.memory_space<vmem>>, vector<1x1x4x128xbf16>
    %254 = vector.shape_cast %253 : vector<1x1x4x128xbf16> to vector<4x128xbf16>
    %c0_350 = arith.constant 0 : index
    %c0_351 = arith.constant 0 : index
    %c2_352 = arith.constant 2 : index
    %c0_353 = arith.constant 0 : index
    %255 = vector.load %arg9[%c0_350, %c0_351, %c2_352, %c0_353] : memref<4x2x6x128xbf16, #tpu.memory_space<vmem>>, vector<1x1x4x128xbf16>
    %256 = vector.shape_cast %255 : vector<1x1x4x128xbf16> to vector<4x128xbf16>
    %257 = tpu.concatenate %248, %250, %252, %254, %256 in 1 : vector<4x128xbf16>, vector<4x128xbf16>, vector<4x128xbf16>, vector<4x128xbf16>, vector<4x128xbf16> -> vector<4x640xbf16>
    %c0_354 = arith.constant 0 : index
    %c1_355 = arith.constant 1 : index
    %c1_356 = arith.constant 1 : index
    %c0_357 = arith.constant 0 : index
    %258 = vector.load %arg9[%c0_354, %c1_355, %c1_356, %c0_357] : memref<4x2x6x128xbf16, #tpu.memory_space<vmem>>, vector<1x1x4x128xbf16>
    %259 = vector.shape_cast %258 : vector<1x1x4x128xbf16> to vector<4x128xbf16>
    %c1_358 = arith.constant 1 : index
    %c1_359 = arith.constant 1 : index
    %c1_360 = arith.constant 1 : index
    %c0_361 = arith.constant 0 : index
    %260 = vector.load %arg9[%c1_358, %c1_359, %c1_360, %c0_361] : memref<4x2x6x128xbf16, #tpu.memory_space<vmem>>, vector<1x1x4x128xbf16>
    %261 = vector.shape_cast %260 : vector<1x1x4x128xbf16> to vector<4x128xbf16>
    %c2_362 = arith.constant 2 : index
    %c1_363 = arith.constant 1 : index
    %c1_364 = arith.constant 1 : index
    %c0_365 = arith.constant 0 : index
    %262 = vector.load %arg9[%c2_362, %c1_363, %c1_364, %c0_365] : memref<4x2x6x128xbf16, #tpu.memory_space<vmem>>, vector<1x1x4x128xbf16>
    %263 = vector.shape_cast %262 : vector<1x1x4x128xbf16> to vector<4x128xbf16>
    %c3_366 = arith.constant 3 : index
    %c1_367 = arith.constant 1 : index
    %c1_368 = arith.constant 1 : index
    %c0_369 = arith.constant 0 : index
    %264 = vector.load %arg9[%c3_366, %c1_367, %c1_368, %c0_369] : memref<4x2x6x128xbf16, #tpu.memory_space<vmem>>, vector<1x1x4x128xbf16>
    %265 = vector.shape_cast %264 : vector<1x1x4x128xbf16> to vector<4x128xbf16>
    %c0_370 = arith.constant 0 : index
    %c1_371 = arith.constant 1 : index
    %c2_372 = arith.constant 2 : index
    %c0_373 = arith.constant 0 : index
    %266 = vector.load %arg9[%c0_370, %c1_371, %c2_372, %c0_373] : memref<4x2x6x128xbf16, #tpu.memory_space<vmem>>, vector<1x1x4x128xbf16>
    %267 = vector.shape_cast %266 : vector<1x1x4x128xbf16> to vector<4x128xbf16>
    %268 = tpu.concatenate %259, %261, %263, %265, %267 in 1 : vector<4x128xbf16>, vector<4x128xbf16>, vector<4x128xbf16>, vector<4x128xbf16>, vector<4x128xbf16> -> vector<4x640xbf16>
    %269 = tpu.concatenate %235, %246, %257, %268 in 0 : vector<4x640xbf16>, vector<4x640xbf16>, vector<4x640xbf16>, vector<4x640xbf16> -> vector<16x640xbf16>
    %c0_374 = arith.constant 0 : index
    %c0_375 = arith.constant 0 : index
    %270 = vector.load %arg2[%c0_374, %c0_375] : memref<640x128xbf16, #tpu.memory_space<vmem>>, vector<640x128xbf16>
    %cst_376 = arith.constant dense<0.000000e+00> : vector<16x128xf32>
    %271 = tpu.matmul %269, %270, %cst_376 {dimension_numbers = #tpu.dot_dimension_numbers<[1], [0], [0], [1], [0, 0, 1, 1], [], []>} : vector<16x640xbf16>, vector<640x128xbf16>, vector<16x128xf32> -> vector<16x128xf32>
    %cst_377 = arith.constant dense<0.000000e+00> : vector<128xf32>
    %272 = vector.multi_reduction <add>, %271, %cst_377 [0] : vector<16x128xf32> to vector<128xf32>
    %273 = vector.shape_cast %272 : vector<128xf32> to vector<1x128xf32>
    %cst_378 = arith.constant 1.600000e+01 : f32
    %274 = vector.broadcast %cst_378 : f32 to vector<1x128xf32>
    %275 = arith.divf %273, %274 : vector<1x128xf32>
    %276 = arith.mulf %271, %271 : vector<16x128xf32>
    %cst_379 = arith.constant dense<0.000000e+00> : vector<128xf32>
    %277 = vector.multi_reduction <add>, %276, %cst_379 [0] : vector<16x128xf32> to vector<128xf32>
    %278 = vector.shape_cast %277 : vector<128xf32> to vector<1x128xf32>
    %cst_380 = arith.constant 1.600000e+01 : f32
    %279 = vector.broadcast %cst_380 : f32 to vector<1x128xf32>
    %280 = arith.divf %278, %279 : vector<1x128xf32>
    %281 = arith.mulf %275, %275 : vector<1x128xf32>
    %282 = arith.subf %280, %281 : vector<1x128xf32>
    %cst_381 = arith.constant 9.99999974E-6 : f32
    %283 = vector.broadcast %cst_381 : f32 to vector<1x128xf32>
    %284 = arith.addf %282, %283 : vector<1x128xf32>
    %285 = math.rsqrt %284 : vector<1x128xf32>
    %c1_382 = arith.constant 1 : index
    %c0_383 = arith.constant 0 : index
    %286 = vector.load %arg4[%c1_382, %c0_383] : memref<3x128xf32, #tpu.memory_space<vmem>>, vector<1x128xf32>
    %287 = arith.mulf %286, %285 : vector<1x128xf32>
    %c1_384 = arith.constant 1 : index
    %c0_385 = arith.constant 0 : index
    %288 = vector.load %arg5[%c1_384, %c0_385] : memref<3x128xf32, #tpu.memory_space<vmem>>, vector<1x128xf32>
    %289 = arith.mulf %275, %287 : vector<1x128xf32>
    %290 = arith.subf %288, %289 : vector<1x128xf32>
    %291 = vector.broadcast %287 : vector<1x128xf32> to vector<16x128xf32>
    %292 = arith.mulf %271, %291 : vector<16x128xf32>
    %293 = vector.broadcast %290 : vector<1x128xf32> to vector<16x128xf32>
    %294 = arith.addf %292, %293 : vector<16x128xf32>
    %cst_386 = arith.constant 0.000000e+00 : f32
    %295 = vector.broadcast %cst_386 : f32 to vector<16x128xf32>
    %296 = arith.cmpf oge, %294, %295 : vector<16x128xf32>
    %cst_387 = arith.constant 0.00999999977 : f32
    %297 = vector.broadcast %cst_387 : f32 to vector<16x128xf32>
    %298 = arith.mulf %297, %294 : vector<16x128xf32>
    %299 = arith.select %296, %294, %298 : vector<16x128xi1>, vector<16x128xf32>
    %300 = arith.truncf %299 : vector<16x128xf32> to vector<16x128xbf16>
    %301 = vector.extract_strided_slice %300 {offsets = [0, 0], sizes = [4, 128], strides = [1, 1]} : vector<16x128xbf16> to vector<4x128xbf16>
    %c0_388 = arith.constant 0 : index
    %c0_389 = arith.constant 0 : index
    %c1_390 = arith.constant 1 : index
    %c0_391 = arith.constant 0 : index
    %302 = vector.load %arg10[%c0_388, %c0_389, %c1_390, %c0_391] : memref<2x2x6x128xbf16, #tpu.memory_space<vmem>>, vector<1x1x4x128xbf16>
    %303 = vector.shape_cast %302 : vector<1x1x4x128xbf16> to vector<4x128xbf16>
    %304 = vector.shape_cast %301 : vector<4x128xbf16> to vector<1x1x4x128xbf16>
    tpu.vector_store %arg10[%c0_388, %c0_389, %c1_390, %c0_391], %304 {strides = array<i32>} : memref<2x2x6x128xbf16, #tpu.memory_space<vmem>>, vector<1x1x4x128xbf16>,
    %305 = vector.extract_strided_slice %300 {offsets = [4, 0], sizes = [4, 128], strides = [1, 1]} : vector<16x128xbf16> to vector<4x128xbf16>
    %c0_392 = arith.constant 0 : index
    %c1_393 = arith.constant 1 : index
    %c1_394 = arith.constant 1 : index
    %c0_395 = arith.constant 0 : index
    %306 = vector.load %arg10[%c0_392, %c1_393, %c1_394, %c0_395] : memref<2x2x6x128xbf16, #tpu.memory_space<vmem>>, vector<1x1x4x128xbf16>
    %307 = vector.shape_cast %306 : vector<1x1x4x128xbf16> to vector<4x128xbf16>
    %308 = vector.shape_cast %305 : vector<4x128xbf16> to vector<1x1x4x128xbf16>
    tpu.vector_store %arg10[%c0_392, %c1_393, %c1_394, %c0_395], %308 {strides = array<i32>} : memref<2x2x6x128xbf16, #tpu.memory_space<vmem>>, vector<1x1x4x128xbf16>,
    %309 = vector.extract_strided_slice %300 {offsets = [8, 0], sizes = [4, 128], strides = [1, 1]} : vector<16x128xbf16> to vector<4x128xbf16>
    %c1_396 = arith.constant 1 : index
    %c0_397 = arith.constant 0 : index
    %c1_398 = arith.constant 1 : index
    %c0_399 = arith.constant 0 : index
    %310 = vector.load %arg10[%c1_396, %c0_397, %c1_398, %c0_399] : memref<2x2x6x128xbf16, #tpu.memory_space<vmem>>, vector<1x1x4x128xbf16>
    %311 = vector.shape_cast %310 : vector<1x1x4x128xbf16> to vector<4x128xbf16>
    %312 = vector.shape_cast %309 : vector<4x128xbf16> to vector<1x1x4x128xbf16>
    tpu.vector_store %arg10[%c1_396, %c0_397, %c1_398, %c0_399], %312 {strides = array<i32>} : memref<2x2x6x128xbf16, #tpu.memory_space<vmem>>, vector<1x1x4x128xbf16>,
    %313 = vector.extract_strided_slice %300 {offsets = [12, 0], sizes = [4, 128], strides = [1, 1]} : vector<16x128xbf16> to vector<4x128xbf16>
    %c1_400 = arith.constant 1 : index
    %c1_401 = arith.constant 1 : index
    %c1_402 = arith.constant 1 : index
    %c0_403 = arith.constant 0 : index
    %314 = vector.load %arg10[%c1_400, %c1_401, %c1_402, %c0_403] : memref<2x2x6x128xbf16, #tpu.memory_space<vmem>>, vector<1x1x4x128xbf16>
    %315 = vector.shape_cast %314 : vector<1x1x4x128xbf16> to vector<4x128xbf16>
    %316 = vector.shape_cast %313 : vector<4x128xbf16> to vector<1x1x4x128xbf16>
    tpu.vector_store %arg10[%c1_400, %c1_401, %c1_402, %c0_403], %316 {strides = array<i32>} : memref<2x2x6x128xbf16, #tpu.memory_space<vmem>>, vector<1x1x4x128xbf16>,
    %c0_404 = arith.constant 0 : index
    %c0_405 = arith.constant 0 : index
    %c0_406 = arith.constant 0 : index
    %c0_407 = arith.constant 0 : index
    %317 = vector.load %arg10[%c0_404, %c0_405, %c0_406, %c0_407] : memref<2x2x6x128xbf16, #tpu.memory_space<vmem>>, vector<1x1x4x128xbf16>
    %318 = vector.shape_cast %317 : vector<1x1x4x128xbf16> to vector<4x128xbf16>
    %c1_408 = arith.constant 1 : index
    %c0_409 = arith.constant 0 : index
    %c0_410 = arith.constant 0 : index
    %c0_411 = arith.constant 0 : index
    %319 = vector.load %arg10[%c1_408, %c0_409, %c0_410, %c0_411] : memref<2x2x6x128xbf16, #tpu.memory_space<vmem>>, vector<1x1x4x128xbf16>
    %320 = vector.shape_cast %319 : vector<1x1x4x128xbf16> to vector<4x128xbf16>
    %c0_412 = arith.constant 0 : index
    %c0_413 = arith.constant 0 : index
    %c1_414 = arith.constant 1 : index
    %c0_415 = arith.constant 0 : index
    %321 = vector.load %arg10[%c0_412, %c0_413, %c1_414, %c0_415] : memref<2x2x6x128xbf16, #tpu.memory_space<vmem>>, vector<1x1x4x128xbf16>
    %322 = vector.shape_cast %321 : vector<1x1x4x128xbf16> to vector<4x128xbf16>
    %c1_416 = arith.constant 1 : index
    %c0_417 = arith.constant 0 : index
    %c1_418 = arith.constant 1 : index
    %c0_419 = arith.constant 0 : index
    %323 = vector.load %arg10[%c1_416, %c0_417, %c1_418, %c0_419] : memref<2x2x6x128xbf16, #tpu.memory_space<vmem>>, vector<1x1x4x128xbf16>
    %324 = vector.shape_cast %323 : vector<1x1x4x128xbf16> to vector<4x128xbf16>
    %c0_420 = arith.constant 0 : index
    %c0_421 = arith.constant 0 : index
    %c2_422 = arith.constant 2 : index
    %c0_423 = arith.constant 0 : index
    %325 = vector.load %arg10[%c0_420, %c0_421, %c2_422, %c0_423] : memref<2x2x6x128xbf16, #tpu.memory_space<vmem>>, vector<1x1x4x128xbf16>
    %326 = vector.shape_cast %325 : vector<1x1x4x128xbf16> to vector<4x128xbf16>
    %327 = tpu.concatenate %318, %320, %322, %324, %326 in 1 : vector<4x128xbf16>, vector<4x128xbf16>, vector<4x128xbf16>, vector<4x128xbf16>, vector<4x128xbf16> -> vector<4x640xbf16>
    %c0_424 = arith.constant 0 : index
    %c1_425 = arith.constant 1 : index
    %c0_426 = arith.constant 0 : index
    %c0_427 = arith.constant 0 : index
    %328 = vector.load %arg10[%c0_424, %c1_425, %c0_426, %c0_427] : memref<2x2x6x128xbf16, #tpu.memory_space<vmem>>, vector<1x1x4x128xbf16>
    %329 = vector.shape_cast %328 : vector<1x1x4x128xbf16> to vector<4x128xbf16>
    %c1_428 = arith.constant 1 : index
    %c1_429 = arith.constant 1 : index
    %c0_430 = arith.constant 0 : index
    %c0_431 = arith.constant 0 : index
    %330 = vector.load %arg10[%c1_428, %c1_429, %c0_430, %c0_431] : memref<2x2x6x128xbf16, #tpu.memory_space<vmem>>, vector<1x1x4x128xbf16>
    %331 = vector.shape_cast %330 : vector<1x1x4x128xbf16> to vector<4x128xbf16>
    %c0_432 = arith.constant 0 : index
    %c1_433 = arith.constant 1 : index
    %c1_434 = arith.constant 1 : index
    %c0_435 = arith.constant 0 : index
    %332 = vector.load %arg10[%c0_432, %c1_433, %c1_434, %c0_435] : memref<2x2x6x128xbf16, #tpu.memory_space<vmem>>, vector<1x1x4x128xbf16>
    %333 = vector.shape_cast %332 : vector<1x1x4x128xbf16> to vector<4x128xbf16>
    %c1_436 = arith.constant 1 : index
    %c1_437 = arith.constant 1 : index
    %c1_438 = arith.constant 1 : index
    %c0_439 = arith.constant 0 : index
    %334 = vector.load %arg10[%c1_436, %c1_437, %c1_438, %c0_439] : memref<2x2x6x128xbf16, #tpu.memory_space<vmem>>, vector<1x1x4x128xbf16>
    %335 = vector.shape_cast %334 : vector<1x1x4x128xbf16> to vector<4x128xbf16>
    %c0_440 = arith.constant 0 : index
    %c1_441 = arith.constant 1 : index
    %c2_442 = arith.constant 2 : index
    %c0_443 = arith.constant 0 : index
    %336 = vector.load %arg10[%c0_440, %c1_441, %c2_442, %c0_443] : memref<2x2x6x128xbf16, #tpu.memory_space<vmem>>, vector<1x1x4x128xbf16>
    %337 = vector.shape_cast %336 : vector<1x1x4x128xbf16> to vector<4x128xbf16>
    %338 = tpu.concatenate %329, %331, %333, %335, %337 in 1 : vector<4x128xbf16>, vector<4x128xbf16>, vector<4x128xbf16>, vector<4x128xbf16>, vector<4x128xbf16> -> vector<4x640xbf16>
    %339 = tpu.concatenate %327, %338 in 0 : vector<4x640xbf16>, vector<4x640xbf16> -> vector<8x640xbf16>
    %c0_444 = arith.constant 0 : index
    %c0_445 = arith.constant 0 : index
    %340 = vector.load %arg3[%c0_444, %c0_445] : memref<640x128xbf16, #tpu.memory_space<vmem>>, vector<640x128xbf16>
    %cst_446 = arith.constant dense<0.000000e+00> : vector<8x128xf32>
    %341 = tpu.matmul %339, %340, %cst_446 {dimension_numbers = #tpu.dot_dimension_numbers<[1], [0], [0], [1], [0, 0, 1, 1], [], []>} : vector<8x640xbf16>, vector<640x128xbf16>, vector<8x128xf32> -> vector<8x128xf32>
    %cst_447 = arith.constant dense<0.000000e+00> : vector<128xf32>
    %342 = vector.multi_reduction <add>, %341, %cst_447 [0] : vector<8x128xf32> to vector<128xf32>
    %343 = vector.shape_cast %342 : vector<128xf32> to vector<1x128xf32>
    %cst_448 = arith.constant 8.000000e+00 : f32
    %344 = vector.broadcast %cst_448 : f32 to vector<1x128xf32>
    %345 = arith.divf %343, %344 : vector<1x128xf32>
    %346 = arith.mulf %341, %341 : vector<8x128xf32>
    %cst_449 = arith.constant dense<0.000000e+00> : vector<128xf32>
    %347 = vector.multi_reduction <add>, %346, %cst_449 [0] : vector<8x128xf32> to vector<128xf32>
    %348 = vector.shape_cast %347 : vector<128xf32> to vector<1x128xf32>
    %cst_450 = arith.constant 8.000000e+00 : f32
    %349 = vector.broadcast %cst_450 : f32 to vector<1x128xf32>
    %350 = arith.divf %348, %349 : vector<1x128xf32>
    %351 = arith.mulf %345, %345 : vector<1x128xf32>
    %352 = arith.subf %350, %351 : vector<1x128xf32>
    %cst_451 = arith.constant 9.99999974E-6 : f32
    %353 = vector.broadcast %cst_451 : f32 to vector<1x128xf32>
    %354 = arith.addf %352, %353 : vector<1x128xf32>
    %355 = math.rsqrt %354 : vector<1x128xf32>
    %c2_452 = arith.constant 2 : index
    %c0_453 = arith.constant 0 : index
    %356 = vector.load %arg4[%c2_452, %c0_453] : memref<3x128xf32, #tpu.memory_space<vmem>>, vector<1x128xf32>
    %357 = arith.mulf %356, %355 : vector<1x128xf32>
    %c2_454 = arith.constant 2 : index
    %c0_455 = arith.constant 0 : index
    %358 = vector.load %arg5[%c2_454, %c0_455] : memref<3x128xf32, #tpu.memory_space<vmem>>, vector<1x128xf32>
    %359 = arith.mulf %345, %357 : vector<1x128xf32>
    %360 = arith.subf %358, %359 : vector<1x128xf32>
    %361 = vector.broadcast %357 : vector<1x128xf32> to vector<8x128xf32>
    %362 = arith.mulf %341, %361 : vector<8x128xf32>
    %363 = vector.broadcast %360 : vector<1x128xf32> to vector<8x128xf32>
    %364 = arith.addf %362, %363 : vector<8x128xf32>
    %cst_456 = arith.constant 0.000000e+00 : f32
    %365 = vector.broadcast %cst_456 : f32 to vector<8x128xf32>
    %366 = arith.cmpf oge, %364, %365 : vector<8x128xf32>
    %cst_457 = arith.constant 0.00999999977 : f32
    %367 = vector.broadcast %cst_457 : f32 to vector<8x128xf32>
    %368 = arith.mulf %367, %364 : vector<8x128xf32>
    %369 = arith.select %366, %364, %368 : vector<8x128xi1>, vector<8x128xf32>
    %370 = vector.shape_cast %369 : vector<8x128xf32> to vector<2x4x128xf32>
    %c0_458 = arith.constant 0 : index
    %c0_459 = arith.constant 0 : index
    %371 = vector.load %arg6[%c0_458, %c0_459] : memref<4x128xf32, #tpu.memory_space<vmem>>, vector<4x128xf32>
    %372 = vector.shape_cast %371 : vector<4x128xf32> to vector<1x4x128xf32>
    %373 = vector.broadcast %372 : vector<1x4x128xf32> to vector<2x4x128xf32>
    %374 = arith.mulf %370, %373 : vector<2x4x128xf32>
    %cst_460 = arith.constant dense<0.000000e+00> : vector<2x128xf32>
    %375 = vector.multi_reduction <add>, %374, %cst_460 [1] : vector<2x4x128xf32> to vector<2x128xf32>
    %cst_461 = arith.constant dense<0.000000e+00> : vector<2xf32>
    %376 = vector.multi_reduction <add>, %375, %cst_461 [1] : vector<2x128xf32> to vector<2xf32>
    %377 = vector.shape_cast %376 : vector<2xf32> to vector<2x1xf32>
    %c0_462 = arith.constant 0 : index
    %c0_463 = arith.constant 0 : index
    %378 = vector.load %arg7[%c0_462, %c0_463] : memref<1x1xf32, #tpu.memory_space<vmem>>, vector<1x1xf32>
    %379 = vector.broadcast %378 : vector<1x1xf32> to vector<2x1xf32>
    %380 = arith.addf %377, %379 : vector<2x1xf32>
    %c0_464 = arith.constant 0 : index
    %c0_465 = arith.constant 0 : index
    %381 = vector.load %arg8[%c0_464, %c0_465] : memref<2x1xf32, #tpu.memory_space<vmem>>, vector<2x1xf32>
    tpu.vector_store %arg8[%c0_464, %c0_465], %380 {strides = array<i32>} : memref<2x1xf32, #tpu.memory_space<vmem>>, vector<2x1xf32>,
    return
  }
}

</mosaic_0001>

<llo_original>
// kernel: d_net_forward.1
$region0: #{d_net_forward.1}
  #allocation0 [shape = 'u32[]', space=smem, size = 0x4, offset = 0x4, fixed_abs, tag = 'smem constant byte address 0x4 - core index']
  #allocation1 [shape = 'u32[144,128]{1,0:T(1,128)}', space=vmem, size = 0x12000, scoped, tag = 'internal scratch']
  #allocation2 [shape = 'bf16[4,2,6,128]{3,2,1,0:T(8,128)(2,1)}', space=vmem, size = 0x4000, scoped, tag = 'scratch operand']
  #allocation3 [shape = 'bf16[2,2,6,128]{3,2,1,0:T(8,128)(2,1)}', space=vmem, size = 0x2000, scoped, tag = 'scratch operand']
  #allocation4 [shape = 'f32[1,1]{1,0:T(1,128)S(1)}', space=vmem, size = 0x200, scoped, tag = 'scoped memory for d_net_forward.1']
  %s0 = inlined_call_operand.vmem [shape: bf16[8,2,6,128], index: 0, kind: input, shape index: {}]
  %s1 = inlined_call_operand.vmem [shape: bf16[640,128], index: 1, kind: input, shape index: {}]
  %s2 = inlined_call_operand.vmem [shape: bf16[640,128], index: 2, kind: input, shape index: {}]
  %s3 = inlined_call_operand.vmem [shape: bf16[640,128], index: 3, kind: input, shape index: {}]
  %s4 = inlined_call_operand.vmem [shape: f32[3,128], index: 4, kind: input, shape index: {}]
  %s5 = inlined_call_operand.vmem [shape: f32[3,128], index: 5, kind: input, shape index: {}]
  %s6 = inlined_call_operand.vmem [shape: f32[4,128], index: 6, kind: input, shape index: {}]
  %s7 = inlined_call_operand.<no memory space> [shape: f32[1,1], index: 7, kind: input, shape index: {}]
  %s8 = inlined_call_operand.vmem [shape: f32[2,1], index: 8, kind: output, shape index: {}]
  %s9 = sld [smem:[#allocation0]]
  $region42: #{d_net_forward.1} parent=0
    _
  %s11 = ssub.s32 1, %s9
  %s12 = scalar_select 0, %s11, %s9
  %v13 = vstv %s7
  %14 = vst [vmem:[#allocation4] sm:$0x1] %v13
  // Predicated region
  $region2: #{d_net_forward.1} parent=0 // pred_check
    _
  $region3: #{d_net_forward.1} parent=0 // pred_check_branch
    %16 = sbr.rel (0) target = $region5
  $region4: #{d_net_forward.1} parent=0 // pred_region
    _
  $region5: #{d_net_forward.1} parent=0 // pred_fallthru
    _
  // Predicated region
  $region6: #{d_net_forward.1} parent=0 // pred_check
    _
  $region7: #{d_net_forward.1} parent=0 // pred_check_branch
    %18 = sbr.rel (0) target = $region9
  $region8: #{d_net_forward.1} parent=0 // pred_region
    _
  $region9: #{d_net_forward.1} parent=0 // pred_fallthru
    _
  // Predicated region
  $region10: #{d_net_forward.1} parent=0 // pred_check
    _
  $region11: #{d_net_forward.1} parent=0 // pred_check_branch
    %20 = sbr.rel (0) target = $region13
  $region12: #{d_net_forward.1} parent=0 // pred_region
    _
  $region13: #{d_net_forward.1} parent=0 // pred_fallthru
    _
  // Predicated region
  $region14: #{d_net_forward.1} parent=0 // pred_check
    _
  $region15: #{d_net_forward.1} parent=0 // pred_check_branch
    %22 = sbr.rel (0) target = $region17
  $region16: #{d_net_forward.1} parent=0 // pred_region
    _
  $region17: #{d_net_forward.1} parent=0 // pred_fallthru
    _
  // Predicated region
  $region18: #{d_net_forward.1} parent=0 // pred_check
    _
  $region19: #{d_net_forward.1} parent=0 // pred_check_branch
    %24 = sbr.rel (0) target = $region21
  $region20: #{d_net_forward.1} parent=0 // pred_region
    _
  $region21: #{d_net_forward.1} parent=0 // pred_fallthru
    _
  // Predicated region
  $region22: #{d_net_forward.1} parent=0 // pred_check
    _
  $region23: #{d_net_forward.1} parent=0 // pred_check_branch
    %26 = sbr.rel (0) target = $region25
  $region24: #{d_net_forward.1} parent=0 // pred_region
    _
  $region25: #{d_net_forward.1} parent=0 // pred_fallthru
    _
  // Predicated region
  $region26: #{d_net_forward.1} parent=0 // pred_check
    _
  $region27: #{d_net_forward.1} parent=0 // pred_check_branch
    %28 = sbr.rel (0) target = $region29
  $region28: #{d_net_forward.1} parent=0 // pred_region
    _
  $region29: #{d_net_forward.1} parent=0 // pred_fallthru
    _
  // Predicated region
  $region30: #{d_net_forward.1} parent=0 // pred_check
    _
  $region31: #{d_net_forward.1} parent=0 // pred_check_branch
    %30 = sbr.rel (0) target = $region33
  $region32: #{d_net_forward.1} parent=0 // pred_region
    _
  $region33: #{d_net_forward.1} parent=0 // pred_fallthru
    _
  %vm32 = vcmask 1040384
  %vm33 = vsmask.f32 256
  %vm34 = vmand %vm32, %vm33
  %v35 = vld [vmem:[#allocation2] sm:$0x1]
  %v36 = vsel %vm34, 0, %v35
  %37 = vst [vmem:[#allocation2] sm:$0x1] %v36
  %vm38 = vcmask 1042434
  %vm39 = vsmask.f32 7946
  %vm40 = vmand %vm38, %vm39
  %v41 = vld [vmem:[#allocation2] sm:$0x4]
  %v42 = vsel %vm40, 0, %v41
  %43 = vst [vmem:[#allocation2] sm:$0x4] %v42
  %s44 = scalar_lea.vmem [#allocation2], 4
  %v45 = vld [vmem:[%s44] sm:$0x1]
  %v46 = vsel %vm34, 0, %v45
  %47 = vst [vmem:[%s44] sm:$0x1] %v46
  %v48 = vld [vmem:[%s44] sm:$0x4]
  %v49 = vsel %vm40, 0, %v48
  %50 = vst [vmem:[%s44] sm:$0x4] %v49
  %s51 = scalar_lea.vmem [#allocation2], 8
  %v52 = vld [vmem:[%s51] sm:$0x1]
  %v53 = vsel %vm34, 0, %v52
  %54 = vst [vmem:[%s51] sm:$0x1] %v53
  %v55 = vld [vmem:[%s51] sm:$0x4]
  %v56 = vsel %vm40, 0, %v55
  %57 = vst [vmem:[%s51] sm:$0x4] %v56
  %s58 = scalar_lea.vmem [#allocation2], 12
  %v59 = vld [vmem:[%s58] sm:$0x1]
  %v60 = vsel %vm34, 0, %v59
  %61 = vst [vmem:[%s58] sm:$0x1] %v60
  %v62 = vld [vmem:[%s58] sm:$0x4]
  %v63 = vsel %vm40, 0, %v62
  %64 = vst [vmem:[%s58] sm:$0x4] %v63
  %s65 = scalar_lea.vmem [#allocation2], 16
  %v66 = vld [vmem:[%s65] sm:$0x1]
  %v67 = vsel %vm34, 0, %v66
  %68 = vst [vmem:[%s65] sm:$0x1] %v67
  %v69 = vld [vmem:[%s65] sm:$0x4]
  %v70 = vsel %vm40, 0, %v69
  %71 = vst [vmem:[%s65] sm:$0x4] %v70
  %s72 = scalar_lea.vmem [#allocation2], 20
  %v73 = vld [vmem:[%s72] sm:$0x1]
  %v74 = vsel %vm34, 0, %v73
  %75 = vst [vmem:[%s72] sm:$0x1] %v74
  %v76 = vld [vmem:[%s72] sm:$0x4]
  %v77 = vsel %vm40, 0, %v76
  %78 = vst [vmem:[%s72] sm:$0x4] %v77
  %s79 = scalar_lea.vmem [#allocation2], 24
  %v80 = vld [vmem:[%s79] sm:$0x1]
  %v81 = vsel %vm34, 0, %v80
  %82 = vst [vmem:[%s79] sm:$0x1] %v81
  %v83 = vld [vmem:[%s79] sm:$0x4]
  %v84 = vsel %vm40, 0, %v83
  %85 = vst [vmem:[%s79] sm:$0x4] %v84
  %s86 = scalar_lea.vmem [#allocation2], 28
  %v87 = vld [vmem:[%s86] sm:$0x1]
  %v88 = vsel %vm34, 0, %v87
  %89 = vst [vmem:[%s86] sm:$0x1] %v88
  %v90 = vld [vmem:[%s86] sm:$0x4]
  %v91 = vsel %vm40, 0, %v90
  %92 = vst [vmem:[%s86] sm:$0x4] %v91
  %v93 = vld [vmem:[#allocation3] sm:$0x1]
  %v94 = vsel %vm34, 0, %v93
  %95 = vst [vmem:[#allocation3] sm:$0x1] %v94
  %v96 = vld [vmem:[#allocation3] sm:$0x4]
  %v97 = vsel %vm40, 0, %v96
  %98 = vst [vmem:[#allocation3] sm:$0x4] %v97
  %s99 = scalar_lea.vmem [#allocation3], 4
  %v100 = vld [vmem:[%s99] sm:$0x1]
  %v101 = vsel %vm34, 0, %v100
  %102 = vst [vmem:[%s99] sm:$0x1] %v101
  %v103 = vld [vmem:[%s99] sm:$0x4]
  %v104 = vsel %vm40, 0, %v103
  %105 = vst [vmem:[%s99] sm:$0x4] %v104
  %s106 = scalar_lea.vmem [#allocation3], 8
  %v107 = vld [vmem:[%s106] sm:$0x1]
  %v108 = vsel %vm34, 0, %v107
  %109 = vst [vmem:[%s106] sm:$0x1] %v108
  %v110 = vld [vmem:[%s106] sm:$0x4]
  %v111 = vsel %vm40, 0, %v110
  %112 = vst [vmem:[%s106] sm:$0x4] %v111
  %s113 = scalar_lea.vmem [#allocation3], 12
  %v114 = vld [vmem:[%s113] sm:$0x1]
  %v115 = vsel %vm34, 0, %v114
  %116 = vst [vmem:[%s113] sm:$0x1] %v115
  %v117 = vld [vmem:[%s113] sm:$0x4]
  %v118 = vsel %vm40, 0, %v117
  %119 = vst [vmem:[%s113] sm:$0x4] %v118
  %s120 = scalar_lea.vmem %s0, 48
  %v121 = vld [vmem:[%s120] sm:$0x3]
  %s122 = scalar_lea.vmem %s0, 56
  %v123 = vld [vmem:[%s122] sm:$0x3]
  %v124 = vld [vmem:[%s0] sm:$0x7]
  %s125 = scalar_lea.vmem %s0, 8
  %v126 = vld [vmem:[%s125] sm:$0x7]
  %s127 = scalar_lea.vmem %s0, 16
  %v128 = vld [vmem:[%s127] sm:$0x7]
  %v130 = vunpack.c.l.b16 %v124
  %v131 = vpack.c.b16 %v130, %v130
  %v133 = vshrl.u32 %v131, 16
  %v135 = vshll.u32 %v131, 16
  %v137 = vrot.slane %v135, 1
  %v138 = vor.u32 %v133, %v137
  %v140 = vunpack.c.l.b16 %v126
  %v141 = vpack.c.b16 %v140, %v140
  %v143 = vshrl.u32 %v141, 16
  %v145 = vshll.u32 %v141, 16
  %v147 = vrot.slane %v145, 1
  %v148 = vor.u32 %v143, %v147
  %v150 = vunpack.c.l.b16 %v128
  %v151 = vpack.c.b16 %v150, %v150
  %v153 = vshrl.u32 %v151, 16
  %v155 = vshll.u32 %v151, 16
  %v157 = vrot.slane %v155, 1
  %v158 = vor.u32 %v153, %v157
  %s159 = scalar_lea.vmem %s0, 52
  %v160 = vld [vmem:[%s159] sm:$0x3]
  %s161 = scalar_lea.vmem %s0, 60
  %v162 = vld [vmem:[%s161] sm:$0x3]
  %s163 = scalar_lea.vmem %s0, 4
  %v164 = vld [vmem:[%s163] sm:$0x7]
  %s165 = scalar_lea.vmem %s0, 12
  %v166 = vld [vmem:[%s165] sm:$0x7]
  %s167 = scalar_lea.vmem %s0, 20
  %v168 = vld [vmem:[%s167] sm:$0x7]
  %v170 = vunpack.c.l.b16 %v164
  %v171 = vpack.c.b16 %v170, %v170
  %v173 = vshrl.u32 %v171, 16
  %v175 = vshll.u32 %v171, 16
  %v177 = vrot.slane %v175, 1
  %v178 = vor.u32 %v173, %v177
  %v180 = vunpack.c.l.b16 %v166
  %v181 = vpack.c.b16 %v180, %v180
  %v183 = vshrl.u32 %v181, 16
  %v185 = vshll.u32 %v181, 16
  %v187 = vrot.slane %v185, 1
  %v188 = vor.u32 %v183, %v187
  %v190 = vunpack.c.l.b16 %v168
  %v191 = vpack.c.b16 %v190, %v190
  %v193 = vshrl.u32 %v191, 16
  %v195 = vshll.u32 %v191, 16
  %v197 = vrot.slane %v195, 1
  %v198 = vor.u32 %v193, %v197
  %s199 = scalar_lea.vmem %s0, 24
  %v200 = vld [vmem:[%s199] sm:$0x7]
  %s201 = scalar_lea.vmem %s0, 32
  %v202 = vld [vmem:[%s201] sm:$0x7]
  %s203 = scalar_lea.vmem %s0, 28
  %v204 = vld [vmem:[%s203] sm:$0x7]
  %s205 = scalar_lea.vmem %s0, 36
  %v206 = vld [vmem:[%s205] sm:$0x7]
  %s207 = scalar_lea.vmem %s0, 40
  %v208 = vld [vmem:[%s207] sm:$0x7]
  %v209 = vld [vmem:[%s120] sm:$0x7]
  %s210 = scalar_lea.vmem %s0, 44
  %v211 = vld [vmem:[%s210] sm:$0x7]
  %v212 = vld [vmem:[%s159] sm:$0x7]
  %v213 = vld [vmem:[%s122] sm:$0x7]
  %v214 = vld [vmem:[%s0] sm:$0x6]
  %v216 = vunpack.c.l.b16 %v214
  %v217 = vpack.c.b16 %v216, %v216
  %v219 = vshrl.u32 %v217, 16
  %v221 = vshll.u32 %v217, 16
  %v223 = vrot.slane %v221, 1
  %v224 = vor.u32 %v219, %v223
  %v225 = vld [vmem:[%s161] sm:$0x7]
  %v226 = vld [vmem:[%s163] sm:$0x6]
  %v228 = vunpack.c.l.b16 %v226
  %v229 = vpack.c.b16 %v228, %v228
  %v231 = vshrl.u32 %v229, 16
  %v233 = vshll.u32 %v229, 16
  %v235 = vrot.slane %v233, 1
  %v236 = vor.u32 %v231, %v235
  %v239 = vrot.slane %v160, 6
  %v240 = vrot.slane %v162, 6
  %v241 = vrot.slane %v178, 6
  %v242 = vrot.slane %v188, 6
  %v243 = vrot.slane %v198, 6
  %v245 = vshrl.u32 %v124, 16
  %v247 = vrot.slane %v245, 4
  %v248 = vshll.u32 %v124, 16
  %v250 = vrot.slane %v248, 5
  %v251 = vor.u32 %v247, %v250
  %v253 = vshrl.u32 %v126, 16
  %v255 = vrot.slane %v253, 4
  %v256 = vshll.u32 %v126, 16
  %v258 = vrot.slane %v256, 5
  %v259 = vor.u32 %v255, %v258
  %v261 = vshrl.u32 %v128, 16
  %v263 = vrot.slane %v261, 4
  %v264 = vshll.u32 %v128, 16
  %v266 = vrot.slane %v264, 5
  %v267 = vor.u32 %v263, %v266
  %v269 = vshrl.u32 %v200, 16
  %v271 = vrot.slane %v269, 4
  %v272 = vshll.u32 %v200, 16
  %v274 = vrot.slane %v272, 5
  %v275 = vor.u32 %v271, %v274
  %v277 = vshrl.u32 %v202, 16
  %v279 = vrot.slane %v277, 4
  %v280 = vshll.u32 %v202, 16
  %v282 = vrot.slane %v280, 5
  %v283 = vor.u32 %v279, %v282
  %v285 = vshrl.u32 %v164, 16
  %v287 = vrot.slane %v285, 2
  %v288 = vshll.u32 %v164, 16
  %v290 = vrot.slane %v288, 3
  %v291 = vor.u32 %v287, %v290
  %v293 = vshrl.u32 %v166, 16
  %v295 = vrot.slane %v293, 2
  %v296 = vshll.u32 %v166, 16
  %v298 = vrot.slane %v296, 3
  %v299 = vor.u32 %v295, %v298
  %v301 = vshrl.u32 %v168, 16
  %v303 = vrot.slane %v301, 2
  %v304 = vshll.u32 %v168, 16
  %v306 = vrot.slane %v304, 3
  %v307 = vor.u32 %v303, %v306
  %v309 = vshrl.u32 %v204, 16
  %v311 = vrot.slane %v309, 2
  %v312 = vshll.u32 %v204, 16
  %v314 = vrot.slane %v312, 3
  %v315 = vor.u32 %v311, %v314
  %v317 = vshrl.u32 %v206, 16
  %v319 = vrot.slane %v317, 2
  %v320 = vshll.u32 %v206, 16
  %v322 = vrot.slane %v320, 3
  %v323 = vor.u32 %v319, %v322
  %v324 = vrot.slane %v264, 1
  %v325 = vor.u32 %v261, %v324
  %v326 = vrot.slane %v272, 1
  %v327 = vor.u32 %v269, %v326
  %v328 = vrot.slane %v280, 1
  %v329 = vor.u32 %v277, %v328
  %v331 = vshrl.u32 %v208, 16
  %v333 = vshll.u32 %v208, 16
  %v335 = vrot.slane %v333, 1
  %v336 = vor.u32 %v331, %v335
  %v338 = vshrl.u32 %v209, 16
  %v340 = vshll.u32 %v209, 16
  %v342 = vrot.slane %v340, 1
  %v343 = vor.u32 %v338, %v342
  %v344 = vrot.slane %v301, 6
  %v345 = vrot.slane %v304, 7
  %v346 = vor.u32 %v344, %v345
  %v347 = vrot.slane %v309, 6
  %v348 = vrot.slane %v312, 7
  %v349 = vor.u32 %v347, %v348
  %v350 = vrot.slane %v317, 6
  %v351 = vrot.slane %v320, 7
  %v352 = vor.u32 %v350, %v351
  %v354 = vshrl.u32 %v211, 16
  %v356 = vrot.slane %v354, 6
  %v357 = vshll.u32 %v211, 16
  %v359 = vrot.slane %v357, 7
  %v360 = vor.u32 %v356, %v359
  %v362 = vshrl.u32 %v212, 16
  %v364 = vrot.slane %v362, 6
  %v365 = vshll.u32 %v212, 16
  %v367 = vrot.slane %v365, 7
  %v368 = vor.u32 %v364, %v367
  %v369 = vrot.slane %v331, 4
  %v370 = vrot.slane %v333, 5
  %v371 = vor.u32 %v369, %v370
  %v372 = vrot.slane %v338, 4
  %v373 = vrot.slane %v340, 5
  %v374 = vor.u32 %v372, %v373
  %v376 = vshrl.u32 %v213, 16
  %v378 = vrot.slane %v376, 4
  %v379 = vshll.u32 %v213, 16
  %v381 = vrot.slane %v379, 5
  %v382 = vor.u32 %v378, %v381
  %v384 = vshrl.u32 %v224, 16
  %v386 = vrot.slane %v384, 4
  %v387 = vshll.u32 %v224, 16
  %v389 = vrot.slane %v387, 5
  %v390 = vor.u32 %v386, %v389
  %v391 = vrot.slane %v354, 2
  %v392 = vrot.slane %v357, 3
  %v393 = vor.u32 %v391, %v392
  %v394 = vrot.slane %v362, 2
  %v395 = vrot.slane %v365, 3
  %v396 = vor.u32 %v394, %v395
  %v398 = vshrl.u32 %v225, 16
  %v400 = vrot.slane %v398, 2
  %v401 = vshll.u32 %v225, 16
  %v403 = vrot.slane %v401, 3
  %v404 = vor.u32 %v400, %v403
  %v406 = vshrl.u32 %v236, 16
  %v408 = vrot.slane %v406, 2
  %v409 = vshll.u32 %v236, 16
  %v411 = vrot.slane %v409, 3
  %v412 = vor.u32 %v408, %v411
  %vm413 = vcmask 1041408
  %v416 = vsel %vm413, %v121, %v239
  %v419 = vsel %vm413, %v123, %v240
  %v422 = vsel %vm413, %v138, %v241
  %v425 = vsel %vm413, %v148, %v242
  %v428 = vsel %vm413, %v158, %v243
  %vm429 = vcmask 1043456
  %v431 = vsel %vm429, %v416, %v251
  %v433 = vsel %vm429, %v419, %v259
  %v435 = vsel %vm429, %v422, %v267
  %v437 = vsel %vm429, %v425, %v275
  %v439 = vsel %vm429, %v428, %v283
  %vm440 = vcmask 1045504
  %v442 = vsel %vm440, %v431, %v291
  %v445 = vsel %vm440, %v433, %v299
  %v448 = vsel %vm440, %v435, %v307
  %v451 = vsel %vm440, %v437, %v315
  %v454 = vsel %vm440, %v439, %v323
  %v458 = vsel %vm413, %v325, %v346
  %v461 = vsel %vm413, %v327, %v349
  %v464 = vsel %vm413, %v329, %v352
  %v467 = vsel %vm413, %v336, %v360
  %v470 = vsel %vm413, %v343, %v368
  %v471 = vsel %vm429, %v458, %v283
  %v473 = vsel %vm429, %v461, %v371
  %v475 = vsel %vm429, %v464, %v374
  %v477 = vsel %vm429, %v467, %v382
  %v479 = vsel %vm429, %v470, %v390
  %v480 = vsel %vm440, %v471, %v323
  %v483 = vsel %vm440, %v473, %v393
  %v486 = vsel %vm440, %v475, %v396
  %v489 = vsel %vm440, %v477, %v404
  %v492 = vsel %vm440, %v479, %v412
  %v494 = vld [vmem:[%s1] sm:$0xf]
  %v495 = vld [vmem:[%s1 + $0x4] sm:$0xf]
  %v496 = vld [vmem:[%s1 + $0x8] sm:$0xf]
  %v497 = vld [vmem:[%s1 + $0xc] sm:$0xf]
  %v498 = vld [vmem:[%s1 + $0x10] sm:$0xf]
  %v499 = vld [vmem:[%s1 + $0x14] sm:$0xf]
  %v500 = vld [vmem:[%s1 + $0x18] sm:$0xf]
  %v501 = vld [vmem:[%s1 + $0x1c] sm:$0xf]
  %v502 = vld [vmem:[%s1 + $0x20] sm:$0xf]
  %v503 = vld [vmem:[%s1 + $0x24] sm:$0xf]
  %v504 = vld [vmem:[%s1 + $0x28] sm:$0xf]
  %v505 = vld [vmem:[%s1 + $0x2c] sm:$0xf]
  %v506 = vld [vmem:[%s1 + $0x30] sm:$0xf]
  %v507 = vld [vmem:[%s1 + $0x34] sm:$0xf]
  %v508 = vld [vmem:[%s1 + $0x38] sm:$0xf]
  %v509 = vld [vmem:[%s1 + $0x3c] sm:$0xf]
  %v510 = vld [vmem:[%s1 + $0x40] sm:$0xf]
  %v511 = vld [vmem:[%s1 + $0x44] sm:$0xf]
  %v512 = vld [vmem:[%s1 + $0x48] sm:$0xf]
  %v513 = vld [vmem:[%s1 + $0x4c] sm:$0xf]
  %v514 = vld [vmem:[%s1 + $0x50] sm:$0xf]
  %v515 = vld [vmem:[%s1 + $0x54] sm:$0xf]
  %v516 = vld [vmem:[%s1 + $0x58] sm:$0xf]
  %v517 = vld [vmem:[%s1 + $0x5c] sm:$0xf]
  %v518 = vld [vmem:[%s1 + $0x60] sm:$0xf]
  %v519 = vld [vmem:[%s1 + $0x64] sm:$0xf]
  %v520 = vld [vmem:[%s1 + $0x68] sm:$0xf]
  %v521 = vld [vmem:[%s1 + $0x6c] sm:$0xf]
  %v522 = vld [vmem:[%s1 + $0x70] sm:$0xf]
  %v523 = vld [vmem:[%s1 + $0x74] sm:$0xf]
  %v524 = vld [vmem:[%s1 + $0x78] sm:$0xf]
  %v525 = vld [vmem:[%s1 + $0x7c] sm:$0xf]
  %v526 = vld [vmem:[%s1 + $0x80] sm:$0xf]
  %v527 = vld [vmem:[%s1 + $0x84] sm:$0xf]
  %v528 = vld [vmem:[%s1 + $0x88] sm:$0xf]
  %v529 = vld [vmem:[%s1 + $0x8c] sm:$0xf]
  %v530 = vld [vmem:[%s1 + $0x90] sm:$0xf]
  %v531 = vld [vmem:[%s1 + $0x94] sm:$0xf]
  %v532 = vld [vmem:[%s1 + $0x98] sm:$0xf]
  %v533 = vld [vmem:[%s1 + $0x9c] sm:$0xf]
  %v534 = vld [vmem:[%s1 + $0xa0] sm:$0xf]
  %v535 = vld [vmem:[%s1 + $0xa4] sm:$0xf]
  %v536 = vld [vmem:[%s1 + $0xa8] sm:$0xf]
  %v537 = vld [vmem:[%s1 + $0xac] sm:$0xf]
  %v538 = vld [vmem:[%s1 + $0xb0] sm:$0xf]
  %v539 = vld [vmem:[%s1 + $0xb4] sm:$0xf]
  %v540 = vld [vmem:[%s1 + $0xb8] sm:$0xf]
  %v541 = vld [vmem:[%s1 + $0xbc] sm:$0xf]
  %v542 = vld [vmem:[%s1 + $0xc0] sm:$0xf]
  %v543 = vld [vmem:[%s1 + $0xc4] sm:$0xf]
  %v544 = vld [vmem:[%s1 + $0xc8] sm:$0xf]
  %v545 = vld [vmem:[%s1 + $0xcc] sm:$0xf]
  %v546 = vld [vmem:[%s1 + $0xd0] sm:$0xf]
  %v547 = vld [vmem:[%s1 + $0xd4] sm:$0xf]
  %v548 = vld [vmem:[%s1 + $0xd8] sm:$0xf]
  %v549 = vld [vmem:[%s1 + $0xdc] sm:$0xf]
  %v550 = vld [vmem:[%s1 + $0xe0] sm:$0xf]
  %v551 = vld [vmem:[%s1 + $0xe4] sm:$0xf]
  %v552 = vld [vmem:[%s1 + $0xe8] sm:$0xf]
  %v553 = vld [vmem:[%s1 + $0xec] sm:$0xf]
  %v554 = vld [vmem:[%s1 + $0xf0] sm:$0xf]
  %v555 = vld [vmem:[%s1 + $0xf4] sm:$0xf]
  %v556 = vld [vmem:[%s1 + $0xf8] sm:$0xf]
  %v557 = vld [vmem:[%s1 + $0xfc] sm:$0xf]
  %v558 = vld [vmem:[%s1 + $0x100] sm:$0xf]
  %v559 = vld [vmem:[%s1 + $0x104] sm:$0xf]
  %v560 = vld [vmem:[%s1 + $0x108] sm:$0xf]
  %v561 = vld [vmem:[%s1 + $0x10c] sm:$0xf]
  %v562 = vld [vmem:[%s1 + $0x110] sm:$0xf]
  %v563 = vld [vmem:[%s1 + $0x114] sm:$0xf]
  %v564 = vld [vmem:[%s1 + $0x118] sm:$0xf]
  %v565 = vld [vmem:[%s1 + $0x11c] sm:$0xf]
  %v566 = vld [vmem:[%s1 + $0x120] sm:$0xf]
  %v567 = vld [vmem:[%s1 + $0x124] sm:$0xf]
  %v568 = vld [vmem:[%s1 + $0x128] sm:$0xf]
  %v569 = vld [vmem:[%s1 + $0x12c] sm:$0xf]
  %v570 = vld [vmem:[%s1 + $0x130] sm:$0xf]
  %v571 = vld [vmem:[%s1 + $0x134] sm:$0xf]
  %v572 = vld [vmem:[%s1 + $0x138] sm:$0xf]
  %v573 = vld [vmem:[%s1 + $0x13c] sm:$0xf]
  %v654 = vunpack.c.l.b16 %v494
  %v655 = vunpack.c.l.b16 %v495
  %v656 = vunpack.c.l.b16 %v496
  %v657 = vunpack.c.l.b16 %v497
  %v658 = vunpack.c.l.b16 %v498
  %v659 = vunpack.c.l.b16 %v499
  %v660 = vunpack.c.l.b16 %v500
  %v661 = vunpack.c.l.b16 %v501
  %v662 = vunpack.c.l.b16 %v502
  %v663 = vunpack.c.l.b16 %v503
  %v664 = vunpack.c.l.b16 %v504
  %v665 = vunpack.c.l.b16 %v505
  %v666 = vunpack.c.l.b16 %v506
  %v667 = vunpack.c.l.b16 %v507
  %v668 = vunpack.c.l.b16 %v508
  %v669 = vunpack.c.l.b16 %v509
  %v670 = vunpack.c.l.b16 %v510
  %v671 = vunpack.c.l.b16 %v511
  %v672 = vunpack.c.l.b16 %v512
  %v673 = vunpack.c.l.b16 %v513
  %v674 = vunpack.c.l.b16 %v514
  %v675 = vunpack.c.l.b16 %v515
  %v676 = vunpack.c.l.b16 %v516
  %v677 = vunpack.c.l.b16 %v517
  %v678 = vunpack.c.l.b16 %v518
  %v679 = vunpack.c.l.b16 %v519
  %v680 = vunpack.c.l.b16 %v520
  %v681 = vunpack.c.l.b16 %v521
  %v682 = vunpack.c.l.b16 %v522
  %v683 = vunpack.c.l.b16 %v523
  %v684 = vunpack.c.l.b16 %v524
  %v685 = vunpack.c.l.b16 %v525
  %v686 = vunpack.c.l.b16 %v526
  %v687 = vunpack.c.l.b16 %v527
  %v688 = vunpack.c.l.b16 %v528
  %v689 = vunpack.c.l.b16 %v529
  %v690 = vunpack.c.l.b16 %v530
  %v691 = vunpack.c.l.b16 %v531
  %v692 = vunpack.c.l.b16 %v532
  %v693 = vunpack.c.l.b16 %v533
  %v694 = vunpack.c.l.b16 %v534
  %v695 = vunpack.c.l.b16 %v535
  %v696 = vunpack.c.l.b16 %v536
  %v697 = vunpack.c.l.b16 %v537
  %v698 = vunpack.c.l.b16 %v538
  %v699 = vunpack.c.l.b16 %v539
  %v700 = vunpack.c.l.b16 %v540
  %v701 = vunpack.c.l.b16 %v541
  %v702 = vunpack.c.l.b16 %v542
  %v703 = vunpack.c.l.b16 %v543
  %v704 = vunpack.c.l.b16 %v544
  %v705 = vunpack.c.l.b16 %v545
  %v706 = vunpack.c.l.b16 %v546
  %v707 = vunpack.c.l.b16 %v547
  %v708 = vunpack.c.l.b16 %v548
  %v709 = vunpack.c.l.b16 %v549
  %v710 = vunpack.c.l.b16 %v550
  %v711 = vunpack.c.l.b16 %v551
  %v712 = vunpack.c.l.b16 %v552
  %v713 = vunpack.c.l.b16 %v553
  %v714 = vunpack.c.l.b16 %v554
  %v715 = vunpack.c.l.b16 %v555
  %v716 = vunpack.c.l.b16 %v556
  %v717 = vunpack.c.l.b16 %v557
  %v718 = vunpack.c.l.b16 %v558
  %v719 = vunpack.c.l.b16 %v559
  %v720 = vunpack.c.l.b16 %v560
  %v721 = vunpack.c.l.b16 %v561
  %v722 = vunpack.c.l.b16 %v562
  %v723 = vunpack.c.l.b16 %v563
  %v724 = vunpack.c.l.b16 %v564
  %v725 = vunpack.c.l.b16 %v565
  %v726 = vunpack.c.l.b16 %v566
  %v727 = vunpack.c.l.b16 %v567
  %v728 = vunpack.c.l.b16 %v568
  %v729 = vunpack.c.l.b16 %v569
  %v730 = vunpack.c.l.b16 %v570
  %v731 = vunpack.c.l.b16 %v571
  %v732 = vunpack.c.l.b16 %v572
  %v733 = vunpack.c.l.b16 %v573
  %v734 = vpack.c.b16 %v655, %v654
  %v735 = vpack.c.b16 %v657, %v656
  %v736 = vpack.c.b16 %v659, %v658
  %v737 = vpack.c.b16 %v661, %v660
  %v738 = vpack.c.b16 %v663, %v662
  %v739 = vpack.c.b16 %v665, %v664
  %v740 = vpack.c.b16 %v667, %v666
  %v741 = vpack.c.b16 %v669, %v668
  %v742 = vpack.c.b16 %v671, %v670
  %v743 = vpack.c.b16 %v673, %v672
  %v744 = vpack.c.b16 %v675, %v674
  %v745 = vpack.c.b16 %v677, %v676
  %v746 = vpack.c.b16 %v679, %v678
  %v747 = vpack.c.b16 %v681, %v680
  %v748 = vpack.c.b16 %v683, %v682
  %v749 = vpack.c.b16 %v685, %v684
  %v750 = vpack.c.b16 %v687, %v686
  %v751 = vpack.c.b16 %v689, %v688
  %v752 = vpack.c.b16 %v691, %v690
  %v753 = vpack.c.b16 %v693, %v692
  %v754 = vpack.c.b16 %v695, %v694
  %v755 = vpack.c.b16 %v697, %v696
  %v756 = vpack.c.b16 %v699, %v698
  %v757 = vpack.c.b16 %v701, %v700
  %v758 = vpack.c.b16 %v703, %v702
  %v759 = vpack.c.b16 %v705, %v704
  %v760 = vpack.c.b16 %v707, %v706
  %v761 = vpack.c.b16 %v709, %v708
  %v762 = vpack.c.b16 %v711, %v710
  %v763 = vpack.c.b16 %v713, %v712
  %v764 = vpack.c.b16 %v715, %v714
  %v765 = vpack.c.b16 %v717, %v716
  %v766 = vpack.c.b16 %v719, %v718
  %v767 = vpack.c.b16 %v721, %v720
  %v768 = vpack.c.b16 %v723, %v722
  %v769 = vpack.c.b16 %v725, %v724
  %v770 = vpack.c.b16 %v727, %v726
  %v771 = vpack.c.b16 %v729, %v728
  %v772 = vpack.c.b16 %v731, %v730
  %v773 = vpack.c.b16 %v733, %v732
  %814 = vmatprep.subr.bf16.mxu0 0
  %815 = vmatpush1.bf16.msra.mxu0 %v741
  %816 = vmatprep.subr.bf16.mxu0 0
  %817 = vmatpush1.bf16.msra.mxu0 %v740
  %818 = vmatprep.subr.bf16.mxu0 0
  %819 = vmatpush1.bf16.msra.mxu0 %v739
  %820 = vmatprep.subr.bf16.mxu0 0
  %821 = vmatpush1.bf16.msra.mxu0 %v738
  %822 = vmatprep.subr.bf16.mxu0 0
  %823 = vmatpush1.bf16.msra.mxu0 %v737
  %824 = vmatprep.subr.bf16.mxu0 0
  %825 = vmatpush1.bf16.msra.mxu0 %v736
  %826 = vmatprep.subr.bf16.mxu0 0
  %827 = vmatpush1.bf16.msra.mxu0 %v735
  %828 = vmatprep.subr.bf16.mxu0 0
  %829 = vmatpush1.bf16.msra.mxu0 %v734
  %830 = vmatprep.subr.bf16.mxu0 0
  %831 = vmatpush2.bf16.msra.mxu0 %v749
  %832 = vmatprep.subr.bf16.mxu0 0
  %833 = vmatpush2.bf16.msra.mxu0 %v748
  %834 = vmatprep.subr.bf16.mxu0 0
  %835 = vmatpush2.bf16.msra.mxu0 %v747
  %836 = vmatprep.subr.bf16.mxu0 0
  %837 = vmatpush2.bf16.msra.mxu0 %v746
  %838 = vmatprep.subr.bf16.mxu0 0
  %839 = vmatpush2.bf16.msra.mxu0 %v745
  %840 = vmatprep.subr.bf16.mxu0 0
  %841 = vmatpush2.bf16.msra.mxu0 %v744
  %842 = vmatprep.subr.bf16.mxu0 0
  %843 = vmatpush2.bf16.msra.mxu0 %v743
  %844 = vmatprep.subr.bf16.mxu0 0
  %845 = vmatpush2.bf16.msra.mxu0 %v742
  %846 = vmatprep.mubr.bf16.mxu0 %v445
  %847 = vmatmul.mubr.bf16.gmra.mxu0 %v442
  %v848 = vpop.f32.mrf.mxu0
  %v849 = vadd.f32 0.0, %v848
  %v850 = vpop.f32.mrf.mxu0
  %v851 = vpop.f32.mrf.mxu0
  %v852 = vadd.f32 0.0, %v851
  %v853 = vpop.f32.mrf.mxu0
  %854 = vmatprep.mubr.bf16.mxu0 %v483
  %855 = vmatmul.mubr.bf16.gmra.mxu0 %v480
  %v856 = vpop.f32.mrf.mxu0
  %v857 = vadd.f32 0.0, %v856
  %v858 = vpop.f32.mrf.mxu0
  %v859 = vpop.f32.mrf.mxu0
  %v860 = vadd.f32 0.0, %v859
  %v861 = vpop.f32.mrf.mxu0
  %862 = vdwg.mxu0
  %863 = vmatprep.subr.bf16.mxu0 0
  %864 = vmatpush1.bf16.msra.mxu0 %v757
  %865 = vmatprep.subr.bf16.mxu0 0
  %866 = vmatpush1.bf16.msra.mxu0 %v756
  %867 = vmatprep.subr.bf16.mxu0 0
  %868 = vmatpush1.bf16.msra.mxu0 %v755
  %869 = vmatprep.subr.bf16.mxu0 0
  %870 = vmatpush1.bf16.msra.mxu0 %v754
  %871 = vmatprep.subr.bf16.mxu0 0
  %872 = vmatpush1.bf16.msra.mxu0 %v753
  %873 = vmatprep.subr.bf16.mxu0 0
  %874 = vmatpush1.bf16.msra.mxu0 %v752
  %875 = vmatprep.subr.bf16.mxu0 0
  %876 = vmatpush1.bf16.msra.mxu0 %v751
  %877 = vmatprep.subr.bf16.mxu0 0
  %878 = vmatpush1.bf16.msra.mxu0 %v750
  %879 = vmatprep.subr.bf16.mxu0 0
  %880 = vmatpush2.bf16.msra.mxu0 %v765
  %881 = vmatprep.subr.bf16.mxu0 0
  %882 = vmatpush2.bf16.msra.mxu0 %v764
  %883 = vmatprep.subr.bf16.mxu0 0
  %884 = vmatpush2.bf16.msra.mxu0 %v763
  %885 = vmatprep.subr.bf16.mxu0 0
  %886 = vmatpush2.bf16.msra.mxu0 %v762
  %887 = vmatprep.subr.bf16.mxu0 0
  %888 = vmatpush2.bf16.msra.mxu0 %v761
  %889 = vmatprep.subr.bf16.mxu0 0
  %890 = vmatpush2.bf16.msra.mxu0 %v760
  %891 = vmatprep.subr.bf16.mxu0 0
  %892 = vmatpush2.bf16.msra.mxu0 %v759
  %893 = vmatprep.subr.bf16.mxu0 0
  %894 = vmatpush2.bf16.msra.mxu0 %v758
  %895 = vmatprep.mubr.bf16.mxu0 %v451
  %896 = vmatmul.mubr.bf16.gmra.mxu0 %v448
  %v897 = vpop.f32.mrf.mxu0
  %v898 = vadd.f32 %v849, %v897
  %v899 = vpop.f32.mrf.mxu0
  %v900 = vpop.f32.mrf.mxu0
  %v901 = vadd.f32 %v852, %v900
  %v902 = vpop.f32.mrf.mxu0
  %903 = vmatprep.mubr.bf16.mxu0 %v489
  %904 = vmatmul.mubr.bf16.gmra.mxu0 %v486
  %v905 = vpop.f32.mrf.mxu0
  %v906 = vadd.f32 %v857, %v905
  %v907 = vpop.f32.mrf.mxu0
  %v908 = vpop.f32.mrf.mxu0
  %v909 = vadd.f32 %v860, %v908
  %v910 = vpop.f32.mrf.mxu0
  %911 = vdwg.mxu0
  %912 = vmatprep.subr.bf16.mxu0 0
  %913 = vmatpush1.bf16.msra.mxu0 %v773
  %914 = vmatprep.subr.bf16.mxu0 0
  %915 = vmatpush1.bf16.msra.mxu0 %v772
  %916 = vmatprep.subr.bf16.mxu0 0
  %917 = vmatpush1.bf16.msra.mxu0 %v771
  %918 = vmatprep.subr.bf16.mxu0 0
  %919 = vmatpush1.bf16.msra.mxu0 %v770
  %920 = vmatprep.subr.bf16.mxu0 0
  %921 = vmatpush1.bf16.msra.mxu0 %v769
  %922 = vmatprep.subr.bf16.mxu0 0
  %923 = vmatpush1.bf16.msra.mxu0 %v768
  %924 = vmatprep.subr.bf16.mxu0 0
  %925 = vmatpush1.bf16.msra.mxu0 %v767
  %926 = vmatprep.subr.bf16.mxu0 0
  %927 = vmatpush1.bf16.msra.mxu0 %v766
  %928 = vmatprep.subr.bf16.mxu0 0
  %929 = vmatpush2.bf16.msra.mxu0 0
  %930 = vmatprep.subr.bf16.mxu0 0
  %931 = vmatpush2.bf16.msra.mxu0 0
  %932 = vmatprep.subr.bf16.mxu0 0
  %933 = vmatpush2.bf16.msra.mxu0 0
  %934 = vmatprep.subr.bf16.mxu0 0
  %935 = vmatpush2.bf16.msra.mxu0 0
  %936 = vmatprep.subr.bf16.mxu0 0
  %937 = vmatpush2.bf16.msra.mxu0 0
  %938 = vmatprep.subr.bf16.mxu0 0
  %939 = vmatpush2.bf16.msra.mxu0 0
  %940 = vmatprep.subr.bf16.mxu0 0
  %941 = vmatpush2.bf16.msra.mxu0 0
  %942 = vmatprep.subr.bf16.mxu0 0
  %943 = vmatpush2.bf16.msra.mxu0 0
  %944 = vmatprep.mubr.bf16.mxu0 0
  %945 = vmatmul.mubr.bf16.gmra.mxu0 %v454
  %v946 = vpop.f32.mrf.mxu0
  %v947 = vadd.f32 %v898, %v946
  %v948 = vpop.f32.mrf.mxu0
  %v949 = vpop.f32.mrf.mxu0
  %v950 = vadd.f32 %v901, %v949
  %v951 = vpop.f32.mrf.mxu0
  %952 = vmatprep.mubr.bf16.mxu0 0
  %953 = vmatmul.mubr.bf16.gmra.mxu0 %v492
  %v954 = vpop.f32.mrf.mxu0
  %v955 = vadd.f32 %v906, %v954
  %v956 = vpop.f32.mrf.mxu0
  %v957 = vpop.f32.mrf.mxu0
  %v958 = vadd.f32 %v909, %v957
  %v959 = vpop.f32.mrf.mxu0
  %960 = vdwg.mxu0
  %v961 = vadd.f32 %v947, %v950
  %v962 = vadd.f32 %v961, %v955
  %v963 = vadd.f32 %v962, %v958
  %v964 = vrot.slane %v963, 4
  %v965 = vadd.f32 %v963, %v964
  %v966 = vrot.slane %v965, 2
  %v967 = vadd.f32 %v965, %v966
  %v968 = vrot.slane %v967, 1
  %v969 = vadd.f32 %v967, %v968
  %v970 = vrcp.pop 32.0
  %v971 = vmul.f32 %v969, %v970
  %v972 = vmul.f32 %v947, %v947
  %v973 = vmul.f32 %v950, %v950
  %v974 = vmul.f32 %v955, %v955
  %v975 = vmul.f32 %v958, %v958
  %v976 = vadd.f32 %v972, %v973
  %v977 = vadd.f32 %v976, %v974
  %v978 = vadd.f32 %v977, %v975
  %v979 = vrot.slane %v978, 4
  %v980 = vadd.f32 %v978, %v979
  %v981 = vrot.slane %v980, 2
  %v982 = vadd.f32 %v980, %v981
  %v983 = vrot.slane %v982, 1
  %v984 = vadd.f32 %v982, %v983
  %v985 = vmul.f32 %v984, %v970
  %v986 = vmul.f32 %v971, %v971
  %v987 = vsub.f32 %v985, %v986
  %v988 = vadd.f32 %v987, 1e-05
  %v989 = vrsqrt.pop %v988
  %v990 = vld [vmem:[%s4] sm:$0x1]
  %v991 = vmul.f32 %v990, %v989
  %v992 = vld [vmem:[%s5] sm:$0x1]
  %v993 = vmul.f32 %v971, %v991
  %v994 = vsub.f32 %v992, %v993
  %v995 = vlaneseq
  %v996 = vshrl.u32 %v995, 7
  %v997 = vsub.s32 0, %v996
  %v998 = vrot.slane %v991, %v997
  %v999 = vmul.f32 %v947, %v998
  %v1000 = vmul.f32 %v950, %v998
  %v1001 = vmul.f32 %v955, %v998
  %v1002 = vmul.f32 %v958, %v998
  %v1003 = vlaneseq
  %v1004 = vshrl.u32 %v1003, 7
  %v1005 = vsub.s32 0, %v1004
  %v1006 = vrot.slane %v994, %v1005
  %v1007 = vadd.f32 %v999, %v1006
  %v1008 = vadd.f32 %v1000, %v1006
  %v1009 = vadd.f32 %v1001, %v1006
  %v1010 = vadd.f32 %v1002, %v1006
  %vm1011 = vcmp.ge.f32.partialorder %v1007, 0.0
  %vm1012 = vcmp.ge.f32.partialorder %v1008, 0.0
  %vm1013 = vcmp.ge.f32.partialorder %v1009, 0.0
  %vm1014 = vcmp.ge.f32.partialorder %v1010, 0.0
  %v1015 = vmul.f32 %v1007, 0.01
  %v1016 = vmul.f32 %v1008, 0.01
  %v1017 = vmul.f32 %v1009, 0.01
  %v1018 = vmul.f32 %v1010, 0.01
  %v1019 = vsel %vm1011, %v1007, %v1015
  %v1020 = vsel %vm1012, %v1008, %v1016
  %v1021 = vsel %vm1013, %v1009, %v1017
  %v1022 = vsel %vm1014, %v1010, %v1018
  %v1023 = vpack.c.bf16 %v1020, %v1019
  %v1024 = vpack.c.bf16 %v1022, %v1021
  %v1026 = vunpack.c.l.b16 %v1023
  %v1027 = vpack.c.b16 %v1026, %v1026
  %v1029 = vshrl.u32 %v1027, 16
  %v1031 = vrot.slane %v1029, 7
  %v1032 = vshll.u32 %v1027, 16
  %v1034 = vor.u32 %v1031, %v1032
  %vm1036 = vcmask 1042432
  %vm1037 = vsmask.f32 2306
  %vm1038 = vmand %vm1036, %vm1037
  %v1039 = vld [vmem:[#allocation2] sm:$0x7]
  %v1040 = vsel %vm1038, %v1034, %v1039
  %1041 = vst [vmem:[#allocation2] sm:$0x7] %v1040
  %v1042 = vrot.slane %v1029, 5
  %v1043 = vrot.slane %v1032, 6
  %v1044 = vor.u32 %v1042, %v1043
  %v1045 = vrot.slane %v1044, 4
  %v1047 = vld [vmem:[%s44] sm:$0x7]
  %v1048 = vsel %vm1038, %v1045, %v1047
  %1049 = vst [vmem:[%s44] sm:$0x7] %v1048
  %v1050 = vunpack.c.h.b16 %v1023
  %v1051 = vpack.c.b16 %v1050, %v1050
  %v1053 = vshrl.u32 %v1051, 16
  %v1055 = vrot.slane %v1053, 7
  %v1056 = vshll.u32 %v1051, 16
  %v1058 = vor.u32 %v1055, %v1056
  %v1060 = vld [vmem:[%s51] sm:$0x7]
  %v1061 = vsel %vm1038, %v1058, %v1060
  %1062 = vst [vmem:[%s51] sm:$0x7] %v1061
  %v1063 = vrot.slane %v1053, 5
  %v1064 = vrot.slane %v1056, 6
  %v1065 = vor.u32 %v1063, %v1064
  %v1066 = vrot.slane %v1065, 4
  %v1068 = vld [vmem:[%s58] sm:$0x7]
  %v1069 = vsel %vm1038, %v1066, %v1068
  %1070 = vst [vmem:[%s58] sm:$0x7] %v1069
  %v1072 = vunpack.c.l.b16 %v1024
  %v1073 = vpack.c.b16 %v1072, %v1072
  %v1075 = vshrl.u32 %v1073, 16
  %v1077 = vrot.slane %v1075, 7
  %v1078 = vshll.u32 %v1073, 16
  %v1080 = vor.u32 %v1077, %v1078
  %v1082 = vld [vmem:[%s65] sm:$0x7]
  %v1083 = vsel %vm1038, %v1080, %v1082
  %1084 = vst [vmem:[%s65] sm:$0x7] %v1083
  %v1085 = vrot.slane %v1075, 5
  %v1086 = vrot.slane %v1078, 6
  %v1087 = vor.u32 %v1085, %v1086
  %v1088 = vrot.slane %v1087, 4
  %v1090 = vld [vmem:[%s72] sm:$0x7]
  %v1091 = vsel %vm1038, %v1088, %v1090
  %1092 = vst [vmem:[%s72] sm:$0x7] %v1091
  %v1093 = vunpack.c.h.b16 %v1024
  %v1094 = vpack.c.b16 %v1093, %v1093
  %v1096 = vshrl.u32 %v1094, 16
  %v1098 = vrot.slane %v1096, 7
  %v1099 = vshll.u32 %v1094, 16
  %v1101 = vor.u32 %v1098, %v1099
  %v1103 = vld [vmem:[%s79] sm:$0x7]
  %v1104 = vsel %vm1038, %v1101, %v1103
  %1105 = vst [vmem:[%s79] sm:$0x7] %v1104
  %v1106 = vrot.slane %v1096, 5
  %v1107 = vrot.slane %v1099, 6
  %v1108 = vor.u32 %v1106, %v1107
  %v1109 = vrot.slane %v1108, 4
  %v1111 = vld [vmem:[%s86] sm:$0x7]
  %v1112 = vsel %vm1038, %v1109, %v1111
  %1113 = vst [vmem:[%s86] sm:$0x7] %v1112
  %v1114 = vld [vmem:[%s65] sm:$0x3]
  %v1115 = vld [vmem:[%s79] sm:$0x3]
  %v1116 = vld [vmem:[#allocation2] sm:$0x7]
  %v1117 = vld [vmem:[%s51] sm:$0x7]
  %v1118 = vld [vmem:[%s65] sm:$0x7]
  %v1120 = vunpack.c.l.b16 %v1116
  %v1121 = vpack.c.b16 %v1120, %v1120
  %v1123 = vshrl.u32 %v1121, 16
  %v1125 = vshll.u32 %v1121, 16
  %v1127 = vrot.slane %v1125, 1
  %v1128 = vor.u32 %v1123, %v1127
  %v1130 = vunpack.c.l.b16 %v1117
  %v1131 = vpack.c.b16 %v1130, %v1130
  %v1133 = vshrl.u32 %v1131, 16
  %v1135 = vshll.u32 %v1131, 16
  %v1137 = vrot.slane %v1135, 1
  %v1138 = vor.u32 %v1133, %v1137
  %v1140 = vunpack.c.l.b16 %v1118
  %v1141 = vpack.c.b16 %v1140, %v1140
  %v1143 = vshrl.u32 %v1141, 16
  %v1145 = vshll.u32 %v1141, 16
  %v1147 = vrot.slane %v1145, 1
  %v1148 = vor.u32 %v1143, %v1147
  %v1149 = vld [vmem:[%s72] sm:$0x3]
  %v1150 = vld [vmem:[%s86] sm:$0x3]
  %v1151 = vld [vmem:[%s44] sm:$0x7]
  %v1152 = vld [vmem:[%s58] sm:$0x7]
  %v1153 = vld [vmem:[%s72] sm:$0x7]
  %v1155 = vunpack.c.l.b16 %v1151
  %v1156 = vpack.c.b16 %v1155, %v1155
  %v1158 = vshrl.u32 %v1156, 16
  %v1160 = vshll.u32 %v1156, 16
  %v1162 = vrot.slane %v1160, 1
  %v1163 = vor.u32 %v1158, %v1162
  %v1165 = vunpack.c.l.b16 %v1152
  %v1166 = vpack.c.b16 %v1165, %v1165
  %v1168 = vshrl.u32 %v1166, 16
  %v1170 = vshll.u32 %v1166, 16
  %v1172 = vrot.slane %v1170, 1
  %v1173 = vor.u32 %v1168, %v1172
  %v1175 = vunpack.c.l.b16 %v1153
  %v1176 = vpack.c.b16 %v1175, %v1175
  %v1178 = vshrl.u32 %v1176, 16
  %v1180 = vshll.u32 %v1176, 16
  %v1182 = vrot.slane %v1180, 1
  %v1183 = vor.u32 %v1178, %v1182
  %v1184 = vld [vmem:[%s79] sm:$0x7]
  %v1185 = vld [vmem:[#allocation2] sm:$0x6]
  %v1187 = vunpack.c.l.b16 %v1185
  %v1188 = vpack.c.b16 %v1187, %v1187
  %v1190 = vshrl.u32 %v1188, 16
  %v1192 = vshll.u32 %v1188, 16
  %v1194 = vrot.slane %v1192, 1
  %v1195 = vor.u32 %v1190, %v1194
  %v1196 = vld [vmem:[%s86] sm:$0x7]
  %v1197 = vld [vmem:[%s44] sm:$0x6]
  %v1199 = vunpack.c.l.b16 %v1197
  %v1200 = vpack.c.b16 %v1199, %v1199
  %v1202 = vshrl.u32 %v1200, 16
  %v1204 = vshll.u32 %v1200, 16
  %v1206 = vrot.slane %v1204, 1
  %v1207 = vor.u32 %v1202, %v1206
  %v1210 = vrot.slane %v1149, 6
  %v1211 = vrot.slane %v1150, 6
  %v1212 = vrot.slane %v1163, 6
  %v1213 = vrot.slane %v1173, 6
  %v1214 = vrot.slane %v1183, 6
  %v1216 = vshrl.u32 %v1116, 16
  %v1218 = vrot.slane %v1216, 4
  %v1219 = vshll.u32 %v1116, 16
  %v1221 = vrot.slane %v1219, 5
  %v1222 = vor.u32 %v1218, %v1221
  %v1224 = vshrl.u32 %v1117, 16
  %v1226 = vrot.slane %v1224, 4
  %v1227 = vshll.u32 %v1117, 16
  %v1229 = vrot.slane %v1227, 5
  %v1230 = vor.u32 %v1226, %v1229
  %v1232 = vshrl.u32 %v1118, 16
  %v1234 = vrot.slane %v1232, 4
  %v1235 = vshll.u32 %v1118, 16
  %v1237 = vrot.slane %v1235, 5
  %v1238 = vor.u32 %v1234, %v1237
  %v1240 = vshrl.u32 %v1184, 16
  %v1242 = vrot.slane %v1240, 4
  %v1243 = vshll.u32 %v1184, 16
  %v1245 = vrot.slane %v1243, 5
  %v1246 = vor.u32 %v1242, %v1245
  %v1248 = vshrl.u32 %v1195, 16
  %v1250 = vrot.slane %v1248, 4
  %v1251 = vshll.u32 %v1195, 16
  %v1253 = vrot.slane %v1251, 5
  %v1254 = vor.u32 %v1250, %v1253
  %v1256 = vshrl.u32 %v1151, 16
  %v1258 = vrot.slane %v1256, 2
  %v1259 = vshll.u32 %v1151, 16
  %v1261 = vrot.slane %v1259, 3
  %v1262 = vor.u32 %v1258, %v1261
  %v1264 = vshrl.u32 %v1152, 16
  %v1266 = vrot.slane %v1264, 2
  %v1267 = vshll.u32 %v1152, 16
  %v1269 = vrot.slane %v1267, 3
  %v1270 = vor.u32 %v1266, %v1269
  %v1272 = vshrl.u32 %v1153, 16
  %v1274 = vrot.slane %v1272, 2
  %v1275 = vshll.u32 %v1153, 16
  %v1277 = vrot.slane %v1275, 3
  %v1278 = vor.u32 %v1274, %v1277
  %v1280 = vshrl.u32 %v1196, 16
  %v1282 = vrot.slane %v1280, 2
  %v1283 = vshll.u32 %v1196, 16
  %v1285 = vrot.slane %v1283, 3
  %v1286 = vor.u32 %v1282, %v1285
  %v1288 = vshrl.u32 %v1207, 16
  %v1290 = vrot.slane %v1288, 2
  %v1291 = vshll.u32 %v1207, 16
  %v1293 = vrot.slane %v1291, 3
  %v1294 = vor.u32 %v1290, %v1293
  %v1297 = vsel %vm413, %v1114, %v1210
  %v1300 = vsel %vm413, %v1115, %v1211
  %v1303 = vsel %vm413, %v1128, %v1212
  %v1306 = vsel %vm413, %v1138, %v1213
  %v1309 = vsel %vm413, %v1148, %v1214
  %v1311 = vsel %vm429, %v1297, %v1222
  %v1313 = vsel %vm429, %v1300, %v1230
  %v1315 = vsel %vm429, %v1303, %v1238
  %v1317 = vsel %vm429, %v1306, %v1246
  %v1319 = vsel %vm429, %v1309, %v1254
  %v1321 = vsel %vm440, %v1311, %v1262
  %v1324 = vsel %vm440, %v1313, %v1270
  %v1327 = vsel %vm440, %v1315, %v1278
  %v1330 = vsel %vm440, %v1317, %v1286
  %v1333 = vsel %vm440, %v1319, %v1294
  %v1335 = vld [vmem:[%s2] sm:$0xf]
  %v1336 = vld [vmem:[%s2 + $0x4] sm:$0xf]
  %v1337 = vld [vmem:[%s2 + $0x8] sm:$0xf]
  %v1338 = vld [vmem:[%s2 + $0xc] sm:$0xf]
  %v1339 = vld [vmem:[%s2 + $0x10] sm:$0xf]
  %v1340 = vld [vmem:[%s2 + $0x14] sm:$0xf]
  %v1341 = vld [vmem:[%s2 + $0x18] sm:$0xf]
  %v1342 = vld [vmem:[%s2 + $0x1c] sm:$0xf]
  %v1343 = vld [vmem:[%s2 + $0x20] sm:$0xf]
  %v1344 = vld [vmem:[%s2 + $0x24] sm:$0xf]
  %v1345 = vld [vmem:[%s2 + $0x28] sm:$0xf]
  %v1346 = vld [vmem:[%s2 + $0x2c] sm:$0xf]
  %v1347 = vld [vmem:[%s2 + $0x30] sm:$0xf]
  %v1348 = vld [vmem:[%s2 + $0x34] sm:$0xf]
  %v1349 = vld [vmem:[%s2 + $0x38] sm:$0xf]
  %v1350 = vld [vmem:[%s2 + $0x3c] sm:$0xf]
  %v1351 = vld [vmem:[%s2 + $0x40] sm:$0xf]
  %v1352 = vld [vmem:[%s2 + $0x44] sm:$0xf]
  %v1353 = vld [vmem:[%s2 + $0x48] sm:$0xf]
  %v1354 = vld [vmem:[%s2 + $0x4c] sm:$0xf]
  %v1355 = vld [vmem:[%s2 + $0x50] sm:$0xf]
  %v1356 = vld [vmem:[%s2 + $0x54] sm:$0xf]
  %v1357 = vld [vmem:[%s2 + $0x58] sm:$0xf]
  %v1358 = vld [vmem:[%s2 + $0x5c] sm:$0xf]
  %v1359 = vld [vmem:[%s2 + $0x60] sm:$0xf]
  %v1360 = vld [vmem:[%s2 + $0x64] sm:$0xf]
  %v1361 = vld [vmem:[%s2 + $0x68] sm:$0xf]
  %v1362 = vld [vmem:[%s2 + $0x6c] sm:$0xf]
  %v1363 = vld [vmem:[%s2 + $0x70] sm:$0xf]
  %v1364 = vld [vmem:[%s2 + $0x74] sm:$0xf]
  %v1365 = vld [vmem:[%s2 + $0x78] sm:$0xf]
  %v1366 = vld [vmem:[%s2 + $0x7c] sm:$0xf]
  %v1367 = vld [vmem:[%s2 + $0x80] sm:$0xf]
  %v1368 = vld [vmem:[%s2 + $0x84] sm:$0xf]
  %v1369 = vld [vmem:[%s2 + $0x88] sm:$0xf]
  %v1370 = vld [vmem:[%s2 + $0x8c] sm:$0xf]
  %v1371 = vld [vmem:[%s2 + $0x90] sm:$0xf]
  %v1372 = vld [vmem:[%s2 + $0x94] sm:$0xf]
  %v1373 = vld [vmem:[%s2 + $0x98] sm:$0xf]
  %v1374 = vld [vmem:[%s2 + $0x9c] sm:$0xf]
  %v1375 = vld [vmem:[%s2 + $0xa0] sm:$0xf]
  %v1376 = vld [vmem:[%s2 + $0xa4] sm:$0xf]
  %v1377 = vld [vmem:[%s2 + $0xa8] sm:$0xf]
  %v1378 = vld [vmem:[%s2 + $0xac] sm:$0xf]
  %v1379 = vld [vmem:[%s2 + $0xb0] sm:$0xf]
  %v1380 = vld [vmem:[%s2 + $0xb4] sm:$0xf]
  %v1381 = vld [vmem:[%s2 + $0xb8] sm:$0xf]
  %v1382 = vld [vmem:[%s2 + $0xbc] sm:$0xf]
  %v1383 = vld [vmem:[%s2 + $0xc0] sm:$0xf]
  %v1384 = vld [vmem:[%s2 + $0xc4] sm:$0xf]
  %v1385 = vld [vmem:[%s2 + $0xc8] sm:$0xf]
  %v1386 = vld [vmem:[%s2 + $0xcc] sm:$0xf]
  %v1387 = vld [vmem:[%s2 + $0xd0] sm:$0xf]
  %v1388 = vld [vmem:[%s2 + $0xd4] sm:$0xf]
  %v1389 = vld [vmem:[%s2 + $0xd8] sm:$0xf]
  %v1390 = vld [vmem:[%s2 + $0xdc] sm:$0xf]
  %v1391 = vld [vmem:[%s2 + $0xe0] sm:$0xf]
  %v1392 = vld [vmem:[%s2 + $0xe4] sm:$0xf]
  %v1393 = vld [vmem:[%s2 + $0xe8] sm:$0xf]
  %v1394 = vld [vmem:[%s2 + $0xec] sm:$0xf]
  %v1395 = vld [vmem:[%s2 + $0xf0] sm:$0xf]
  %v1396 = vld [vmem:[%s2 + $0xf4] sm:$0xf]
  %v1397 = vld [vmem:[%s2 + $0xf8] sm:$0xf]
  %v1398 = vld [vmem:[%s2 + $0xfc] sm:$0xf]
  %v1399 = vld [vmem:[%s2 + $0x100] sm:$0xf]
  %v1400 = vld [vmem:[%s2 + $0x104] sm:$0xf]
  %v1401 = vld [vmem:[%s2 + $0x108] sm:$0xf]
  %v1402 = vld [vmem:[%s2 + $0x10c] sm:$0xf]
  %v1403 = vld [vmem:[%s2 + $0x110] sm:$0xf]
  %v1404 = vld [vmem:[%s2 + $0x114] sm:$0xf]
  %v1405 = vld [vmem:[%s2 + $0x118] sm:$0xf]
  %v1406 = vld [vmem:[%s2 + $0x11c] sm:$0xf]
  %v1407 = vld [vmem:[%s2 + $0x120] sm:$0xf]
  %v1408 = vld [vmem:[%s2 + $0x124] sm:$0xf]
  %v1409 = vld [vmem:[%s2 + $0x128] sm:$0xf]
  %v1410 = vld [vmem:[%s2 + $0x12c] sm:$0xf]
  %v1411 = vld [vmem:[%s2 + $0x130] sm:$0xf]
  %v1412 = vld [vmem:[%s2 + $0x134] sm:$0xf]
  %v1413 = vld [vmem:[%s2 + $0x138] sm:$0xf]
  %v1414 = vld [vmem:[%s2 + $0x13c] sm:$0xf]
  %v1495 = vunpack.c.l.b16 %v1335
  %v1496 = vunpack.c.l.b16 %v1336
  %v1497 = vunpack.c.l.b16 %v1337
  %v1498 = vunpack.c.l.b16 %v1338
  %v1499 = vunpack.c.l.b16 %v1339
  %v1500 = vunpack.c.l.b16 %v1340
  %v1501 = vunpack.c.l.b16 %v1341
  %v1502 = vunpack.c.l.b16 %v1342
  %v1503 = vunpack.c.l.b16 %v1343
  %v1504 = vunpack.c.l.b16 %v1344
  %v1505 = vunpack.c.l.b16 %v1345
  %v1506 = vunpack.c.l.b16 %v1346
  %v1507 = vunpack.c.l.b16 %v1347
  %v1508 = vunpack.c.l.b16 %v1348
  %v1509 = vunpack.c.l.b16 %v1349
  %v1510 = vunpack.c.l.b16 %v1350
  %v1511 = vunpack.c.l.b16 %v1351
  %v1512 = vunpack.c.l.b16 %v1352
  %v1513 = vunpack.c.l.b16 %v1353
  %v1514 = vunpack.c.l.b16 %v1354
  %v1515 = vunpack.c.l.b16 %v1355
  %v1516 = vunpack.c.l.b16 %v1356
  %v1517 = vunpack.c.l.b16 %v1357
  %v1518 = vunpack.c.l.b16 %v1358
  %v1519 = vunpack.c.l.b16 %v1359
  %v1520 = vunpack.c.l.b16 %v1360
  %v1521 = vunpack.c.l.b16 %v1361
  %v1522 = vunpack.c.l.b16 %v1362
  %v1523 = vunpack.c.l.b16 %v1363
  %v1524 = vunpack.c.l.b16 %v1364
  %v1525 = vunpack.c.l.b16 %v1365
  %v1526 = vunpack.c.l.b16 %v1366
  %v1527 = vunpack.c.l.b16 %v1367
  %v1528 = vunpack.c.l.b16 %v1368
  %v1529 = vunpack.c.l.b16 %v1369
  %v1530 = vunpack.c.l.b16 %v1370
  %v1531 = vunpack.c.l.b16 %v1371
  %v1532 = vunpack.c.l.b16 %v1372
  %v1533 = vunpack.c.l.b16 %v1373
  %v1534 = vunpack.c.l.b16 %v1374
  %v1535 = vunpack.c.l.b16 %v1375
  %v1536 = vunpack.c.l.b16 %v1376
  %v1537 = vunpack.c.l.b16 %v1377
  %v1538 = vunpack.c.l.b16 %v1378
  %v1539 = vunpack.c.l.b16 %v1379
  %v1540 = vunpack.c.l.b16 %v1380
  %v1541 = vunpack.c.l.b16 %v1381
  %v1542 = vunpack.c.l.b16 %v1382
  %v1543 = vunpack.c.l.b16 %v1383
  %v1544 = vunpack.c.l.b16 %v1384
  %v1545 = vunpack.c.l.b16 %v1385
  %v1546 = vunpack.c.l.b16 %v1386
  %v1547 = vunpack.c.l.b16 %v1387
  %v1548 = vunpack.c.l.b16 %v1388
  %v1549 = vunpack.c.l.b16 %v1389
  %v1550 = vunpack.c.l.b16 %v1390
  %v1551 = vunpack.c.l.b16 %v1391
  %v1552 = vunpack.c.l.b16 %v1392
  %v1553 = vunpack.c.l.b16 %v1393
  %v1554 = vunpack.c.l.b16 %v1394
  %v1555 = vunpack.c.l.b16 %v1395
  %v1556 = vunpack.c.l.b16 %v1396
  %v1557 = vunpack.c.l.b16 %v1397
  %v1558 = vunpack.c.l.b16 %v1398
  %v1559 = vunpack.c.l.b16 %v1399
  %v1560 = vunpack.c.l.b16 %v1400
  %v1561 = vunpack.c.l.b16 %v1401
  %v1562 = vunpack.c.l.b16 %v1402
  %v1563 = vunpack.c.l.b16 %v1403
  %v1564 = vunpack.c.l.b16 %v1404
  %v1565 = vunpack.c.l.b16 %v1405
  %v1566 = vunpack.c.l.b16 %v1406
  %v1567 = vunpack.c.l.b16 %v1407
  %v1568 = vunpack.c.l.b16 %v1408
  %v1569 = vunpack.c.l.b16 %v1409
  %v1570 = vunpack.c.l.b16 %v1410
  %v1571 = vunpack.c.l.b16 %v1411
  %v1572 = vunpack.c.l.b16 %v1412
  %v1573 = vunpack.c.l.b16 %v1413
  %v1574 = vunpack.c.l.b16 %v1414
  %v1575 = vpack.c.b16 %v1496, %v1495
  %v1576 = vpack.c.b16 %v1498, %v1497
  %v1577 = vpack.c.b16 %v1500, %v1499
  %v1578 = vpack.c.b16 %v1502, %v1501
  %v1579 = vpack.c.b16 %v1504, %v1503
  %v1580 = vpack.c.b16 %v1506, %v1505
  %v1581 = vpack.c.b16 %v1508, %v1507
  %v1582 = vpack.c.b16 %v1510, %v1509
  %v1583 = vpack.c.b16 %v1512, %v1511
  %v1584 = vpack.c.b16 %v1514, %v1513
  %v1585 = vpack.c.b16 %v1516, %v1515
  %v1586 = vpack.c.b16 %v1518, %v1517
  %v1587 = vpack.c.b16 %v1520, %v1519
  %v1588 = vpack.c.b16 %v1522, %v1521
  %v1589 = vpack.c.b16 %v1524, %v1523
  %v1590 = vpack.c.b16 %v1526, %v1525
  %v1591 = vpack.c.b16 %v1528, %v1527
  %v1592 = vpack.c.b16 %v1530, %v1529
  %v1593 = vpack.c.b16 %v1532, %v1531
  %v1594 = vpack.c.b16 %v1534, %v1533
  %v1595 = vpack.c.b16 %v1536, %v1535
  %v1596 = vpack.c.b16 %v1538, %v1537
  %v1597 = vpack.c.b16 %v1540, %v1539
  %v1598 = vpack.c.b16 %v1542, %v1541
  %v1599 = vpack.c.b16 %v1544, %v1543
  %v1600 = vpack.c.b16 %v1546, %v1545
  %v1601 = vpack.c.b16 %v1548, %v1547
  %v1602 = vpack.c.b16 %v1550, %v1549
  %v1603 = vpack.c.b16 %v1552, %v1551
  %v1604 = vpack.c.b16 %v1554, %v1553
  %v1605 = vpack.c.b16 %v1556, %v1555
  %v1606 = vpack.c.b16 %v1558, %v1557
  %v1607 = vpack.c.b16 %v1560, %v1559
  %v1608 = vpack.c.b16 %v1562, %v1561
  %v1609 = vpack.c.b16 %v1564, %v1563
  %v1610 = vpack.c.b16 %v1566, %v1565
  %v1611 = vpack.c.b16 %v1568, %v1567
  %v1612 = vpack.c.b16 %v1570, %v1569
  %v1613 = vpack.c.b16 %v1572, %v1571
  %v1614 = vpack.c.b16 %v1574, %v1573
  %1655 = vmatprep.subr.bf16.mxu0 0
  %1656 = vmatpush1.bf16.msra.mxu0 %v1582
  %1657 = vmatprep.subr.bf16.mxu0 0
  %1658 = vmatpush1.bf16.msra.mxu0 %v1581
  %1659 = vmatprep.subr.bf16.mxu0 0
  %1660 = vmatpush1.bf16.msra.mxu0 %v1580
  %1661 = vmatprep.subr.bf16.mxu0 0
  %1662 = vmatpush1.bf16.msra.mxu0 %v1579
  %1663 = vmatprep.subr.bf16.mxu0 0
  %1664 = vmatpush1.bf16.msra.mxu0 %v1578
  %1665 = vmatprep.subr.bf16.mxu0 0
  %1666 = vmatpush1.bf16.msra.mxu0 %v1577
  %1667 = vmatprep.subr.bf16.mxu0 0
  %1668 = vmatpush1.bf16.msra.mxu0 %v1576
  %1669 = vmatprep.subr.bf16.mxu0 0
  %1670 = vmatpush1.bf16.msra.mxu0 %v1575
  %1671 = vmatprep.subr.bf16.mxu0 0
  %1672 = vmatpush2.bf16.msra.mxu0 %v1590
  %1673 = vmatprep.subr.bf16.mxu0 0
  %1674 = vmatpush2.bf16.msra.mxu0 %v1589
  %1675 = vmatprep.subr.bf16.mxu0 0
  %1676 = vmatpush2.bf16.msra.mxu0 %v1588
  %1677 = vmatprep.subr.bf16.mxu0 0
  %1678 = vmatpush2.bf16.msra.mxu0 %v1587
  %1679 = vmatprep.subr.bf16.mxu0 0
  %1680 = vmatpush2.bf16.msra.mxu0 %v1586
  %1681 = vmatprep.subr.bf16.mxu0 0
  %1682 = vmatpush2.bf16.msra.mxu0 %v1585
  %1683 = vmatprep.subr.bf16.mxu0 0
  %1684 = vmatpush2.bf16.msra.mxu0 %v1584
  %1685 = vmatprep.subr.bf16.mxu0 0
  %1686 = vmatpush2.bf16.msra.mxu0 %v1583
  %1687 = vmatprep.mubr.bf16.mxu0 %v1324
  %1688 = vmatmul.mubr.bf16.gmra.mxu0 %v1321
  %v1689 = vpop.f32.mrf.mxu0
  %v1690 = vadd.f32 0.0, %v1689
  %v1691 = vpop.f32.mrf.mxu0
  %v1692 = vpop.f32.mrf.mxu0
  %v1693 = vadd.f32 0.0, %v1692
  %v1694 = vpop.f32.mrf.mxu0
  %1695 = vdwg.mxu0
  %1696 = vmatprep.subr.bf16.mxu0 0
  %1697 = vmatpush1.bf16.msra.mxu0 %v1598
  %1698 = vmatprep.subr.bf16.mxu0 0
  %1699 = vmatpush1.bf16.msra.mxu0 %v1597
  %1700 = vmatprep.subr.bf16.mxu0 0
  %1701 = vmatpush1.bf16.msra.mxu0 %v1596
  %1702 = vmatprep.subr.bf16.mxu0 0
  %1703 = vmatpush1.bf16.msra.mxu0 %v1595
  %1704 = vmatprep.subr.bf16.mxu0 0
  %1705 = vmatpush1.bf16.msra.mxu0 %v1594
  %1706 = vmatprep.subr.bf16.mxu0 0
  %1707 = vmatpush1.bf16.msra.mxu0 %v1593
  %1708 = vmatprep.subr.bf16.mxu0 0
  %1709 = vmatpush1.bf16.msra.mxu0 %v1592
  %1710 = vmatprep.subr.bf16.mxu0 0
  %1711 = vmatpush1.bf16.msra.mxu0 %v1591
  %1712 = vmatprep.subr.bf16.mxu0 0
  %1713 = vmatpush2.bf16.msra.mxu0 %v1606
  %1714 = vmatprep.subr.bf16.mxu0 0
  %1715 = vmatpush2.bf16.msra.mxu0 %v1605
  %1716 = vmatprep.subr.bf16.mxu0 0
  %1717 = vmatpush2.bf16.msra.mxu0 %v1604
  %1718 = vmatprep.subr.bf16.mxu0 0
  %1719 = vmatpush2.bf16.msra.mxu0 %v1603
  %1720 = vmatprep.subr.bf16.mxu0 0
  %1721 = vmatpush2.bf16.msra.mxu0 %v1602
  %1722 = vmatprep.subr.bf16.mxu0 0
  %1723 = vmatpush2.bf16.msra.mxu0 %v1601
  %1724 = vmatprep.subr.bf16.mxu0 0
  %1725 = vmatpush2.bf16.msra.mxu0 %v1600
  %1726 = vmatprep.subr.bf16.mxu0 0
  %1727 = vmatpush2.bf16.msra.mxu0 %v1599
  %1728 = vmatprep.mubr.bf16.mxu0 %v1330
  %1729 = vmatmul.mubr.bf16.gmra.mxu0 %v1327
  %v1730 = vpop.f32.mrf.mxu0
  %v1731 = vadd.f32 %v1690, %v1730
  %v1732 = vpop.f32.mrf.mxu0
  %v1733 = vpop.f32.mrf.mxu0
  %v1734 = vadd.f32 %v1693, %v1733
  %v1735 = vpop.f32.mrf.mxu0
  %1736 = vdwg.mxu0
  %1737 = vmatprep.subr.bf16.mxu0 0
  %1738 = vmatpush1.bf16.msra.mxu0 %v1614
  %1739 = vmatprep.subr.bf16.mxu0 0
  %1740 = vmatpush1.bf16.msra.mxu0 %v1613
  %1741 = vmatprep.subr.bf16.mxu0 0
  %1742 = vmatpush1.bf16.msra.mxu0 %v1612
  %1743 = vmatprep.subr.bf16.mxu0 0
  %1744 = vmatpush1.bf16.msra.mxu0 %v1611
  %1745 = vmatprep.subr.bf16.mxu0 0
  %1746 = vmatpush1.bf16.msra.mxu0 %v1610
  %1747 = vmatprep.subr.bf16.mxu0 0
  %1748 = vmatpush1.bf16.msra.mxu0 %v1609
  %1749 = vmatprep.subr.bf16.mxu0 0
  %1750 = vmatpush1.bf16.msra.mxu0 %v1608
  %1751 = vmatprep.subr.bf16.mxu0 0
  %1752 = vmatpush1.bf16.msra.mxu0 %v1607
  %1753 = vmatprep.subr.bf16.mxu0 0
  %1754 = vmatpush2.bf16.msra.mxu0 0
  %1755 = vmatprep.subr.bf16.mxu0 0
  %1756 = vmatpush2.bf16.msra.mxu0 0
  %1757 = vmatprep.subr.bf16.mxu0 0
  %1758 = vmatpush2.bf16.msra.mxu0 0
  %1759 = vmatprep.subr.bf16.mxu0 0
  %1760 = vmatpush2.bf16.msra.mxu0 0
  %1761 = vmatprep.subr.bf16.mxu0 0
  %1762 = vmatpush2.bf16.msra.mxu0 0
  %1763 = vmatprep.subr.bf16.mxu0 0
  %1764 = vmatpush2.bf16.msra.mxu0 0
  %1765 = vmatprep.subr.bf16.mxu0 0
  %1766 = vmatpush2.bf16.msra.mxu0 0
  %1767 = vmatprep.subr.bf16.mxu0 0
  %1768 = vmatpush2.bf16.msra.mxu0 0
  %1769 = vmatprep.mubr.bf16.mxu0 0
  %1770 = vmatmul.mubr.bf16.gmra.mxu0 %v1333
  %v1771 = vpop.f32.mrf.mxu0
  %v1772 = vadd.f32 %v1731, %v1771
  %v1773 = vpop.f32.mrf.mxu0
  %v1774 = vpop.f32.mrf.mxu0
  %v1775 = vadd.f32 %v1734, %v1774
  %v1776 = vpop.f32.mrf.mxu0
  %1777 = vdwg.mxu0
  %v1778 = vadd.f32 %v1772, %v1775
  %v1779 = vrot.slane %v1778, 4
  %v1780 = vadd.f32 %v1778, %v1779
  %v1781 = vrot.slane %v1780, 2
  %v1782 = vadd.f32 %v1780, %v1781
  %v1783 = vrot.slane %v1782, 1
  %v1784 = vadd.f32 %v1782, %v1783
  %v1785 = vrcp.pop 16.0
  %v1786 = vmul.f32 %v1784, %v1785
  %v1787 = vmul.f32 %v1772, %v1772
  %v1788 = vmul.f32 %v1775, %v1775
  %v1789 = vadd.f32 %v1787, %v1788
  %v1790 = vrot.slane %v1789, 4
  %v1791 = vadd.f32 %v1789, %v1790
  %v1792 = vrot.slane %v1791, 2
  %v1793 = vadd.f32 %v1791, %v1792
  %v1794 = vrot.slane %v1793, 1
  %v1795 = vadd.f32 %v1793, %v1794
  %v1796 = vmul.f32 %v1795, %v1785
  %v1797 = vmul.f32 %v1786, %v1786
  %v1798 = vsub.f32 %v1796, %v1797
  %v1799 = vadd.f32 %v1798, 1e-05
  %v1800 = vrsqrt.pop %v1799
  %v1801 = vld [vmem:[%s4 + $0x1] sm:$0x1]
  %v1802 = vmul.f32 %v1801, %v1800
  %v1803 = vld [vmem:[%s5 + $0x1] sm:$0x1]
  %v1804 = vmul.f32 %v1786, %v1802
  %v1805 = vsub.f32 %v1803, %v1804
  %v1806 = vlaneseq
  %v1807 = vshrl.u32 %v1806, 7
  %v1808 = vsub.s32 0, %v1807
  %v1809 = vrot.slane %v1802, %v1808
  %v1810 = vmul.f32 %v1772, %v1809
  %v1811 = vmul.f32 %v1775, %v1809
  %v1812 = vlaneseq
  %v1813 = vshrl.u32 %v1812, 7
  %v1814 = vsub.s32 0, %v1813
  %v1815 = vrot.slane %v1805, %v1814
  %v1816 = vadd.f32 %v1810, %v1815
  %v1817 = vadd.f32 %v1811, %v1815
  %vm1818 = vcmp.ge.f32.partialorder %v1816, 0.0
  %vm1819 = vcmp.ge.f32.partialorder %v1817, 0.0
  %v1820 = vmul.f32 %v1816, 0.01
  %v1821 = vmul.f32 %v1817, 0.01
  %v1822 = vsel %vm1818, %v1816, %v1820
  %v1823 = vsel %vm1819, %v1817, %v1821
  %v1824 = vpack.c.bf16 %v1823, %v1822
  %v1826 = vunpack.c.l.b16 %v1824
  %v1827 = vpack.c.b16 %v1826, %v1826
  %v1829 = vshrl.u32 %v1827, 16
  %v1831 = vrot.slane %v1829, 7
  %v1832 = vshll.u32 %v1827, 16
  %v1834 = vor.u32 %v1831, %v1832
  %v1836 = vld [vmem:[#allocation3] sm:$0x7]
  %v1837 = vsel %vm1038, %v1834, %v1836
  %1838 = vst [vmem:[#allocation3] sm:$0x7] %v1837
  %v1839 = vrot.slane %v1829, 5
  %v1840 = vrot.slane %v1832, 6
  %v1841 = vor.u32 %v1839, %v1840
  %v1842 = vrot.slane %v1841, 4
  %v1844 = vld [vmem:[%s99] sm:$0x7]
  %v1845 = vsel %vm1038, %v1842, %v1844
  %1846 = vst [vmem:[%s99] sm:$0x7] %v1845
  %v1847 = vunpack.c.h.b16 %v1824
  %v1848 = vpack.c.b16 %v1847, %v1847
  %v1850 = vshrl.u32 %v1848, 16
  %v1852 = vrot.slane %v1850, 7
  %v1853 = vshll.u32 %v1848, 16
  %v1855 = vor.u32 %v1852, %v1853
  %v1857 = vld [vmem:[%s106] sm:$0x7]
  %v1858 = vsel %vm1038, %v1855, %v1857
  %1859 = vst [vmem:[%s106] sm:$0x7] %v1858
  %v1860 = vrot.slane %v1850, 5
  %v1861 = vrot.slane %v1853, 6
  %v1862 = vor.u32 %v1860, %v1861
  %v1863 = vrot.slane %v1862, 4
  %v1865 = vld [vmem:[%s113] sm:$0x7]
  %v1866 = vsel %vm1038, %v1863, %v1865
  %1867 = vst [vmem:[%s113] sm:$0x7] %v1866
  %v1868 = vld [vmem:[#allocation3] sm:$0x3]
  %v1869 = vld [vmem:[%s106] sm:$0x3]
  %v1870 = vld [vmem:[#allocation3] sm:$0x7]
  %v1871 = vld [vmem:[%s106] sm:$0x7]
  %v1872 = vld [vmem:[#allocation3] sm:$0x6]
  %v1874 = vunpack.c.l.b16 %v1870
  %v1875 = vpack.c.b16 %v1874, %v1874
  %v1877 = vshrl.u32 %v1875, 16
  %v1879 = vshll.u32 %v1875, 16
  %v1881 = vrot.slane %v1879, 1
  %v1882 = vor.u32 %v1877, %v1881
  %v1884 = vunpack.c.l.b16 %v1871
  %v1885 = vpack.c.b16 %v1884, %v1884
  %v1887 = vshrl.u32 %v1885, 16
  %v1889 = vshll.u32 %v1885, 16
  %v1891 = vrot.slane %v1889, 1
  %v1892 = vor.u32 %v1887, %v1891
  %v1894 = vunpack.c.l.b16 %v1872
  %v1895 = vpack.c.b16 %v1894, %v1894
  %v1896 = vrot.slane %v1895, 1
  %v1897 = vld [vmem:[%s99] sm:$0x3]
  %v1898 = vld [vmem:[%s113] sm:$0x3]
  %v1899 = vld [vmem:[%s99] sm:$0x7]
  %v1900 = vld [vmem:[%s113] sm:$0x7]
  %v1901 = vld [vmem:[%s99] sm:$0x6]
  %v1903 = vunpack.c.l.b16 %v1899
  %v1904 = vpack.c.b16 %v1903, %v1903
  %v1906 = vshrl.u32 %v1904, 16
  %v1908 = vshll.u32 %v1904, 16
  %v1910 = vrot.slane %v1908, 1
  %v1911 = vor.u32 %v1906, %v1910
  %v1913 = vunpack.c.l.b16 %v1900
  %v1914 = vpack.c.b16 %v1913, %v1913
  %v1916 = vshrl.u32 %v1914, 16
  %v1918 = vshll.u32 %v1914, 16
  %v1920 = vrot.slane %v1918, 1
  %v1921 = vor.u32 %v1916, %v1920
  %v1923 = vunpack.c.l.b16 %v1901
  %v1924 = vpack.c.b16 %v1923, %v1923
  %v1925 = vrot.slane %v1924, 1
  %v1928 = vrot.slane %v1897, 6
  %v1929 = vrot.slane %v1898, 6
  %v1930 = vrot.slane %v1911, 6
  %v1931 = vrot.slane %v1921, 6
  %v1932 = vrot.slane %v1925, 6
  %v1935 = vsel %vm413, %v1868, %v1928
  %v1939 = vsel %vm413, %v1869, %v1929
  %v1943 = vsel %vm413, %v1882, %v1930
  %v1947 = vsel %vm413, %v1892, %v1931
  %v1951 = vsel %vm413, %v1896, %v1932
  %v1953 = vld [vmem:[%s3] sm:$0xf]
  %v1954 = vld [vmem:[%s3 + $0x4] sm:$0xf]
  %v1955 = vld [vmem:[%s3 + $0x8] sm:$0xf]
  %v1956 = vld [vmem:[%s3 + $0xc] sm:$0xf]
  %v1957 = vld [vmem:[%s3 + $0x10] sm:$0xf]
  %v1958 = vld [vmem:[%s3 + $0x14] sm:$0xf]
  %v1959 = vld [vmem:[%s3 + $0x18] sm:$0xf]
  %v1960 = vld [vmem:[%s3 + $0x1c] sm:$0xf]
  %v1961 = vld [vmem:[%s3 + $0x20] sm:$0xf]
  %v1962 = vld [vmem:[%s3 + $0x24] sm:$0xf]
  %v1963 = vld [vmem:[%s3 + $0x28] sm:$0xf]
  %v1964 = vld [vmem:[%s3 + $0x2c] sm:$0xf]
  %v1965 = vld [vmem:[%s3 + $0x30] sm:$0xf]
  %v1966 = vld [vmem:[%s3 + $0x34] sm:$0xf]
  %v1967 = vld [vmem:[%s3 + $0x38] sm:$0xf]
  %v1968 = vld [vmem:[%s3 + $0x3c] sm:$0xf]
  %v1969 = vld [vmem:[%s3 + $0x40] sm:$0xf]
  %v1970 = vld [vmem:[%s3 + $0x44] sm:$0xf]
  %v1971 = vld [vmem:[%s3 + $0x48] sm:$0xf]
  %v1972 = vld [vmem:[%s3 + $0x4c] sm:$0xf]
  %v1973 = vld [vmem:[%s3 + $0x50] sm:$0xf]
  %v1974 = vld [vmem:[%s3 + $0x54] sm:$0xf]
  %v1975 = vld [vmem:[%s3 + $0x58] sm:$0xf]
  %v1976 = vld [vmem:[%s3 + $0x5c] sm:$0xf]
  %v1977 = vld [vmem:[%s3 + $0x60] sm:$0xf]
  %v1978 = vld [vmem:[%s3 + $0x64] sm:$0xf]
  %v1979 = vld [vmem:[%s3 + $0x68] sm:$0xf]
  %v1980 = vld [vmem:[%s3 + $0x6c] sm:$0xf]
  %v1981 = vld [vmem:[%s3 + $0x70] sm:$0xf]
  %v1982 = vld [vmem:[%s3 + $0x74] sm:$0xf]
  %v1983 = vld [vmem:[%s3 + $0x78] sm:$0xf]
  %v1984 = vld [vmem:[%s3 + $0x7c] sm:$0xf]
  %v1985 = vld [vmem:[%s3 + $0x80] sm:$0xf]
  %v1986 = vld [vmem:[%s3 + $0x84] sm:$0xf]
  %v1987 = vld [vmem:[%s3 + $0x88] sm:$0xf]
  %v1988 = vld [vmem:[%s3 + $0x8c] sm:$0xf]
  %v1989 = vld [vmem:[%s3 + $0x90] sm:$0xf]
  %v1990 = vld [vmem:[%s3 + $0x94] sm:$0xf]
  %v1991 = vld [vmem:[%s3 + $0x98] sm:$0xf]
  %v1992 = vld [vmem:[%s3 + $0x9c] sm:$0xf]
  %v1993 = vld [vmem:[%s3 + $0xa0] sm:$0xf]
  %v1994 = vld [vmem:[%s3 + $0xa4] sm:$0xf]
  %v1995 = vld [vmem:[%s3 + $0xa8] sm:$0xf]
  %v1996 = vld [vmem:[%s3 + $0xac] sm:$0xf]
  %v1997 = vld [vmem:[%s3 + $0xb0] sm:$0xf]
  %v1998 = vld [vmem:[%s3 + $0xb4] sm:$0xf]
  %v1999 = vld [vmem:[%s3 + $0xb8] sm:$0xf]
  %v2000 = vld [vmem:[%s3 + $0xbc] sm:$0xf]
  %v2001 = vld [vmem:[%s3 + $0xc0] sm:$0xf]
  %v2002 = vld [vmem:[%s3 + $0xc4] sm:$0xf]
  %v2003 = vld [vmem:[%s3 + $0xc8] sm:$0xf]
  %v2004 = vld [vmem:[%s3 + $0xcc] sm:$0xf]
  %v2005 = vld [vmem:[%s3 + $0xd0] sm:$0xf]
  %v2006 = vld [vmem:[%s3 + $0xd4] sm:$0xf]
  %v2007 = vld [vmem:[%s3 + $0xd8] sm:$0xf]
  %v2008 = vld [vmem:[%s3 + $0xdc] sm:$0xf]
  %v2009 = vld [vmem:[%s3 + $0xe0] sm:$0xf]
  %v2010 = vld [vmem:[%s3 + $0xe4] sm:$0xf]
  %v2011 = vld [vmem:[%s3 + $0xe8] sm:$0xf]
  %v2012 = vld [vmem:[%s3 + $0xec] sm:$0xf]
  %v2013 = vld [vmem:[%s3 + $0xf0] sm:$0xf]
  %v2014 = vld [vmem:[%s3 + $0xf4] sm:$0xf]
  %v2015 = vld [vmem:[%s3 + $0xf8] sm:$0xf]
  %v2016 = vld [vmem:[%s3 + $0xfc] sm:$0xf]
  %v2017 = vld [vmem:[%s3 + $0x100] sm:$0xf]
  %v2018 = vld [vmem:[%s3 + $0x104] sm:$0xf]
  %v2019 = vld [vmem:[%s3 + $0x108] sm:$0xf]
  %v2020 = vld [vmem:[%s3 + $0x10c] sm:$0xf]
  %v2021 = vld [vmem:[%s3 + $0x110] sm:$0xf]
  %v2022 = vld [vmem:[%s3 + $0x114] sm:$0xf]
  %v2023 = vld [vmem:[%s3 + $0x118] sm:$0xf]
  %v2024 = vld [vmem:[%s3 + $0x11c] sm:$0xf]
  %v2025 = vld [vmem:[%s3 + $0x120] sm:$0xf]
  %v2026 = vld [vmem:[%s3 + $0x124] sm:$0xf]
  %v2027 = vld [vmem:[%s3 + $0x128] sm:$0xf]
  %v2028 = vld [vmem:[%s3 + $0x12c] sm:$0xf]
  %v2029 = vld [vmem:[%s3 + $0x130] sm:$0xf]
  %v2030 = vld [vmem:[%s3 + $0x134] sm:$0xf]
  %v2031 = vld [vmem:[%s3 + $0x138] sm:$0xf]
  %v2032 = vld [vmem:[%s3 + $0x13c] sm:$0xf]
  %v2113 = vunpack.c.l.b16 %v1953
  %v2114 = vunpack.c.l.b16 %v1954
  %v2115 = vunpack.c.l.b16 %v1955
  %v2116 = vunpack.c.l.b16 %v1956
  %v2117 = vunpack.c.l.b16 %v1957
  %v2118 = vunpack.c.l.b16 %v1958
  %v2119 = vunpack.c.l.b16 %v1959
  %v2120 = vunpack.c.l.b16 %v1960
  %v2121 = vunpack.c.l.b16 %v1961
  %v2122 = vunpack.c.l.b16 %v1962
  %v2123 = vunpack.c.l.b16 %v1963
  %v2124 = vunpack.c.l.b16 %v1964
  %v2125 = vunpack.c.l.b16 %v1965
  %v2126 = vunpack.c.l.b16 %v1966
  %v2127 = vunpack.c.l.b16 %v1967
  %v2128 = vunpack.c.l.b16 %v1968
  %v2129 = vunpack.c.l.b16 %v1969
  %v2130 = vunpack.c.l.b16 %v1970
  %v2131 = vunpack.c.l.b16 %v1971
  %v2132 = vunpack.c.l.b16 %v1972
  %v2133 = vunpack.c.l.b16 %v1973
  %v2134 = vunpack.c.l.b16 %v1974
  %v2135 = vunpack.c.l.b16 %v1975
  %v2136 = vunpack.c.l.b16 %v1976
  %v2137 = vunpack.c.l.b16 %v1977
  %v2138 = vunpack.c.l.b16 %v1978
  %v2139 = vunpack.c.l.b16 %v1979
  %v2140 = vunpack.c.l.b16 %v1980
  %v2141 = vunpack.c.l.b16 %v1981
  %v2142 = vunpack.c.l.b16 %v1982
  %v2143 = vunpack.c.l.b16 %v1983
  %v2144 = vunpack.c.l.b16 %v1984
  %v2145 = vunpack.c.l.b16 %v1985
  %v2146 = vunpack.c.l.b16 %v1986
  %v2147 = vunpack.c.l.b16 %v1987
  %v2148 = vunpack.c.l.b16 %v1988
  %v2149 = vunpack.c.l.b16 %v1989
  %v2150 = vunpack.c.l.b16 %v1990
  %v2151 = vunpack.c.l.b16 %v1991
  %v2152 = vunpack.c.l.b16 %v1992
  %v2153 = vunpack.c.l.b16 %v1993
  %v2154 = vunpack.c.l.b16 %v1994
  %v2155 = vunpack.c.l.b16 %v1995
  %v2156 = vunpack.c.l.b16 %v1996
  %v2157 = vunpack.c.l.b16 %v1997
  %v2158 = vunpack.c.l.b16 %v1998
  %v2159 = vunpack.c.l.b16 %v1999
  %v2160 = vunpack.c.l.b16 %v2000
  %v2161 = vunpack.c.l.b16 %v2001
  %v2162 = vunpack.c.l.b16 %v2002
  %v2163 = vunpack.c.l.b16 %v2003
  %v2164 = vunpack.c.l.b16 %v2004
  %v2165 = vunpack.c.l.b16 %v2005
  %v2166 = vunpack.c.l.b16 %v2006
  %v2167 = vunpack.c.l.b16 %v2007
  %v2168 = vunpack.c.l.b16 %v2008
  %v2169 = vunpack.c.l.b16 %v2009
  %v2170 = vunpack.c.l.b16 %v2010
  %v2171 = vunpack.c.l.b16 %v2011
  %v2172 = vunpack.c.l.b16 %v2012
  %v2173 = vunpack.c.l.b16 %v2013
  %v2174 = vunpack.c.l.b16 %v2014
  %v2175 = vunpack.c.l.b16 %v2015
  %v2176 = vunpack.c.l.b16 %v2016
  %v2177 = vunpack.c.l.b16 %v2017
  %v2178 = vunpack.c.l.b16 %v2018
  %v2179 = vunpack.c.l.b16 %v2019
  %v2180 = vunpack.c.l.b16 %v2020
  %v2181 = vunpack.c.l.b16 %v2021
  %v2182 = vunpack.c.l.b16 %v2022
  %v2183 = vunpack.c.l.b16 %v2023
  %v2184 = vunpack.c.l.b16 %v2024
  %v2185 = vunpack.c.l.b16 %v2025
  %v2186 = vunpack.c.l.b16 %v2026
  %v2187 = vunpack.c.l.b16 %v2027
  %v2188 = vunpack.c.l.b16 %v2028
  %v2189 = vunpack.c.l.b16 %v2029
  %v2190 = vunpack.c.l.b16 %v2030
  %v2191 = vunpack.c.l.b16 %v2031
  %v2192 = vunpack.c.l.b16 %v2032
  %v2193 = vpack.c.b16 %v2114, %v2113
  %v2194 = vpack.c.b16 %v2116, %v2115
  %v2195 = vpack.c.b16 %v2118, %v2117
  %v2196 = vpack.c.b16 %v2120, %v2119
  %v2197 = vpack.c.b16 %v2122, %v2121
  %v2198 = vpack.c.b16 %v2124, %v2123
  %v2199 = vpack.c.b16 %v2126, %v2125
  %v2200 = vpack.c.b16 %v2128, %v2127
  %v2201 = vpack.c.b16 %v2130, %v2129
  %v2202 = vpack.c.b16 %v2132, %v2131
  %v2203 = vpack.c.b16 %v2134, %v2133
  %v2204 = vpack.c.b16 %v2136, %v2135
  %v2205 = vpack.c.b16 %v2138, %v2137
  %v2206 = vpack.c.b16 %v2140, %v2139
  %v2207 = vpack.c.b16 %v2142, %v2141
  %v2208 = vpack.c.b16 %v2144, %v2143
  %v2209 = vpack.c.b16 %v2146, %v2145
  %v2210 = vpack.c.b16 %v2148, %v2147
  %v2211 = vpack.c.b16 %v2150, %v2149
  %v2212 = vpack.c.b16 %v2152, %v2151
  %v2213 = vpack.c.b16 %v2154, %v2153
  %v2214 = vpack.c.b16 %v2156, %v2155
  %v2215 = vpack.c.b16 %v2158, %v2157
  %v2216 = vpack.c.b16 %v2160, %v2159
  %v2217 = vpack.c.b16 %v2162, %v2161
  %v2218 = vpack.c.b16 %v2164, %v2163
  %v2219 = vpack.c.b16 %v2166, %v2165
  %v2220 = vpack.c.b16 %v2168, %v2167
  %v2221 = vpack.c.b16 %v2170, %v2169
  %v2222 = vpack.c.b16 %v2172, %v2171
  %v2223 = vpack.c.b16 %v2174, %v2173
  %v2224 = vpack.c.b16 %v2176, %v2175
  %v2225 = vpack.c.b16 %v2178, %v2177
  %v2226 = vpack.c.b16 %v2180, %v2179
  %v2227 = vpack.c.b16 %v2182, %v2181
  %v2228 = vpack.c.b16 %v2184, %v2183
  %v2229 = vpack.c.b16 %v2186, %v2185
  %v2230 = vpack.c.b16 %v2188, %v2187
  %v2231 = vpack.c.b16 %v2190, %v2189
  %v2232 = vpack.c.b16 %v2192, %v2191
  %2273 = vmatprep.subr.bf16.mxu0 0
  %2274 = vmatpush1.bf16.msra.mxu0 %v2200
  %2275 = vmatprep.subr.bf16.mxu0 0
  %2276 = vmatpush1.bf16.msra.mxu0 %v2199
  %2277 = vmatprep.subr.bf16.mxu0 0
  %2278 = vmatpush1.bf16.msra.mxu0 %v2198
  %2279 = vmatprep.subr.bf16.mxu0 0
  %2280 = vmatpush1.bf16.msra.mxu0 %v2197
  %2281 = vmatprep.subr.bf16.mxu0 0
  %2282 = vmatpush1.bf16.msra.mxu0 %v2196
  %2283 = vmatprep.subr.bf16.mxu0 0
  %2284 = vmatpush1.bf16.msra.mxu0 %v2195
  %2285 = vmatprep.subr.bf16.mxu0 0
  %2286 = vmatpush1.bf16.msra.mxu0 %v2194
  %2287 = vmatprep.subr.bf16.mxu0 0
  %2288 = vmatpush1.bf16.msra.mxu0 %v2193
  %2289 = vmatprep.subr.bf16.mxu0 0
  %2290 = vmatpush2.bf16.msra.mxu0 %v2208
  %2291 = vmatprep.subr.bf16.mxu0 0
  %2292 = vmatpush2.bf16.msra.mxu0 %v2207
  %2293 = vmatprep.subr.bf16.mxu0 0
  %2294 = vmatpush2.bf16.msra.mxu0 %v2206
  %2295 = vmatprep.subr.bf16.mxu0 0
  %2296 = vmatpush2.bf16.msra.mxu0 %v2205
  %2297 = vmatprep.subr.bf16.mxu0 0
  %2298 = vmatpush2.bf16.msra.mxu0 %v2204
  %2299 = vmatprep.subr.bf16.mxu0 0
  %2300 = vmatpush2.bf16.msra.mxu0 %v2203
  %2301 = vmatprep.subr.bf16.mxu0 0
  %2302 = vmatpush2.bf16.msra.mxu0 %v2202
  %2303 = vmatprep.subr.bf16.mxu0 0
  %2304 = vmatpush2.bf16.msra.mxu0 %v2201
  %2305 = vmatprep.mubr.bf16.mxu0 %v1939
  %2306 = vmatmul.mubr.bf16.gmra.mxu0 %v1935
  %v2307 = vpop.f32.mrf.mxu0
  %v2308 = vadd.f32 0.0, %v2307
  %v2309 = vpop.f32.mrf.mxu0
  %v2310 = vpop.f32.mrf.mxu0
  %v2311 = vpop.f32.mrf.mxu0
  %2312 = vdwg.mxu0
  %2313 = vmatprep.subr.bf16.mxu0 0
  %2314 = vmatpush1.bf16.msra.mxu0 %v2216
  %2315 = vmatprep.subr.bf16.mxu0 0
  %2316 = vmatpush1.bf16.msra.mxu0 %v2215
  %2317 = vmatprep.subr.bf16.mxu0 0
  %2318 = vmatpush1.bf16.msra.mxu0 %v2214
  %2319 = vmatprep.subr.bf16.mxu0 0
  %2320 = vmatpush1.bf16.msra.mxu0 %v2213
  %2321 = vmatprep.subr.bf16.mxu0 0
  %2322 = vmatpush1.bf16.msra.mxu0 %v2212
  %2323 = vmatprep.subr.bf16.mxu0 0
  %2324 = vmatpush1.bf16.msra.mxu0 %v2211
  %2325 = vmatprep.subr.bf16.mxu0 0
  %2326 = vmatpush1.bf16.msra.mxu0 %v2210
  %2327 = vmatprep.subr.bf16.mxu0 0
  %2328 = vmatpush1.bf16.msra.mxu0 %v2209
  %2329 = vmatprep.subr.bf16.mxu0 0
  %2330 = vmatpush2.bf16.msra.mxu0 %v2224
  %2331 = vmatprep.subr.bf16.mxu0 0
  %2332 = vmatpush2.bf16.msra.mxu0 %v2223
  %2333 = vmatprep.subr.bf16.mxu0 0
  %2334 = vmatpush2.bf16.msra.mxu0 %v2222
  %2335 = vmatprep.subr.bf16.mxu0 0
  %2336 = vmatpush2.bf16.msra.mxu0 %v2221
  %2337 = vmatprep.subr.bf16.mxu0 0
  %2338 = vmatpush2.bf16.msra.mxu0 %v2220
  %2339 = vmatprep.subr.bf16.mxu0 0
  %2340 = vmatpush2.bf16.msra.mxu0 %v2219
  %2341 = vmatprep.subr.bf16.mxu0 0
  %2342 = vmatpush2.bf16.msra.mxu0 %v2218
  %2343 = vmatprep.subr.bf16.mxu0 0
  %2344 = vmatpush2.bf16.msra.mxu0 %v2217
  %2345 = vmatprep.mubr.bf16.mxu0 %v1947
  %2346 = vmatmul.mubr.bf16.gmra.mxu0 %v1943
  %v2347 = vpop.f32.mrf.mxu0
  %v2348 = vadd.f32 %v2308, %v2347
  %v2349 = vpop.f32.mrf.mxu0
  %v2350 = vpop.f32.mrf.mxu0
  %v2351 = vpop.f32.mrf.mxu0
  %2352 = vdwg.mxu0
  %2353 = vmatprep.subr.bf16.mxu0 0
  %2354 = vmatpush1.bf16.msra.mxu0 %v2232
  %2355 = vmatprep.subr.bf16.mxu0 0
  %2356 = vmatpush1.bf16.msra.mxu0 %v2231
  %2357 = vmatprep.subr.bf16.mxu0 0
  %2358 = vmatpush1.bf16.msra.mxu0 %v2230
  %2359 = vmatprep.subr.bf16.mxu0 0
  %2360 = vmatpush1.bf16.msra.mxu0 %v2229
  %2361 = vmatprep.subr.bf16.mxu0 0
  %2362 = vmatpush1.bf16.msra.mxu0 %v2228
  %2363 = vmatprep.subr.bf16.mxu0 0
  %2364 = vmatpush1.bf16.msra.mxu0 %v2227
  %2365 = vmatprep.subr.bf16.mxu0 0
  %2366 = vmatpush1.bf16.msra.mxu0 %v2226
  %2367 = vmatprep.subr.bf16.mxu0 0
  %2368 = vmatpush1.bf16.msra.mxu0 %v2225
  %2369 = vmatprep.subr.bf16.mxu0 0
  %2370 = vmatpush2.bf16.msra.mxu0 0
  %2371 = vmatprep.subr.bf16.mxu0 0
  %2372 = vmatpush2.bf16.msra.mxu0 0
  %2373 = vmatprep.subr.bf16.mxu0 0
  %2374 = vmatpush2.bf16.msra.mxu0 0
  %2375 = vmatprep.subr.bf16.mxu0 0
  %2376 = vmatpush2.bf16.msra.mxu0 0
  %2377 = vmatprep.subr.bf16.mxu0 0
  %2378 = vmatpush2.bf16.msra.mxu0 0
  %2379 = vmatprep.subr.bf16.mxu0 0
  %2380 = vmatpush2.bf16.msra.mxu0 0
  %2381 = vmatprep.subr.bf16.mxu0 0
  %2382 = vmatpush2.bf16.msra.mxu0 0
  %2383 = vmatprep.subr.bf16.mxu0 0
  %2384 = vmatpush2.bf16.msra.mxu0 0
  %2385 = vmatprep.mubr.bf16.mxu0 0
  %2386 = vmatmul.mubr.bf16.gmra.mxu0 %v1951
  %v2387 = vpop.f32.mrf.mxu0
  %v2388 = vadd.f32 %v2348, %v2387
  %v2389 = vpop.f32.mrf.mxu0
  %v2390 = vpop.f32.mrf.mxu0
  %v2391 = vpop.f32.mrf.mxu0
  %2392 = vdwg.mxu0
  %v2393 = vrot.slane %v2388, 4
  %v2394 = vadd.f32 %v2388, %v2393
  %v2395 = vrot.slane %v2394, 2
  %v2396 = vadd.f32 %v2394, %v2395
  %v2397 = vrot.slane %v2396, 1
  %v2398 = vadd.f32 %v2396, %v2397
  %v2399 = vrcp.pop 8.0
  %v2400 = vmul.f32 %v2398, %v2399
  %v2401 = vmul.f32 %v2388, %v2388
  %v2402 = vrot.slane %v2401, 4
  %v2403 = vadd.f32 %v2401, %v2402
  %v2404 = vrot.slane %v2403, 2
  %v2405 = vadd.f32 %v2403, %v2404
  %v2406 = vrot.slane %v2405, 1
  %v2407 = vadd.f32 %v2405, %v2406
  %v2408 = vmul.f32 %v2407, %v2399
  %v2409 = vmul.f32 %v2400, %v2400
  %v2410 = vsub.f32 %v2408, %v2409
  %v2411 = vadd.f32 %v2410, 1e-05
  %v2412 = vrsqrt.pop %v2411
  %v2413 = vld [vmem:[%s4 + $0x2] sm:$0x1]
  %v2414 = vmul.f32 %v2413, %v2412
  %v2415 = vld [vmem:[%s5 + $0x2] sm:$0x1]
  %v2416 = vmul.f32 %v2400, %v2414
  %v2417 = vsub.f32 %v2415, %v2416
  %v2418 = vlaneseq
  %v2419 = vshrl.u32 %v2418, 7
  %v2420 = vsub.s32 0, %v2419
  %v2421 = vrot.slane %v2414, %v2420
  %v2422 = vmul.f32 %v2388, %v2421
  %v2423 = vlaneseq
  %v2424 = vshrl.u32 %v2423, 7
  %v2425 = vsub.s32 0, %v2424
  %v2426 = vrot.slane %v2417, %v2425
  %v2427 = vadd.f32 %v2422, %v2426
  %vm2428 = vcmp.ge.f32.partialorder %v2427, 0.0
  %v2429 = vmul.f32 %v2427, 0.01
  %v2430 = vsel %vm2428, %v2427, %v2429
  %v2432 = vcombine.high %v2430, %v2430
  %v2434 = vld [vmem:[%s6] sm:$0xf]
  %v2435 = vmul.f32 %v2430, %v2434
  %v2436 = vmul.f32 %v2432, %v2434
  %v2437 = vsel %vm429, %v2435, 0.0
  %v2438 = vrot.slane %v2437, 4
  %v2439 = vadd.f32 %v2437, %v2438
  %v2440 = vrot.slane %v2439, 2
  %v2441 = vadd.f32 %v2439, %v2440
  %v2442 = vrot.slane %v2441, 1
  %v2443 = vadd.f32 %v2441, %v2442
  %v2444 = vsel %vm429, %v2436, 0.0
  %v2445 = vrot.slane %v2444, 4
  %v2446 = vadd.f32 %v2444, %v2445
  %v2447 = vrot.slane %v2446, 2
  %v2448 = vadd.f32 %v2446, %v2447
  %v2449 = vrot.slane %v2448, 1
  %v2450 = vadd.f32 %v2448, %v2449
  %vm2453 = vcmask 1041409
  %v2454 = vsel %vm2453, %v2450, %v2443
  %v2456 = vsel %vm413, %v2454, 0.0
  %2457 = vadd.xlane.f32.xlu0 %v2456
  %v2458 = vpop.xlane.xlu0 %2457
  %v2459 = vld [vmem:[#allocation4] sm:$0x1]
  %v2461 = vlaneseq
  %v2462 = vshrl.u32 %v2461, 7
  %v2463 = vsub.s32 0, %v2462
  %v2464 = vrot.slane %v2459, %v2463
  %v2466 = vadd.f32 %v2458, %v2464
  %vm2467 = vcmask 1024
  %2468 = vst.msk [vmem:[%s8] sm:$0x3] %vm2467, %v2466
  // Predicated region
  $region34: #{d_net_forward.1} parent=0 // pred_check
    _
  $region35: #{d_net_forward.1} parent=0 // pred_check_branch
    %2470 = sbr.rel (0) target = $region37
  $region36: #{d_net_forward.1} parent=0 // pred_region
    _
  $region37: #{d_net_forward.1} parent=0 // pred_fallthru
    _
  // Predicated region
  $region38: #{d_net_forward.1} parent=0 // pred_check
    _
  $region39: #{d_net_forward.1} parent=0 // pred_check_branch
    %2472 = sbr.rel (0) target = $region41
  $region40: #{d_net_forward.1} parent=0 // pred_region
    _
  $region41: #{d_net_forward.1} parent=0 // pred_fallthru
    _

</llo_original>
